<compile_context>
chip_gen: v7x
topology: tpu7x:2x2x1
jax: 0.10.0
libtpu: 0.0.40
codegen_flags: <defaults>
</compile_context>

<pallas_src>
import functools

import jax
import jax.numpy as jnp
from jax import lax
from jax.experimental import pallas as pl
from jax.experimental.pallas import tpu as pltpu

NEG_SLOPE = 0.1   # which_act('leakyrelu') -> nn.LeakyReLU(negative_slope=0.1)


# --------------------------------------------------------------------------
# Helpers
# --------------------------------------------------------------------------

def _ru8(n):
    return ((n + 7) // 8) * 8


def _pick_tile(n, cap):
    """Largest power-of-two tile (>=128, <=cap) dividing n, else whole n.
    NOTE: the whole-n fallback is correct but lane-masked when n % 128 != 0."""
    t = cap
    while t >= 128:
        if n % t == 0:
            return t
        t //= 2
    return n


# --------------------------------------------------------------------------
# Pallas kernels
# --------------------------------------------------------------------------

def pwconv_chain(x_cm, w_pad, b_all, ss, layer_dims, offs, co_pad):
    """Fused main branch: 5 x (1x1 conv -> FiLM -> LeakyReLU), channel-major.

    x_cm:  (B, Cin, HW)  f32, channel-major activations (NCHW flattened)
    w_pad: (5, Cmax, Cmax) f32, zero-padded 1x1 conv weights
    b_all: (co_pad, 1)   f32, packed conv biases
    ss:    (B, 2*co_pad, 1) f32, packed [scales ; shifts]
    Per layer: t = W h + b ; y = t*scale + shift + t ; h = LeakyReLU(y)
    which is folded to  y = (W*(1+scale)) h + ((1+scale)*b + shift).
    """
    B, Cin, HW = x_cm.shape
    n_layers, cmax, _ = w_pad.shape
    Cout = layer_dims[-1][1]
    T = _pick_tile(HW, 4096)            # cap 4096: keeps grid steps for v7x TCs
    grid = (B, HW // T)

    def kernel(x_ref, w_ref, b_ref, ss_ref, o_ref):
        h = x_ref[0]                                    # (Cin, T) f32
        ssv = ss_ref[0]                                 # (2*co_pad, 1) f32
        ball = b_ref[...]                               # (co_pad, 1) f32
        for i, (ci, co) in enumerate(layer_dims):
            off = offs[i]
            w = w_ref[i][:co, :ci]                      # (co, ci) f32
            sc = ssv[off:off + co]                      # (co, 1)
            sh = ssv[co_pad + off:co_pad + off + co]    # (co, 1)
            bb = ball[off:off + co]                     # (co, 1)
            one_plus = sc + 1.0
            w_eff = (w * one_plus).astype(jnp.bfloat16)        # FiLM folded into W
            b_eff = one_plus * bb + sh                         # ... and into b
            y = jnp.dot(w_eff, h.astype(jnp.bfloat16),
                        preferred_element_type=jnp.float32) + b_eff
            h = jnp.maximum(y, NEG_SLOPE * y)                  # LeakyReLU(0.1)
        o_ref[0] = h.astype(o_ref.dtype)

    flops = 2 * B * HW * sum(ci * co for ci, co in layer_dims)
    bytes_accessed = 4 * (x_cm.size + B * Cout * HW + w_pad.size
                          + b_all.size + ss.size)

    return pl.pallas_call(
        kernel,
        out_shape=jax.ShapeDtypeStruct((B, Cout, HW), x_cm.dtype),
        grid=grid,
        in_specs=[
            pl.BlockSpec((1, Cin, T), lambda b, t: (b, 0, t)),
            pl.BlockSpec((n_layers, cmax, cmax), lambda b, t: (0, 0, 0)),
            pl.BlockSpec((co_pad, 1), lambda b, t: (0, 0)),
            pl.BlockSpec((1, 2 * co_pad, 1), lambda b, t: (b, 0, 0)),
        ],
        out_specs=pl.BlockSpec((1, Cout, T), lambda b, t: (b, 0, t)),
        compiler_params=pltpu.CompilerParams(
            dimension_semantics=("parallel", "parallel")),
        cost_estimate=pl.CostEstimate(flops=int(flops), transcendentals=0,
                                      bytes_accessed=int(bytes_accessed)),
    )(x_cm, w_pad, b_all, ss)


def conv_cm_act(p, w, b, out_dtype):
    """Channel-major im2col conv + LeakyReLU, spatially tiled.
    p: (B, K, N)  w: (Co, K)  b: (Co, 1)  ->  (B, Co, N)."""
    B, K, N = p.shape
    Co = w.shape[0]
    Tn = _pick_tile(N, 8192)
    grid = (B, N // Tn)

    def kernel(p_ref, w_ref, b_ref, o_ref):
        y = jnp.dot(w_ref[...].astype(jnp.bfloat16),
                    p_ref[0].astype(jnp.bfloat16),
                    preferred_element_type=jnp.float32) + b_ref[...]
        o_ref[0] = jnp.maximum(y, NEG_SLOPE * y).astype(o_ref.dtype)

    return pl.pallas_call(
        kernel,
        out_shape=jax.ShapeDtypeStruct((B, Co, N), out_dtype),
        grid=grid,
        in_specs=[pl.BlockSpec((1, K, Tn), lambda i, j: (i, 0, j)),
                  pl.BlockSpec((Co, K), lambda i, j: (0, 0)),
                  pl.BlockSpec((Co, 1), lambda i, j: (0, 0))],
        out_specs=pl.BlockSpec((1, Co, Tn), lambda i, j: (i, 0, j)),
        compiler_params=pltpu.CompilerParams(
            dimension_semantics=("parallel", "parallel")),
    )(p, w, b)


def conv_cm_act_mean_heads(p, w, b, head_w, head_b):
    """Trunk's last conv + LeakyReLU + spatial mean + ALL 10 scale/shift heads,
    fused.  p: (B, K, N)  w: (Co, K)  head_w: (2*co_pad, Co).
    Output: packed FiLM tensor (B, 2*co_pad, 1) f32."""
    B, K, N = p.shape
    Co = w.shape[0]
    Mo = head_w.shape[0]

    def kernel(p_ref, w_ref, b_ref, hw_ref, hb_ref, o_ref):
        y = jnp.dot(w_ref[...].astype(jnp.bfloat16),
                    p_ref[0].astype(jnp.bfloat16),
                    preferred_element_type=jnp.float32) + b_ref[...]
        y = jnp.maximum(y, NEG_SLOPE * y)                    # (Co, N)
        cond = jnp.mean(y, axis=1, keepdims=True)            # (Co, 1)
        ss = jnp.dot(hw_ref[...], cond,
                     preferred_element_type=jnp.float32) + hb_ref[...]
        o_ref[0] = ss.astype(o_ref.dtype)                    # (Mo, 1)

    return pl.pallas_call(
        kernel,
        out_shape=jax.ShapeDtypeStruct((B, Mo, 1), jnp.float32),
        grid=(B,),
        in_specs=[pl.BlockSpec((1, K, N), lambda i: (i, 0, 0)),
                  pl.BlockSpec((Co, K), lambda i: (0, 0)),
                  pl.BlockSpec((Co, 1), lambda i: (0, 0)),
                  pl.BlockSpec((Mo, Co), lambda i: (0, 0)),
                  pl.BlockSpec((Mo, 1), lambda i: (0, 0))],
        out_specs=pl.BlockSpec((1, Mo, 1), lambda i: (i, 0, 0)),
        compiler_params=pltpu.CompilerParams(dimension_semantics=("parallel",)),
    )(p, w, b, head_w, head_b)


# --------------------------------------------------------------------------
# Plain-JAX glue: patch extraction, weight packing, wiring
# --------------------------------------------------------------------------

def _im2col_s2_nchw(x):
    """3x3, stride 2, pad 1 patch extraction, channel-major.
    x: (B, C, H, W) -> (B, C*9, Ho*Wo)  (K index = c*9 + (dy*3+dx))."""
    # TODO(synk): fuse the 9-tap gather into the conv kernel via shifted
    # index_maps to avoid materializing the 9x-inflated patch tensor in HBM.
    B, C, H, W = x.shape
    Ho = (H - 1) // 2 + 1
    Wo = (W - 1) // 2 + 1
    xp = jnp.pad(x, ((0, 0), (0, 0), (1, 1), (1, 1)))
    taps = []
    for dy in range(3):
        for dx in range(3):
            taps.append(lax.slice(
                xp, (0, 0, dy, dx),
                (B, C, dy + 2 * (Ho - 1) + 1, dx + 2 * (Wo - 1) + 1),
                (1, 1, 2, 2)))                                # (B, C, Ho, Wo)
    p = jnp.stack(taps, axis=2)                               # (B, C, 9, Ho, Wo)
    return p.reshape(B, C * 9, Ho * Wo), Ho, Wo


def _expand_grouped(w, groups):
    """Grouped conv weight (Co, Ci//g, kh, kw) -> exact dense block-diagonal."""
    co, cg, kh, kw = w.shape
    ci = cg * groups
    og = co // groups
    dense = jnp.zeros((co, ci, kh, kw), w.dtype)
    for g in range(groups):
        dense = dense.at[g * og:(g + 1) * og, g * cg:(g + 1) * cg].set(
            w[g * og:(g + 1) * og])
    return dense


def pwconv_cond_forward(params, x, prior, meta):
    """PWConv_Cond.forward(x, prior).  x, prior: NCHW float32."""
    layer_dims = meta['layer_dims']
    offs = meta['offs']
    co_pad = meta['co_pad']
    B, Cin, H, W = x.shape
    tp = params['trunk']

    # ---- Cond trunk (channel-major, bf16 intermediates) ----
    h = prior.astype(jnp.bfloat16)
    p, Ho, Wo = _im2col_s2_nchw(h)
    h = conv_cm_act(p, tp['w1'], tp['b1'], jnp.bfloat16)
    h = h.reshape(B, -1, Ho, Wo)
    p, Ho, Wo = _im2col_s2_nchw(h)
    h = conv_cm_act(p, tp['w2'], tp['b2'], jnp.bfloat16)
    h = h.reshape(B, -1, Ho, Wo)
    p, _, _ = _im2col_s2_nchw(h)
    # last conv + mean + all scale/shift heads -> packed (B, 2*co_pad, 1)
    ss = conv_cm_act_mean_heads(p, tp['w3'], tp['b3'],
                                params['head_w'], params['head_b'])

    # ---- Main branch (fused 5-layer chain) ----
    x_cm = x.reshape(B, Cin, H * W)                  # channel-major, no transpose
    out = pwconv_chain(x_cm, params['conv_wpad'], params['conv_ball'], ss,
                       layer_dims, offs, co_pad)
    return out.reshape(B, out.shape[1], H, W)


# --------------------------------------------------------------------------
# Parameters (random init in PyTorch shapes, packed for the kernels)
# --------------------------------------------------------------------------

def _randn(key, shape, scale=0.1):
    return (scale * jax.random.normal(key, shape)).astype(jnp.float32)


def make_params(key, in_nc=3, out_nc=3, nf=32):
    ks = iter(jax.random.split(key, 64))
    layer_dims = [(in_nc, nf), (nf, 2 * nf), (2 * nf, 2 * nf),
                  (2 * nf, nf), (nf, out_nc)]
    pad_widths = [_ru8(co) for _, co in layer_dims]
    offs, acc = [], 0
    for pw in pad_widths:
        offs.append(acc)
        acc += pw
    co_pad = acc
    cmax = _ru8(max(max(ci, co) for ci, co in layer_dims))

    raw = {'cw': [], 'cb': [], 'sw': [], 'sb': [], 'hw': [], 'hb': []}

    # main-branch 1x1 convs packed into one padded stack + one packed bias
    conv_wpad = jnp.zeros((len(layer_dims), cmax, cmax), jnp.float32)
    conv_ball = jnp.zeros((co_pad, 1), jnp.float32)
    for i, (ci, co) in enumerate(layer_dims):
        w4 = _randn(next(ks), (co, ci, 1, 1))        # PyTorch Conv2d weight
        b = _randn(next(ks), (co,))
        raw['cw'].append(w4)
        raw['cb'].append(b)
        conv_wpad = conv_wpad.at[i, :co, :ci].set(w4[:, :, 0, 0])
        conv_ball = conv_ball.at[offs[i]:offs[i] + co, 0].set(b)

    # scale/shift Linear heads packed into one (2*co_pad, nf) weight
    head_w = jnp.zeros((2 * co_pad, nf), jnp.float32)
    head_b = jnp.zeros((2 * co_pad, 1), jnp.float32)
    for i, (_, co) in enumerate(layer_dims):
        wsc = _randn(next(ks), (co, nf))
        bsc = _randn(next(ks), (co,))
        wsh = _randn(next(ks), (co, nf))
        bsh = _randn(next(ks), (co,))
        raw['sw'].append(wsc); raw['sb'].append(bsc)
        raw['hw'].append(wsh); raw['hb'].append(bsh)
        head_w = head_w.at[offs[i]:offs[i] + co].set(wsc)
        head_b = head_b.at[offs[i]:offs[i] + co, 0].set(bsc)
        head_w = head_w.at[co_pad + offs[i]:co_pad + offs[i] + co].set(wsh)
        head_b = head_b.at[co_pad + offs[i]:co_pad + offs[i] + co, 0].set(bsh)

    # Cond_Trunk 3x3 stride-2 convs (conv2 grouped -> dense block-diagonal),
    # weights reshaped to channel-major im2col form (Co, Ci*9).
    tw1 = _randn(next(ks), (nf // 2, in_nc, 3, 3)); tb1 = _randn(next(ks), (nf // 2,))
    tw2g = _randn(next(ks), (nf // 2, (nf // 2) // 4, 3, 3)); tb2 = _randn(next(ks), (nf // 2,))
    tw3 = _randn(next(ks), (nf, nf // 2, 3, 3)); tb3 = _randn(next(ks), (nf,))
    raw.update(tw1=tw1, tb1=tb1, tw2=tw2g, tb2=tb2, tw3=tw3, tb3=tb3)
    tw2 = _expand_grouped(tw2g, groups=4)
    trunk = {'w1': tw1.reshape(nf // 2, -1), 'b1': tb1[:, None],
             'w2': tw2.reshape(nf // 2, -1), 'b2': tb2[:, None],
             'w3': tw3.reshape(nf, -1),      'b3': tb3[:, None]}

    params = {'conv_wpad': conv_wpad, 'conv_ball': conv_ball,
              'head_w': head_w, 'head_b': head_b, 'trunk': trunk}
    meta = {'nf': nf, 'in_nc': in_nc, 'out_nc': out_nc,
            'layer_dims': layer_dims, 'offs': offs, 'co_pad': co_pad}
    return params, meta, raw


# --------------------------------------------------------------------------
# Pure-JAX reference (mirrors the PyTorch module, f32, lax.conv)
# --------------------------------------------------------------------------

def ref_forward(raw, x, prior):
    def lrelu(v):
        return jnp.where(v >= 0, v, NEG_SLOPE * v)

    def conv(h, w, b, stride, pad, groups=1):
        y = lax.conv_general_dilated(
            h, w, (stride, stride), ((pad, pad), (pad, pad)),
            dimension_numbers=('NCHW', 'OIHW', 'NCHW'),
            feature_group_count=groups)
        return y + b[None, :, None, None]

    h = lrelu(conv(prior, raw['tw1'], raw['tb1'], 2, 1))
    h = lrelu(conv(h, raw['tw2'], raw['tb2'], 2, 1, groups=4))
    h = lrelu(conv(h, raw['tw3'], raw['tb3'], 2, 1))
    cond = jnp.mean(h, axis=(2, 3))                          # (B, nf)

    out = x
    for i in range(len(raw['cw'])):
        sc = cond @ raw['sw'][i].T + raw['sb'][i]
        sh = cond @ raw['hw'][i].T + raw['hb'][i]
        t = conv(out, raw['cw'][i], raw['cb'][i], 1, 0)
        y = t * sc[:, :, None, None] + sh[:, :, None, None] + t
        out = lrelu(y)
    return out


# --------------------------------------------------------------------------

if __name__ == "__main__":
    key = jax.random.PRNGKey(0)
    pk, xk, rk = jax.random.split(key, 3)
    params, meta, raw = make_params(pk, in_nc=3, out_nc=3, nf=32)

    x = jax.random.normal(xk, (2, 3, 16, 16), jnp.float32)       # main input (NCHW)
    prior = jax.random.normal(rk, (2, 3, 16, 16), jnp.float32)   # conditioning prior

    fwd = jax.jit(functools.partial(pwconv_cond_forward, meta=meta))
    out = jax.block_until_ready(fwd(params, x, prior))

    assert out.shape == (2, 3, 16, 16)
    assert out.dtype == jnp.float32
    assert bool(jnp.all(jnp.isfinite(out)))

    # Parity vs. pure-JAX f32 reference (bf16 matmuls -> loose tolerance).
    ref = ref_forward(raw, x, prior)
    err = float(jnp.max(jnp.abs(out - ref)))
    assert err < 5e-2, f"kernel vs reference mismatch: max|diff|={err}"

    print("KERNEL_OK")
</pallas_src>

<mosaic_0001>
module attributes {stable_mosaic.version = 11 : i64} {
  func.func @kernel(%arg0: i32, %arg1: i32, %arg2: memref<1x27x64xbf16, #tpu.memory_space<vmem>>, %arg3: memref<16x27xf32, #tpu.memory_space<vmem>>, %arg4: memref<16x1xf32, #tpu.memory_space<vmem>>, %arg5: memref<1x16x64xbf16, #tpu.memory_space<vmem>>) attributes {dimension_semantics = [#tpu.dimension_semantics<parallel>, #tpu.dimension_semantics<parallel>], iteration_bounds = array<i64: 2, 1>, scalar_prefetch = 0 : i64, scratch_operands = 0 : i64, tpu.core_type = #tpu.core_type<tc>, window_params = [{transform_indices = @transform_0, window_bounds = array<i64: 1, 27, 64>}, {pipeline_mode = #tpu.pipeline_mode<synchronous>, transform_indices = @transform_1, window_bounds = array<i64: 16, 27>}, {pipeline_mode = #tpu.pipeline_mode<synchronous>, transform_indices = @transform_2, window_bounds = array<i64: 16, 1>}, {transform_indices = @transform_3, window_bounds = array<i64: 1, 16, 64>}]} {
    %c0 = arith.constant 0 : index
    %c0_0 = arith.constant 0 : index
    %0 = vector.load %arg3[%c0, %c0_0] : memref<16x27xf32, #tpu.memory_space<vmem>>, vector<16x27xf32>
    %1 = arith.truncf %0 : vector<16x27xf32> to vector<16x27xbf16>
    %c0_1 = arith.constant 0 : index
    %c0_2 = arith.constant 0 : index
    %c0_3 = arith.constant 0 : index
    %2 = vector.load %arg2[%c0_1, %c0_2, %c0_3] : memref<1x27x64xbf16, #tpu.memory_space<vmem>>, vector<1x27x64xbf16>
    %3 = vector.shape_cast %2 : vector<1x27x64xbf16> to vector<27x64xbf16>
    %cst = arith.constant dense<0.000000e+00> : vector<16x64xf32>
    %4 = tpu.matmul %1, %3, %cst {dimension_numbers = #tpu.dot_dimension_numbers<[1], [0], [0], [1], [0, 0, 1, 1], [], []>} : vector<16x27xbf16>, vector<27x64xbf16>, vector<16x64xf32> -> vector<16x64xf32>
    %c0_4 = arith.constant 0 : index
    %c0_5 = arith.constant 0 : index
    %5 = vector.load %arg4[%c0_4, %c0_5] : memref<16x1xf32, #tpu.memory_space<vmem>>, vector<16x1xf32>
    %6 = vector.broadcast %5 : vector<16x1xf32> to vector<16x64xf32>
    %7 = arith.addf %4, %6 : vector<16x64xf32>
    %cst_6 = arith.constant 1.000000e-01 : f32
    %8 = vector.broadcast %cst_6 : f32 to vector<16x64xf32>
    %9 = arith.mulf %8, %7 : vector<16x64xf32>
    %10 = arith.maximumf %7, %9 : vector<16x64xf32>
    %11 = arith.truncf %10 : vector<16x64xf32> to vector<16x64xbf16>
    %c0_7 = arith.constant 0 : index
    %c0_8 = arith.constant 0 : index
    %c0_9 = arith.constant 0 : index
    %12 = vector.load %arg5[%c0_7, %c0_8, %c0_9] : memref<1x16x64xbf16, #tpu.memory_space<vmem>>, vector<1x16x64xbf16>
    %13 = vector.shape_cast %12 : vector<1x16x64xbf16> to vector<16x64xbf16>
    %14 = vector.shape_cast %11 : vector<16x64xbf16> to vector<1x16x64xbf16>
    tpu.vector_store %arg5[%c0_7, %c0_8, %c0_9], %14 {strides = array<i32>} : memref<1x16x64xbf16, #tpu.memory_space<vmem>>, vector<1x16x64xbf16>,
    return
  }
  func.func @transform_0(%arg0: i32, %arg1: i32) -> (i32, i32, i32) {
    %c0_i32 = arith.constant 0 : i32
    %c0_i32_0 = arith.constant 0 : i32
    return %arg0, %c0_i32, %arg1 : i32, i32, i32
  }
  func.func @transform_1(%arg0: i32, %arg1: i32) -> (i32, i32) {
    %c0_i32 = arith.constant 0 : i32
    %c0_i32_0 = arith.constant 0 : i32
    %c0_i32_1 = arith.constant 0 : i32
    return %c0_i32, %c0_i32_0 : i32, i32
  }
  func.func @transform_2(%arg0: i32, %arg1: i32) -> (i32, i32) {
    %c0_i32 = arith.constant 0 : i32
    %c0_i32_0 = arith.constant 0 : i32
    %c0_i32_1 = arith.constant 0 : i32
    return %c0_i32, %c0_i32_0 : i32, i32
  }
  func.func @transform_3(%arg0: i32, %arg1: i32) -> (i32, i32, i32) {
    %c0_i32 = arith.constant 0 : i32
    %c0_i32_0 = arith.constant 0 : i32
    return %arg0, %c0_i32, %arg1 : i32, i32, i32
  }
}

module attributes {stable_mosaic.version = 11 : i64} {
  func.func @kernel(%arg0: i32, %arg1: i32, %arg2: memref<1x144x16xbf16, #tpu.memory_space<vmem>>, %arg3: memref<16x144xf32, #tpu.memory_space<vmem>>, %arg4: memref<16x1xf32, #tpu.memory_space<vmem>>, %arg5: memref<1x16x16xbf16, #tpu.memory_space<vmem>>) attributes {dimension_semantics = [#tpu.dimension_semantics<parallel>, #tpu.dimension_semantics<parallel>], iteration_bounds = array<i64: 2, 1>, scalar_prefetch = 0 : i64, scratch_operands = 0 : i64, tpu.core_type = #tpu.core_type<tc>, window_params = [{transform_indices = @transform_0, window_bounds = array<i64: 1, 144, 16>}, {pipeline_mode = #tpu.pipeline_mode<synchronous>, transform_indices = @transform_1, window_bounds = array<i64: 16, 144>}, {pipeline_mode = #tpu.pipeline_mode<synchronous>, transform_indices = @transform_2, window_bounds = array<i64: 16, 1>}, {transform_indices = @transform_3, window_bounds = array<i64: 1, 16, 16>}]} {
    %c0 = arith.constant 0 : index
    %c0_0 = arith.constant 0 : index
    %0 = vector.load %arg3[%c0, %c0_0] : memref<16x144xf32, #tpu.memory_space<vmem>>, vector<16x144xf32>
    %1 = arith.truncf %0 : vector<16x144xf32> to vector<16x144xbf16>
    %c0_1 = arith.constant 0 : index
    %c0_2 = arith.constant 0 : index
    %c0_3 = arith.constant 0 : index
    %2 = vector.load %arg2[%c0_1, %c0_2, %c0_3] : memref<1x144x16xbf16, #tpu.memory_space<vmem>>, vector<1x144x16xbf16>
    %3 = vector.shape_cast %2 : vector<1x144x16xbf16> to vector<144x16xbf16>
    %cst = arith.constant dense<0.000000e+00> : vector<16x16xf32>
    %4 = tpu.matmul %1, %3, %cst {dimension_numbers = #tpu.dot_dimension_numbers<[1], [0], [0], [1], [0, 0, 1, 1], [], []>} : vector<16x144xbf16>, vector<144x16xbf16>, vector<16x16xf32> -> vector<16x16xf32>
    %c0_4 = arith.constant 0 : index
    %c0_5 = arith.constant 0 : index
    %5 = vector.load %arg4[%c0_4, %c0_5] : memref<16x1xf32, #tpu.memory_space<vmem>>, vector<16x1xf32>
    %6 = vector.broadcast %5 : vector<16x1xf32> to vector<16x16xf32>
    %7 = arith.addf %4, %6 : vector<16x16xf32>
    %cst_6 = arith.constant 1.000000e-01 : f32
    %8 = vector.broadcast %cst_6 : f32 to vector<16x16xf32>
    %9 = arith.mulf %8, %7 : vector<16x16xf32>
    %10 = arith.maximumf %7, %9 : vector<16x16xf32>
    %11 = arith.truncf %10 : vector<16x16xf32> to vector<16x16xbf16>
    %c0_7 = arith.constant 0 : index
    %c0_8 = arith.constant 0 : index
    %c0_9 = arith.constant 0 : index
    %12 = vector.load %arg5[%c0_7, %c0_8, %c0_9] : memref<1x16x16xbf16, #tpu.memory_space<vmem>>, vector<1x16x16xbf16>
    %13 = vector.shape_cast %12 : vector<1x16x16xbf16> to vector<16x16xbf16>
    %14 = vector.shape_cast %11 : vector<16x16xbf16> to vector<1x16x16xbf16>
    tpu.vector_store %arg5[%c0_7, %c0_8, %c0_9], %14 {strides = array<i32>} : memref<1x16x16xbf16, #tpu.memory_space<vmem>>, vector<1x16x16xbf16>,
    return
  }
  func.func @transform_0(%arg0: i32, %arg1: i32) -> (i32, i32, i32) {
    %c0_i32 = arith.constant 0 : i32
    %c0_i32_0 = arith.constant 0 : i32
    return %arg0, %c0_i32, %arg1 : i32, i32, i32
  }
  func.func @transform_1(%arg0: i32, %arg1: i32) -> (i32, i32) {
    %c0_i32 = arith.constant 0 : i32
    %c0_i32_0 = arith.constant 0 : i32
    %c0_i32_1 = arith.constant 0 : i32
    return %c0_i32, %c0_i32_0 : i32, i32
  }
  func.func @transform_2(%arg0: i32, %arg1: i32) -> (i32, i32) {
    %c0_i32 = arith.constant 0 : i32
    %c0_i32_0 = arith.constant 0 : i32
    %c0_i32_1 = arith.constant 0 : i32
    return %c0_i32, %c0_i32_0 : i32, i32
  }
  func.func @transform_3(%arg0: i32, %arg1: i32) -> (i32, i32, i32) {
    %c0_i32 = arith.constant 0 : i32
    %c0_i32_0 = arith.constant 0 : i32
    return %arg0, %c0_i32, %arg1 : i32, i32, i32
  }
}

module attributes {stable_mosaic.version = 11 : i64} {
  func.func @kernel(%arg0: i32, %arg1: memref<1x144x4xbf16, #tpu.memory_space<vmem>>, %arg2: memref<32x144xf32, #tpu.memory_space<vmem>>, %arg3: memref<32x1xf32, #tpu.memory_space<vmem>>, %arg4: memref<400x32xf32, #tpu.memory_space<vmem>>, %arg5: memref<400x1xf32, #tpu.memory_space<vmem>>, %arg6: memref<1x400x1xf32, #tpu.memory_space<vmem>>) attributes {dimension_semantics = [#tpu.dimension_semantics<parallel>], iteration_bounds = array<i64: 2>, scalar_prefetch = 0 : i64, scratch_operands = 0 : i64, tpu.core_type = #tpu.core_type<tc>, window_params = [{transform_indices = @transform_0, window_bounds = array<i64: 1, 144, 4>}, {pipeline_mode = #tpu.pipeline_mode<synchronous>, transform_indices = @transform_1, window_bounds = array<i64: 32, 144>}, {pipeline_mode = #tpu.pipeline_mode<synchronous>, transform_indices = @transform_2, window_bounds = array<i64: 32, 1>}, {pipeline_mode = #tpu.pipeline_mode<synchronous>, transform_indices = @transform_3, window_bounds = array<i64: 400, 32>}, {pipeline_mode = #tpu.pipeline_mode<synchronous>, transform_indices = @transform_4, window_bounds = array<i64: 400, 1>}, {transform_indices = @transform_5, window_bounds = array<i64: 1, 400, 1>}]} {
    %c0 = arith.constant 0 : index
    %c0_0 = arith.constant 0 : index
    %0 = vector.load %arg2[%c0, %c0_0] : memref<32x144xf32, #tpu.memory_space<vmem>>, vector<32x144xf32>
    %1 = arith.truncf %0 : vector<32x144xf32> to vector<32x144xbf16>
    %c0_1 = arith.constant 0 : index
    %c0_2 = arith.constant 0 : index
    %c0_3 = arith.constant 0 : index
    %2 = vector.load %arg1[%c0_1, %c0_2, %c0_3] : memref<1x144x4xbf16, #tpu.memory_space<vmem>>, vector<1x144x4xbf16>
    %3 = vector.shape_cast %2 : vector<1x144x4xbf16> to vector<144x4xbf16>
    %cst = arith.constant dense<0.000000e+00> : vector<32x4xf32>
    %4 = tpu.matmul %1, %3, %cst {dimension_numbers = #tpu.dot_dimension_numbers<[1], [0], [0], [1], [0, 0, 1, 1], [], []>} : vector<32x144xbf16>, vector<144x4xbf16>, vector<32x4xf32> -> vector<32x4xf32>
    %c0_4 = arith.constant 0 : index
    %c0_5 = arith.constant 0 : index
    %5 = vector.load %arg3[%c0_4, %c0_5] : memref<32x1xf32, #tpu.memory_space<vmem>>, vector<32x1xf32>
    %6 = vector.broadcast %5 : vector<32x1xf32> to vector<32x4xf32>
    %7 = arith.addf %4, %6 : vector<32x4xf32>
    %cst_6 = arith.constant 1.000000e-01 : f32
    %8 = vector.broadcast %cst_6 : f32 to vector<32x4xf32>
    %9 = arith.mulf %8, %7 : vector<32x4xf32>
    %10 = arith.maximumf %7, %9 : vector<32x4xf32>
    %cst_7 = arith.constant dense<0.000000e+00> : vector<32xf32>
    %11 = vector.multi_reduction <add>, %10, %cst_7 [1] : vector<32x4xf32> to vector<32xf32>
    %12 = vector.shape_cast %11 : vector<32xf32> to vector<32x1xf32>
    %cst_8 = arith.constant 4.000000e+00 : f32
    %13 = vector.broadcast %cst_8 : f32 to vector<32x1xf32>
    %14 = arith.divf %12, %13 : vector<32x1xf32>
    %c0_9 = arith.constant 0 : index
    %c0_10 = arith.constant 0 : index
    %15 = vector.load %arg4[%c0_9, %c0_10] : memref<400x32xf32, #tpu.memory_space<vmem>>, vector<400x32xf32>
    %cst_11 = arith.constant dense<0.000000e+00> : vector<400x1xf32>
    %16 = tpu.matmul %15, %14, %cst_11 {dimension_numbers = #tpu.dot_dimension_numbers<[1], [0], [0], [1], [0, 0, 1, 1], [], []>} : vector<400x32xf32>, vector<32x1xf32>, vector<400x1xf32> -> vector<400x1xf32>
    %c0_12 = arith.constant 0 : index
    %c0_13 = arith.constant 0 : index
    %17 = vector.load %arg5[%c0_12, %c0_13] : memref<400x1xf32, #tpu.memory_space<vmem>>, vector<400x1xf32>
    %18 = arith.addf %16, %17 : vector<400x1xf32>
    %c0_14 = arith.constant 0 : index
    %c0_15 = arith.constant 0 : index
    %c0_16 = arith.constant 0 : index
    %19 = vector.load %arg6[%c0_14, %c0_15, %c0_16] : memref<1x400x1xf32, #tpu.memory_space<vmem>>, vector<1x400x1xf32>
    %20 = vector.shape_cast %19 : vector<1x400x1xf32> to vector<400x1xf32>
    %21 = vector.shape_cast %18 : vector<400x1xf32> to vector<1x400x1xf32>
    tpu.vector_store %arg6[%c0_14, %c0_15, %c0_16], %21 {strides = array<i32>} : memref<1x400x1xf32, #tpu.memory_space<vmem>>, vector<1x400x1xf32>,
    return
  }
  func.func @transform_0(%arg0: i32) -> (i32, i32, i32) {
    %c0_i32 = arith.constant 0 : i32
    %c0_i32_0 = arith.constant 0 : i32
    %c0_i32_1 = arith.constant 0 : i32
    return %arg0, %c0_i32, %c0_i32_0 : i32, i32, i32
  }
  func.func @transform_1(%arg0: i32) -> (i32, i32) {
    %c0_i32 = arith.constant 0 : i32
    %c0_i32_0 = arith.constant 0 : i32
    %c0_i32_1 = arith.constant 0 : i32
    return %c0_i32, %c0_i32_0 : i32, i32
  }
  func.func @transform_2(%arg0: i32) -> (i32, i32) {
    %c0_i32 = arith.constant 0 : i32
    %c0_i32_0 = arith.constant 0 : i32
    %c0_i32_1 = arith.constant 0 : i32
    return %c0_i32, %c0_i32_0 : i32, i32
  }
  func.func @transform_3(%arg0: i32) -> (i32, i32) {
    %c0_i32 = arith.constant 0 : i32
    %c0_i32_0 = arith.constant 0 : i32
    %c0_i32_1 = arith.constant 0 : i32
    return %c0_i32, %c0_i32_0 : i32, i32
  }
  func.func @transform_4(%arg0: i32) -> (i32, i32) {
    %c0_i32 = arith.constant 0 : i32
    %c0_i32_0 = arith.constant 0 : i32
    %c0_i32_1 = arith.constant 0 : i32
    return %c0_i32, %c0_i32_0 : i32, i32
  }
  func.func @transform_5(%arg0: i32) -> (i32, i32, i32) {
    %c0_i32 = arith.constant 0 : i32
    %c0_i32_0 = arith.constant 0 : i32
    %c0_i32_1 = arith.constant 0 : i32
    return %arg0, %c0_i32, %c0_i32_0 : i32, i32, i32
  }
}

module attributes {stable_mosaic.version = 11 : i64} {
  func.func @kernel(%arg0: i32, %arg1: i32, %arg2: memref<1x3x256xf32, #tpu.memory_space<vmem>>, %arg3: memref<5x64x64xf32, #tpu.memory_space<vmem>>, %arg4: memref<200x1xf32, #tpu.memory_space<vmem>>, %arg5: memref<1x400x1xf32, #tpu.memory_space<vmem>>, %arg6: memref<1x3x256xf32, #tpu.memory_space<vmem>>) attributes {dimension_semantics = [#tpu.dimension_semantics<parallel>, #tpu.dimension_semantics<parallel>], iteration_bounds = array<i64: 2, 1>, scalar_prefetch = 0 : i64, scratch_operands = 0 : i64, tpu.core_type = #tpu.core_type<tc>, window_params = [{transform_indices = @transform_0, window_bounds = array<i64: 1, 3, 256>}, {pipeline_mode = #tpu.pipeline_mode<synchronous>, transform_indices = @transform_1, window_bounds = array<i64: 5, 64, 64>}, {pipeline_mode = #tpu.pipeline_mode<synchronous>, transform_indices = @transform_2, window_bounds = array<i64: 200, 1>}, {transform_indices = @transform_3, window_bounds = array<i64: 1, 400, 1>}, {transform_indices = @transform_4, window_bounds = array<i64: 1, 3, 256>}]} {
    %c0 = arith.constant 0 : index
    %c0_0 = arith.constant 0 : index
    %c0_1 = arith.constant 0 : index
    %0 = vector.load %arg2[%c0, %c0_0, %c0_1] : memref<1x3x256xf32, #tpu.memory_space<vmem>>, vector<1x3x256xf32>
    %1 = vector.shape_cast %0 : vector<1x3x256xf32> to vector<3x256xf32>
    %c0_2 = arith.constant 0 : index
    %c0_3 = arith.constant 0 : index
    %c0_4 = arith.constant 0 : index
    %2 = vector.load %arg5[%c0_2, %c0_3, %c0_4] : memref<1x400x1xf32, #tpu.memory_space<vmem>>, vector<1x400x1xf32>
    %3 = vector.shape_cast %2 : vector<1x400x1xf32> to vector<400x1xf32>
    %c0_5 = arith.constant 0 : index
    %c0_6 = arith.constant 0 : index
    %4 = vector.load %arg4[%c0_5, %c0_6] : memref<200x1xf32, #tpu.memory_space<vmem>>, vector<200x1xf32>
    %c0_7 = arith.constant 0 : index
    %c0_8 = arith.constant 0 : index
    %c0_9 = arith.constant 0 : index
    %5 = vector.load %arg3[%c0_7, %c0_8, %c0_9] : memref<5x64x64xf32, #tpu.memory_space<vmem>>, vector<1x64x64xf32>
    %6 = vector.shape_cast %5 : vector<1x64x64xf32> to vector<64x64xf32>
    %7 = vector.extract_strided_slice %6 {offsets = [0, 0], sizes = [32, 3], strides = [1, 1]} : vector<64x64xf32> to vector<32x3xf32>
    %8 = vector.extract_strided_slice %3 {offsets = [0, 0], sizes = [32, 1], strides = [1, 1]} : vector<400x1xf32> to vector<32x1xf32>
    %9 = vector.extract_strided_slice %3 {offsets = [200, 0], sizes = [32, 1], strides = [1, 1]} : vector<400x1xf32> to vector<32x1xf32>
    %10 = vector.extract_strided_slice %4 {offsets = [0, 0], sizes = [32, 1], strides = [1, 1]} : vector<200x1xf32> to vector<32x1xf32>
    %cst = arith.constant 1.000000e+00 : f32
    %11 = vector.broadcast %cst : f32 to vector<32x1xf32>
    %12 = arith.addf %8, %11 : vector<32x1xf32>
    %13 = vector.broadcast %12 : vector<32x1xf32> to vector<32x3xf32>
    %14 = arith.mulf %7, %13 : vector<32x3xf32>
    %15 = arith.truncf %14 : vector<32x3xf32> to vector<32x3xbf16>
    %16 = arith.mulf %12, %10 : vector<32x1xf32>
    %17 = arith.addf %16, %9 : vector<32x1xf32>
    %18 = arith.truncf %1 : vector<3x256xf32> to vector<3x256xbf16>
    %cst_10 = arith.constant dense<0.000000e+00> : vector<32x256xf32>
    %19 = tpu.matmul %15, %18, %cst_10 {dimension_numbers = #tpu.dot_dimension_numbers<[1], [0], [0], [1], [0, 0, 1, 1], [], []>} : vector<32x3xbf16>, vector<3x256xbf16>, vector<32x256xf32> -> vector<32x256xf32>
    %20 = vector.broadcast %17 : vector<32x1xf32> to vector<32x256xf32>
    %21 = arith.addf %19, %20 : vector<32x256xf32>
    %cst_11 = arith.constant 1.000000e-01 : f32
    %22 = vector.broadcast %cst_11 : f32 to vector<32x256xf32>
    %23 = arith.mulf %22, %21 : vector<32x256xf32>
    %24 = arith.maximumf %21, %23 : vector<32x256xf32>
    %c1 = arith.constant 1 : index
    %c0_12 = arith.constant 0 : index
    %c0_13 = arith.constant 0 : index
    %25 = vector.load %arg3[%c1, %c0_12, %c0_13] : memref<5x64x64xf32, #tpu.memory_space<vmem>>, vector<1x64x64xf32>
    %26 = vector.shape_cast %25 : vector<1x64x64xf32> to vector<64x64xf32>
    %27 = vector.extract_strided_slice %26 {offsets = [0, 0], sizes = [64, 32], strides = [1, 1]} : vector<64x64xf32> to vector<64x32xf32>
    %28 = vector.extract_strided_slice %3 {offsets = [32, 0], sizes = [64, 1], strides = [1, 1]} : vector<400x1xf32> to vector<64x1xf32>
    %29 = vector.extract_strided_slice %3 {offsets = [232, 0], sizes = [64, 1], strides = [1, 1]} : vector<400x1xf32> to vector<64x1xf32>
    %30 = vector.extract_strided_slice %4 {offsets = [32, 0], sizes = [64, 1], strides = [1, 1]} : vector<200x1xf32> to vector<64x1xf32>
    %cst_14 = arith.constant 1.000000e+00 : f32
    %31 = vector.broadcast %cst_14 : f32 to vector<64x1xf32>
    %32 = arith.addf %28, %31 : vector<64x1xf32>
    %33 = vector.broadcast %32 : vector<64x1xf32> to vector<64x32xf32>
    %34 = arith.mulf %27, %33 : vector<64x32xf32>
    %35 = arith.truncf %34 : vector<64x32xf32> to vector<64x32xbf16>
    %36 = arith.mulf %32, %30 : vector<64x1xf32>
    %37 = arith.addf %36, %29 : vector<64x1xf32>
    %38 = arith.truncf %24 : vector<32x256xf32> to vector<32x256xbf16>
    %cst_15 = arith.constant dense<0.000000e+00> : vector<64x256xf32>
    %39 = tpu.matmul %35, %38, %cst_15 {dimension_numbers = #tpu.dot_dimension_numbers<[1], [0], [0], [1], [0, 0, 1, 1], [], []>} : vector<64x32xbf16>, vector<32x256xbf16>, vector<64x256xf32> -> vector<64x256xf32>
    %40 = vector.broadcast %37 : vector<64x1xf32> to vector<64x256xf32>
    %41 = arith.addf %39, %40 : vector<64x256xf32>
    %cst_16 = arith.constant 1.000000e-01 : f32
    %42 = vector.broadcast %cst_16 : f32 to vector<64x256xf32>
    %43 = arith.mulf %42, %41 : vector<64x256xf32>
    %44 = arith.maximumf %41, %43 : vector<64x256xf32>
    %c2 = arith.constant 2 : index
    %c0_17 = arith.constant 0 : index
    %c0_18 = arith.constant 0 : index
    %45 = vector.load %arg3[%c2, %c0_17, %c0_18] : memref<5x64x64xf32, #tpu.memory_space<vmem>>, vector<1x64x64xf32>
    %46 = vector.shape_cast %45 : vector<1x64x64xf32> to vector<64x64xf32>
    %47 = vector.extract_strided_slice %3 {offsets = [96, 0], sizes = [64, 1], strides = [1, 1]} : vector<400x1xf32> to vector<64x1xf32>
    %48 = vector.extract_strided_slice %3 {offsets = [296, 0], sizes = [64, 1], strides = [1, 1]} : vector<400x1xf32> to vector<64x1xf32>
    %49 = vector.extract_strided_slice %4 {offsets = [96, 0], sizes = [64, 1], strides = [1, 1]} : vector<200x1xf32> to vector<64x1xf32>
    %cst_19 = arith.constant 1.000000e+00 : f32
    %50 = vector.broadcast %cst_19 : f32 to vector<64x1xf32>
    %51 = arith.addf %47, %50 : vector<64x1xf32>
    %52 = vector.broadcast %51 : vector<64x1xf32> to vector<64x64xf32>
    %53 = arith.mulf %46, %52 : vector<64x64xf32>
    %54 = arith.truncf %53 : vector<64x64xf32> to vector<64x64xbf16>
    %55 = arith.mulf %51, %49 : vector<64x1xf32>
    %56 = arith.addf %55, %48 : vector<64x1xf32>
    %57 = arith.truncf %44 : vector<64x256xf32> to vector<64x256xbf16>
    %cst_20 = arith.constant dense<0.000000e+00> : vector<64x256xf32>
    %58 = tpu.matmul %54, %57, %cst_20 {dimension_numbers = #tpu.dot_dimension_numbers<[1], [0], [0], [1], [0, 0, 1, 1], [], []>} : vector<64x64xbf16>, vector<64x256xbf16>, vector<64x256xf32> -> vector<64x256xf32>
    %59 = vector.broadcast %56 : vector<64x1xf32> to vector<64x256xf32>
    %60 = arith.addf %58, %59 : vector<64x256xf32>
    %cst_21 = arith.constant 1.000000e-01 : f32
    %61 = vector.broadcast %cst_21 : f32 to vector<64x256xf32>
    %62 = arith.mulf %61, %60 : vector<64x256xf32>
    %63 = arith.maximumf %60, %62 : vector<64x256xf32>
    %c3 = arith.constant 3 : index
    %c0_22 = arith.constant 0 : index
    %c0_23 = arith.constant 0 : index
    %64 = vector.load %arg3[%c3, %c0_22, %c0_23] : memref<5x64x64xf32, #tpu.memory_space<vmem>>, vector<1x64x64xf32>
    %65 = vector.shape_cast %64 : vector<1x64x64xf32> to vector<64x64xf32>
    %66 = vector.extract_strided_slice %65 {offsets = [0, 0], sizes = [32, 64], strides = [1, 1]} : vector<64x64xf32> to vector<32x64xf32>
    %67 = vector.extract_strided_slice %3 {offsets = [160, 0], sizes = [32, 1], strides = [1, 1]} : vector<400x1xf32> to vector<32x1xf32>
    %68 = vector.extract_strided_slice %3 {offsets = [360, 0], sizes = [32, 1], strides = [1, 1]} : vector<400x1xf32> to vector<32x1xf32>
    %69 = vector.extract_strided_slice %4 {offsets = [160, 0], sizes = [32, 1], strides = [1, 1]} : vector<200x1xf32> to vector<32x1xf32>
    %cst_24 = arith.constant 1.000000e+00 : f32
    %70 = vector.broadcast %cst_24 : f32 to vector<32x1xf32>
    %71 = arith.addf %67, %70 : vector<32x1xf32>
    %72 = vector.broadcast %71 : vector<32x1xf32> to vector<32x64xf32>
    %73 = arith.mulf %66, %72 : vector<32x64xf32>
    %74 = arith.truncf %73 : vector<32x64xf32> to vector<32x64xbf16>
    %75 = arith.mulf %71, %69 : vector<32x1xf32>
    %76 = arith.addf %75, %68 : vector<32x1xf32>
    %77 = arith.truncf %63 : vector<64x256xf32> to vector<64x256xbf16>
    %cst_25 = arith.constant dense<0.000000e+00> : vector<32x256xf32>
    %78 = tpu.matmul %74, %77, %cst_25 {dimension_numbers = #tpu.dot_dimension_numbers<[1], [0], [0], [1], [0, 0, 1, 1], [], []>} : vector<32x64xbf16>, vector<64x256xbf16>, vector<32x256xf32> -> vector<32x256xf32>
    %79 = vector.broadcast %76 : vector<32x1xf32> to vector<32x256xf32>
    %80 = arith.addf %78, %79 : vector<32x256xf32>
    %cst_26 = arith.constant 1.000000e-01 : f32
    %81 = vector.broadcast %cst_26 : f32 to vector<32x256xf32>
    %82 = arith.mulf %81, %80 : vector<32x256xf32>
    %83 = arith.maximumf %80, %82 : vector<32x256xf32>
    %c4 = arith.constant 4 : index
    %c0_27 = arith.constant 0 : index
    %c0_28 = arith.constant 0 : index
    %84 = vector.load %arg3[%c4, %c0_27, %c0_28] : memref<5x64x64xf32, #tpu.memory_space<vmem>>, vector<1x64x64xf32>
    %85 = vector.shape_cast %84 : vector<1x64x64xf32> to vector<64x64xf32>
    %86 = vector.extract_strided_slice %85 {offsets = [0, 0], sizes = [3, 32], strides = [1, 1]} : vector<64x64xf32> to vector<3x32xf32>
    %87 = vector.extract_strided_slice %3 {offsets = [192, 0], sizes = [3, 1], strides = [1, 1]} : vector<400x1xf32> to vector<3x1xf32>
    %88 = vector.extract_strided_slice %3 {offsets = [392, 0], sizes = [3, 1], strides = [1, 1]} : vector<400x1xf32> to vector<3x1xf32>
    %89 = vector.extract_strided_slice %4 {offsets = [192, 0], sizes = [3, 1], strides = [1, 1]} : vector<200x1xf32> to vector<3x1xf32>
    %cst_29 = arith.constant 1.000000e+00 : f32
    %90 = vector.broadcast %cst_29 : f32 to vector<3x1xf32>
    %91 = arith.addf %87, %90 : vector<3x1xf32>
    %92 = vector.broadcast %91 : vector<3x1xf32> to vector<3x32xf32>
    %93 = arith.mulf %86, %92 : vector<3x32xf32>
    %94 = arith.truncf %93 : vector<3x32xf32> to vector<3x32xbf16>
    %95 = arith.mulf %91, %89 : vector<3x1xf32>
    %96 = arith.addf %95, %88 : vector<3x1xf32>
    %97 = arith.truncf %83 : vector<32x256xf32> to vector<32x256xbf16>
    %cst_30 = arith.constant dense<0.000000e+00> : vector<3x256xf32>
    %98 = tpu.matmul %94, %97, %cst_30 {dimension_numbers = #tpu.dot_dimension_numbers<[1], [0], [0], [1], [0, 0, 1, 1], [], []>} : vector<3x32xbf16>, vector<32x256xbf16>, vector<3x256xf32> -> vector<3x256xf32>
    %99 = vector.broadcast %96 : vector<3x1xf32> to vector<3x256xf32>
    %100 = arith.addf %98, %99 : vector<3x256xf32>
    %cst_31 = arith.constant 1.000000e-01 : f32
    %101 = vector.broadcast %cst_31 : f32 to vector<3x256xf32>
    %102 = arith.mulf %101, %100 : vector<3x256xf32>
    %103 = arith.maximumf %100, %102 : vector<3x256xf32>
    %c0_32 = arith.constant 0 : index
    %c0_33 = arith.constant 0 : index
    %c0_34 = arith.constant 0 : index
    %104 = vector.load %arg6[%c0_32, %c0_33, %c0_34] : memref<1x3x256xf32, #tpu.memory_space<vmem>>, vector<1x3x256xf32>
    %105 = vector.shape_cast %104 : vector<1x3x256xf32> to vector<3x256xf32>
    %106 = vector.shape_cast %103 : vector<3x256xf32> to vector<1x3x256xf32>
    tpu.vector_store %arg6[%c0_32, %c0_33, %c0_34], %106 {strides = array<i32>} : memref<1x3x256xf32, #tpu.memory_space<vmem>>, vector<1x3x256xf32>,
    return
  }
  func.func @transform_0(%arg0: i32, %arg1: i32) -> (i32, i32, i32) {
    %c0_i32 = arith.constant 0 : i32
    %c0_i32_0 = arith.constant 0 : i32
    return %arg0, %c0_i32, %arg1 : i32, i32, i32
  }
  func.func @transform_1(%arg0: i32, %arg1: i32) -> (i32, i32, i32) {
    %c0_i32 = arith.constant 0 : i32
    %c0_i32_0 = arith.constant 0 : i32
    %c0_i32_1 = arith.constant 0 : i32
    %c0_i32_2 = arith.constant 0 : i32
    return %c0_i32, %c0_i32_0, %c0_i32_1 : i32, i32, i32
  }
  func.func @transform_2(%arg0: i32, %arg1: i32) -> (i32, i32) {
    %c0_i32 = arith.constant 0 : i32
    %c0_i32_0 = arith.constant 0 : i32
    %c0_i32_1 = arith.constant 0 : i32
    return %c0_i32, %c0_i32_0 : i32, i32
  }
  func.func @transform_3(%arg0: i32, %arg1: i32) -> (i32, i32, i32) {
    %c0_i32 = arith.constant 0 : i32
    %c0_i32_0 = arith.constant 0 : i32
    %c0_i32_1 = arith.constant 0 : i32
    return %arg0, %c0_i32, %c0_i32_0 : i32, i32, i32
  }
  func.func @transform_4(%arg0: i32, %arg1: i32) -> (i32, i32, i32) {
    %c0_i32 = arith.constant 0 : i32
    %c0_i32_0 = arith.constant 0 : i32
    return %arg0, %c0_i32, %arg1 : i32, i32, i32
  }
}

</mosaic_0001>

<llo_original>
// kernel: pwconv_cond_forward.4
$region0: #{pwconv_cond_forward.4}
  #allocation0 [shape = 'u32[]', space=smem, size = 0x4, offset = 0x4, fixed_abs, tag = 'smem constant byte address 0x4 - core index']
  #allocation1 [shape = 'u32[144,128]{1,0:T(1,128)}', space=vmem, size = 0x12000, scoped, tag = 'internal scratch']
  %s0 = inlined_call_operand.vmem [shape: bf16[2,27,64], index: 0, kind: input, shape index: {}]
  %s1 = inlined_call_operand.vmem [shape: f32[16,27], index: 1, kind: input, shape index: {}]
  %s2 = inlined_call_operand.vmem [shape: f32[16,1], index: 2, kind: input, shape index: {}]
  %s3 = inlined_call_operand.vmem [shape: bf16[2,16,64], index: 3, kind: output, shape index: {}]
  %s4 = sld [smem:[#allocation0]]
  $region45: #{pwconv_cond_forward.4} parent=0
    _
  %s6 = ssub.s32 1, %s4
  %s7 = scalar_select 0, %s6, %s4
  loop: start=0, step=1, limit=4
  $region2: #{pwconv_cond_forward.4} parent=0 // loop_pre_header
    _
  $region3: #{pwconv_cond_forward.4} parent=0 // loop_header
    %s9 = sphi 0, %s13
    %p10 = scmp.ge.s32.totalorder %s9, 4
    %s16 = sphi 0, %s28
    %s17 = sphi 0, %s24
    %s18 = sphi 0, %s16
    %s19 = sphi 0, %s17
    %s20 = sphi 0, %s18
    %s21 = sphi 0, %s19
    %s33 = sphi 0, %s35
    %s36 = sphi 0, %s33
    %s37 = sphi 0, %s36
    %s53 = sphi 0, %s37
    %s57 = sphi 0, %s57
    %s59 = sphi 0, %s57
    %s60 = sphi 0, %s59
    %s74 = sphi 0, %s60
    %s78 = sphi 0, %s78
    %s80 = sphi 0, %s78
    %s81 = sphi 0, %s80
    %s95 = sphi 0, %s81
    %s103 = sphi 0, %s105
    %s106 = sphi 0, %s103
    %s107 = sphi 0, %s106
    %s123 = sphi 0, %s107
  $region4: #{pwconv_cond_forward.4} parent=0 // loop_header_branch
    %12 = sbr.rel (%p10) target = $region8
  $region5: #{pwconv_cond_forward.4} parent=0 // loop_body
    %s14 = ssub.s32 %s9, 1
    %s15 = ssub.s32 %s9, 2
    %s22 = sadd.s32 1, %s17
    %p23 = scmp.ge.s32.totalorder %s22, 1
    %s24 = scalar_select %p23, 0, %s22
    %s25 = sadd.s32 1, %s16
    %s26 = scalar_select %p23, %s25, %s16
    %p27 = scmp.ge.s32.totalorder %s26, 2
    %s28 = scalar_select %p27, 0, %s26
    %s29 = ssub.s32 %s16, %s28
    %s30 = ssub.s32 %s17, %s24
    %s31 = sor.u32 %s29, %s30
    %p32 = scmp.eq.s32.totalorder %s31, 0
    %s34 = sadd.s32 %s33, 1
    %s35 = scalar_select %p32, %s33, %s34
    %p38 = pneg %p32
    %p39 = scmp.eq.s32.totalorder %s9, 1
    %p40 = por %p38, %p39
    %p41 = scmp.ne.s32.totalorder %s33, %s36
    %p42 = scmp.eq.s32.totalorder %s9, 0
    %p43 = por %p41, %p42
    %p44 = scmp.ne.s32.totalorder %s33, %s36
    %p45 = scmp.eq.s32.totalorder %s14, 1
    %p46 = por %p44, %p45
    %p47 = scmp.ne.s32.totalorder %s36, %s37
    %p48 = scmp.eq.s32.totalorder %s14, 0
    %p49 = por %p47, %p48
    %p50 = scmp.ne.s32.totalorder %s36, %s37
    %p51 = scmp.eq.s32.totalorder %s15, 1
    %p52 = por %p50, %p51
    %p54 = scmp.ne.s32.totalorder %s37, %s53
    %p55 = scmp.eq.s32.totalorder %s15, 0
    %p56 = por %p54, %p55
    %s58 = sadd.s32 %s57, 1
    %p61 = scmp.eq.s32.totalorder %s9, 1
    %p62 = scmp.ne.s32.totalorder %s57, %s59
    %p63 = scmp.eq.s32.totalorder %s9, 0
    %p64 = por %p62, %p63
    %p65 = scmp.ne.s32.totalorder %s57, %s59
    %p66 = scmp.eq.s32.totalorder %s14, 1
    %p67 = por %p65, %p66
    %p68 = scmp.ne.s32.totalorder %s59, %s60
    %p69 = scmp.eq.s32.totalorder %s14, 0
    %p70 = por %p68, %p69
    %p71 = scmp.ne.s32.totalorder %s59, %s60
    %p72 = scmp.eq.s32.totalorder %s15, 1
    %p73 = por %p71, %p72
    %p75 = scmp.ne.s32.totalorder %s60, %s74
    %p76 = scmp.eq.s32.totalorder %s15, 0
    %p77 = por %p75, %p76
    %s79 = sadd.s32 %s78, 1
    %p82 = scmp.eq.s32.totalorder %s9, 1
    %p83 = scmp.ne.s32.totalorder %s78, %s80
    %p84 = scmp.eq.s32.totalorder %s9, 0
    %p85 = por %p83, %p84
    %p86 = scmp.ne.s32.totalorder %s78, %s80
    %p87 = scmp.eq.s32.totalorder %s14, 1
    %p88 = por %p86, %p87
    %p89 = scmp.ne.s32.totalorder %s80, %s81
    %p90 = scmp.eq.s32.totalorder %s14, 0
    %p91 = por %p89, %p90
    %p92 = scmp.ne.s32.totalorder %s80, %s81
    %p93 = scmp.eq.s32.totalorder %s15, 1
    %p94 = por %p92, %p93
    %p96 = scmp.ne.s32.totalorder %s81, %s95
    %p97 = scmp.eq.s32.totalorder %s15, 0
    %p98 = por %p96, %p97
    %s99 = ssub.s32 %s16, %s28
    %s100 = ssub.s32 %s17, %s24
    %s101 = sor.u32 %s99, %s100
    %p102 = scmp.eq.s32.totalorder %s101, 0
    %s104 = sadd.s32 %s103, 1
    %s105 = scalar_select %p102, %s103, %s104
    %p108 = pneg %p102
    %p109 = scmp.eq.s32.totalorder %s9, 1
    %p110 = por %p108, %p109
    %p111 = scmp.ne.s32.totalorder %s103, %s106
    %p112 = scmp.eq.s32.totalorder %s9, 0
    %p113 = por %p111, %p112
    %p114 = scmp.ne.s32.totalorder %s103, %s106
    %p115 = scmp.eq.s32.totalorder %s14, 1
    %p116 = por %p114, %p115
    %p117 = scmp.ne.s32.totalorder %s106, %s107
    %p118 = scmp.eq.s32.totalorder %s14, 0
    %p119 = por %p117, %p118
    %p120 = scmp.ne.s32.totalorder %s106, %s107
    %p121 = scmp.eq.s32.totalorder %s15, 1
    %p122 = por %p120, %p121
    %p124 = scmp.ne.s32.totalorder %s107, %s123
    %p125 = scmp.eq.s32.totalorder %s15, 0
    %p126 = por %p124, %p125
    %p127 = scmp.le.s32.totalorder 1, %s9
    %p128 = scmp.lt.s32.totalorder %s9, 3
    %p129 = pnand %p127, %p128
    %p130 = pneg %p129
    // Predicated region
    $region9: #{pwconv_cond_forward.4} parent=5 // pred_check
      _
    $region10: #{pwconv_cond_forward.4} parent=5 // pred_check_branch
      %132 = sbr.rel (%p129) target = $region12
    $region11: #{pwconv_cond_forward.4} parent=5 // pred_region
      %s133 = ssub.s32 %s9, 1
      // Predicated region
      $region13: #{pwconv_cond_forward.4} parent=11 // pred_check
        %p134 = pneg %p70
      $region14: #{pwconv_cond_forward.4} parent=11 // pred_check_branch
        %136 = sbr.rel (%p134) target = $region16
      $region15: #{pwconv_cond_forward.4} parent=11 // pred_region
        _
      $region16: #{pwconv_cond_forward.4} parent=11 // pred_fallthru
        _
      // Predicated region
      $region17: #{pwconv_cond_forward.4} parent=11 // pred_check
        %p137 = pneg %p91
      $region18: #{pwconv_cond_forward.4} parent=11 // pred_check_branch
        %139 = sbr.rel (%p137) target = $region20
      $region19: #{pwconv_cond_forward.4} parent=11 // pred_region
        _
      $region20: #{pwconv_cond_forward.4} parent=11 // pred_fallthru
        _
    $region12: #{pwconv_cond_forward.4} parent=5 // pred_fallthru
      _
    %p140 = scmp.lt.s32.totalorder %s9, 2
    // Predicated region
    $region21: #{pwconv_cond_forward.4} parent=5 // pred_check
      %p141 = pneg %p140
    $region22: #{pwconv_cond_forward.4} parent=5 // pred_check_branch
      %143 = sbr.rel (%p141) target = $region24
    $region23: #{pwconv_cond_forward.4} parent=5 // pred_region
      // Predicated region
      $region25: #{pwconv_cond_forward.4} parent=23 // pred_check
        %p144 = pneg %p43
      $region26: #{pwconv_cond_forward.4} parent=23 // pred_check_branch
        %146 = sbr.rel (%p144) target = $region28
      $region27: #{pwconv_cond_forward.4} parent=23 // pred_region
        %p147 = scmp.lt.s32.totalorder %s16, 1
        %s148 = scalar_select %p147, %s16, 1
        %p149 = scmp.lt.s32.totalorder %s17, 0
        %s150 = scalar_select %p149, %s17, 0
        %s151 = smul.addr %s148, 4
        %s152 = sadd.s32 %s150, %s151
        %s153 = smul.addr %s152, 4
        %s154 = scalar_lea.vmem %s0, %s153
      $region28: #{pwconv_cond_forward.4} parent=23 // pred_fallthru
        _
    $region24: #{pwconv_cond_forward.4} parent=5 // pred_fallthru
      _
    %p155 = scmp.le.s32.totalorder 1, %s9
    %p156 = scmp.lt.s32.totalorder %s9, 3
    %p157 = pnand %p155, %p156
    %p158 = pneg %p157
    // Predicated region
    $region29: #{pwconv_cond_forward.4} parent=5 // pred_check
      _
    $region30: #{pwconv_cond_forward.4} parent=5 // pred_check_branch
      %160 = sbr.rel (%p157) target = $region32
    $region31: #{pwconv_cond_forward.4} parent=5 // pred_region
      %s161 = ssub.s32 %s9, 1
      %p162 = scmp.lt.s32.totalorder %s18, 1
      %s163 = scalar_select %p162, %s18, 1
      %p164 = scmp.lt.s32.totalorder %s19, 0
      %s165 = scalar_select %p164, %s19, 0
      %s166 = smul.addr %s163, 4
      %s167 = sadd.s32 %s165, %s166
      %s168 = smul.addr %s167, 4
      %s169 = scalar_lea.vmem %s0, %s168
      %p170 = pneg %p49
      %p171 = pneg %p46
      %p172 = pneg %p70
      %p173 = pneg %p67
      %p174 = pneg %p91
      %p175 = pneg %p88
      %p176 = pneg %p119
      %p177 = pneg %p116
      %p178 = scmp.lt.s32.totalorder %s18, 1
      %s179 = scalar_select %p178, %s18, 1
      %p180 = scmp.lt.s32.totalorder %s19, 0
      %s181 = scalar_select %p180, %s19, 0
      %s182 = smul.addr %s179, 2
      %s183 = sadd.s32 %s181, %s182
      %s184 = smul.addr %s183, 4
      %s185 = scalar_lea.vmem %s3, %s184
      %p186 = scmp.lt.s32.totalorder %s18, 1
      %s187 = scalar_select %p186, %s18, 1
      %p188 = scmp.lt.s32.totalorder %s19, 0
      %s189 = scalar_select %p188, %s19, 0
      %s190 = smul.addr %s187, 4
      %s191 = sadd.s32 %s189, %s190
      %s192 = smul.addr %s191, 4
      %s193 = scalar_lea.vmem %s0, %s192
      %p194 = scmp.lt.s32.totalorder %s18, 1
      %s195 = scalar_select %p194, %s18, 1
      %p196 = scmp.lt.s32.totalorder %s19, 0
      %s197 = scalar_select %p196, %s19, 0
      %s198 = smul.addr %s195, 2
      %s199 = sadd.s32 %s197, %s198
      %s200 = smul.addr %s199, 4
      %s201 = scalar_lea.vmem %s3, %s200
      %v203 = vld [vmem:[%s1] sm:$0xff]
      %v204 = vld [vmem:[%s1 + $0x8] sm:$0xff]
      %v205 = vpack.c.bf16 %v204, %v203
      %v206 = vld [vmem:[%s193] sm:$0xf]
      %v207 = vld [vmem:[%s193 + $0x4] sm:$0xf]
      %v208 = vld [vmem:[%s193 + $0x8] sm:$0xf]
      %v209 = vld [vmem:[%s193 + $0xc] sm:$0x3]
      %v210 = vld [vmem:[%s2] sm:$0xff]
      %v211 = vld [vmem:[%s2 + $0x8] sm:$0xff]
      %213 = vset.pattern.permute.xlu0 0
      %214 = vperm.xlu0 %213, %v210
      %v215 = vpop.permute.xlu0 %214
      %218 = vset.pattern.permute.xlu0 0
      %219 = vperm.xlu0 %218, %v211
      %v220 = vpop.permute.xlu0 %219
      %v226 = vunpack.c.l.b16 %v206
      %v227 = vunpack.c.l.b16 %v207
      %v228 = vunpack.c.l.b16 %v208
      %v229 = vunpack.c.l.b16 %v209
      %v230 = vpack.c.b16 %v227, %v226
      %v231 = vpack.c.b16 %v229, %v228
      %vm233 = vcmask 220160
      %v235 = vsel %vm233, %v205, 0
      %vm237 = vcmask 1044480
      %vm238 = vcmask 1045504
      %v239 = vsel %vm237, 4294967295, 65535
      %v240 = vsel %vm238, %v239, 0
      %v242 = vand.u32 %v231, %v240
      %244 = vmatprep.subr.bf16.mxu0 0
      %245 = vmatpush1.bf16.msra.mxu0 %v230
      %246 = vmatprep.subr.bf16.mxu0 0
      %247 = vmatpush1.bf16.msra.mxu0 %v242
      %248 = vmatprep.subr.bf16.mxu0 0
      %249 = vmatpush1.bf16.msra.mxu0 0
      %250 = vmatprep.subr.bf16.mxu0 0
      %251 = vmatpush1.bf16.msra.mxu0 0
      %252 = vmatprep.subr.bf16.mxu0 0
      %253 = vmatpush1.bf16.msra.mxu0 0
      %254 = vmatprep.subr.bf16.mxu0 0
      %255 = vmatpush1.bf16.msra.mxu0 0
      %256 = vmatprep.subr.bf16.mxu0 0
      %257 = vmatpush1.bf16.msra.mxu0 0
      %258 = vmatprep.subr.bf16.mxu0 0
      %259 = vmatpush1.bf16.msra.mxu0 0
      %260 = vmatprep.subr.bf16.mxu0 0
      %261 = vmatpush1.bf16.msra.mxu0 0
      %262 = vmatprep.subr.bf16.mxu0 0
      %263 = vmatpush1.bf16.msra.mxu0 0
      %264 = vmatprep.subr.bf16.mxu0 0
      %265 = vmatpush1.bf16.msra.mxu0 0
      %266 = vmatprep.subr.bf16.mxu0 0
      %267 = vmatpush1.bf16.msra.mxu0 0
      %268 = vmatprep.subr.bf16.mxu0 0
      %269 = vmatpush1.bf16.msra.mxu0 0
      %270 = vmatprep.subr.bf16.mxu0 0
      %271 = vmatpush1.bf16.msra.mxu0 0
      %272 = vmatprep.subr.bf16.mxu0 0
      %273 = vmatpush1.bf16.msra.mxu0 0
      %274 = vmatprep.subr.bf16.mxu0 0
      %275 = vmatpush1.bf16.msra.mxu0 0
      %276 = vmatprep.mubr.bf16.mxu0 0
      %277 = vmatmul.mubr.bf16.gmra.mrb[0].mxu0 %v235
      %v278 = vpop.f32.mrb[0].mxu0
      %v279 = vadd.f32 %v215, %v278
      %v280 = vpop.f32.mrb[0].mxu0
      %v281 = vpop.f32.mrb[0].mxu0
      %v282 = vadd.f32 %v220, %v281
      %v283 = vpop.f32.mrb[0].mxu0
      %284 = vdwg.mxu0
      %v285 = vmul.f32 %v279, 0.1
      %v286 = vmul.f32 %v282, 0.1
      %v287 = vmax.f32 %v279, %v285
      %v288 = vmax.f32 %v282, %v286
      %v289 = vpack.c.bf16 %v288, %v287
      %v291 = vunpack.c.l.b16 %v289
      %v292 = vunpack.c.h.b16 %v289
      %v293 = vpack.c.b16 %v291, %v291
      %v294 = vpack.c.b16 %v292, %v292
      %vm297 = vcmask 519168
      %298 = vst.msk [vmem:[%s201] sm:$0xf] %vm297, %v293
      %299 = vst.msk [vmem:[%s201 + $0x4] sm:$0xf] %vm297, %v294
      %p300 = scmp.lt.s32.totalorder %s18, 1
      %s301 = scalar_select %p300, %s18, 1
      %p302 = scmp.lt.s32.totalorder %s19, 0
      %s303 = scalar_select %p302, %s19, 0
      %s304 = smul.addr %s301, 2
      %s305 = sadd.s32 %s303, %s304
      %s306 = smul.addr %s305, 4
      %s307 = scalar_lea.vmem %s3, %s306
      // Predicated region
      $region33: #{pwconv_cond_forward.4} parent=31 // pred_check
        %p308 = pneg %p116
      $region34: #{pwconv_cond_forward.4} parent=31 // pred_check_branch
        %310 = sbr.rel (%p308) target = $region36
      $region35: #{pwconv_cond_forward.4} parent=31 // pred_region
        _
      $region36: #{pwconv_cond_forward.4} parent=31 // pred_fallthru
        _
    $region32: #{pwconv_cond_forward.4} parent=5 // pred_fallthru
      _
    %p311 = scmp.le.s32.totalorder 2, %s9
    // Predicated region
    $region37: #{pwconv_cond_forward.4} parent=5 // pred_check
      %p312 = pneg %p311
    $region38: #{pwconv_cond_forward.4} parent=5 // pred_check_branch
      %314 = sbr.rel (%p312) target = $region40
    $region39: #{pwconv_cond_forward.4} parent=5 // pred_region
      %s315 = ssub.s32 %s9, 2
      // Predicated region
      $region41: #{pwconv_cond_forward.4} parent=39 // pred_check
        %p316 = pneg %p122
      $region42: #{pwconv_cond_forward.4} parent=39 // pred_check_branch
        %318 = sbr.rel (%p316) target = $region44
      $region43: #{pwconv_cond_forward.4} parent=39 // pred_region
        %p319 = scmp.lt.s32.totalorder %s20, 1
        %s320 = scalar_select %p319, %s20, 1
        %p321 = scmp.lt.s32.totalorder %s21, 0
        %s322 = scalar_select %p321, %s21, 0
        %s323 = smul.addr %s320, 2
        %s324 = sadd.s32 %s322, %s323
        %s325 = smul.addr %s324, 4
        %s326 = scalar_lea.vmem %s3, %s325
      $region44: #{pwconv_cond_forward.4} parent=39 // pred_fallthru
        _
    $region40: #{pwconv_cond_forward.4} parent=5 // pred_fallthru
      _
  $region6: #{pwconv_cond_forward.4} parent=0 // loop_footer
    %s13 = sadd.s32 1, %s9
  $region7: #{pwconv_cond_forward.4} parent=0 // loop_footer_branch
    %8 = sbr.rel target = $region3
  $region8: #{pwconv_cond_forward.4} parent=0 // loop_exit
    _

// kernel: pwconv_cond_forward.5
$region0: #{pwconv_cond_forward.5}
  #allocation0 [shape = 'u32[]', space=smem, size = 0x4, offset = 0x4, fixed_abs, tag = 'smem constant byte address 0x4 - core index']
  #allocation1 [shape = 'u32[144,128]{1,0:T(1,128)}', space=vmem, size = 0x12000, scoped, tag = 'internal scratch']
  %s0 = inlined_call_operand.vmem [shape: bf16[2,144,16], index: 0, kind: input, shape index: {}]
  %s1 = inlined_call_operand.vmem [shape: f32[16,144], index: 1, kind: input, shape index: {}]
  %s2 = inlined_call_operand.vmem [shape: f32[16,1], index: 2, kind: input, shape index: {}]
  %s3 = inlined_call_operand.vmem [shape: bf16[2,16,16], index: 3, kind: output, shape index: {}]
  %s4 = sld [smem:[#allocation0]]
  $region45: #{pwconv_cond_forward.5} parent=0
    _
  %s6 = ssub.s32 1, %s4
  %s7 = scalar_select 0, %s6, %s4
  loop: start=0, step=1, limit=4
  $region2: #{pwconv_cond_forward.5} parent=0 // loop_pre_header
    _
  $region3: #{pwconv_cond_forward.5} parent=0 // loop_header
    %s9 = sphi 0, %s13
    %p10 = scmp.ge.s32.totalorder %s9, 4
    %s16 = sphi 0, %s28
    %s17 = sphi 0, %s24
    %s18 = sphi 0, %s16
    %s19 = sphi 0, %s17
    %s20 = sphi 0, %s18
    %s21 = sphi 0, %s19
    %s33 = sphi 0, %s35
    %s36 = sphi 0, %s33
    %s37 = sphi 0, %s36
    %s53 = sphi 0, %s37
    %s57 = sphi 0, %s57
    %s59 = sphi 0, %s57
    %s60 = sphi 0, %s59
    %s74 = sphi 0, %s60
    %s78 = sphi 0, %s78
    %s80 = sphi 0, %s78
    %s81 = sphi 0, %s80
    %s95 = sphi 0, %s81
    %s103 = sphi 0, %s105
    %s106 = sphi 0, %s103
    %s107 = sphi 0, %s106
    %s123 = sphi 0, %s107
  $region4: #{pwconv_cond_forward.5} parent=0 // loop_header_branch
    %12 = sbr.rel (%p10) target = $region8
  $region5: #{pwconv_cond_forward.5} parent=0 // loop_body
    %s14 = ssub.s32 %s9, 1
    %s15 = ssub.s32 %s9, 2
    %s22 = sadd.s32 1, %s17
    %p23 = scmp.ge.s32.totalorder %s22, 1
    %s24 = scalar_select %p23, 0, %s22
    %s25 = sadd.s32 1, %s16
    %s26 = scalar_select %p23, %s25, %s16
    %p27 = scmp.ge.s32.totalorder %s26, 2
    %s28 = scalar_select %p27, 0, %s26
    %s29 = ssub.s32 %s16, %s28
    %s30 = ssub.s32 %s17, %s24
    %s31 = sor.u32 %s29, %s30
    %p32 = scmp.eq.s32.totalorder %s31, 0
    %s34 = sadd.s32 %s33, 1
    %s35 = scalar_select %p32, %s33, %s34
    %p38 = pneg %p32
    %p39 = scmp.eq.s32.totalorder %s9, 1
    %p40 = por %p38, %p39
    %p41 = scmp.ne.s32.totalorder %s33, %s36
    %p42 = scmp.eq.s32.totalorder %s9, 0
    %p43 = por %p41, %p42
    %p44 = scmp.ne.s32.totalorder %s33, %s36
    %p45 = scmp.eq.s32.totalorder %s14, 1
    %p46 = por %p44, %p45
    %p47 = scmp.ne.s32.totalorder %s36, %s37
    %p48 = scmp.eq.s32.totalorder %s14, 0
    %p49 = por %p47, %p48
    %p50 = scmp.ne.s32.totalorder %s36, %s37
    %p51 = scmp.eq.s32.totalorder %s15, 1
    %p52 = por %p50, %p51
    %p54 = scmp.ne.s32.totalorder %s37, %s53
    %p55 = scmp.eq.s32.totalorder %s15, 0
    %p56 = por %p54, %p55
    %s58 = sadd.s32 %s57, 1
    %p61 = scmp.eq.s32.totalorder %s9, 1
    %p62 = scmp.ne.s32.totalorder %s57, %s59
    %p63 = scmp.eq.s32.totalorder %s9, 0
    %p64 = por %p62, %p63
    %p65 = scmp.ne.s32.totalorder %s57, %s59
    %p66 = scmp.eq.s32.totalorder %s14, 1
    %p67 = por %p65, %p66
    %p68 = scmp.ne.s32.totalorder %s59, %s60
    %p69 = scmp.eq.s32.totalorder %s14, 0
    %p70 = por %p68, %p69
    %p71 = scmp.ne.s32.totalorder %s59, %s60
    %p72 = scmp.eq.s32.totalorder %s15, 1
    %p73 = por %p71, %p72
    %p75 = scmp.ne.s32.totalorder %s60, %s74
    %p76 = scmp.eq.s32.totalorder %s15, 0
    %p77 = por %p75, %p76
    %s79 = sadd.s32 %s78, 1
    %p82 = scmp.eq.s32.totalorder %s9, 1
    %p83 = scmp.ne.s32.totalorder %s78, %s80
    %p84 = scmp.eq.s32.totalorder %s9, 0
    %p85 = por %p83, %p84
    %p86 = scmp.ne.s32.totalorder %s78, %s80
    %p87 = scmp.eq.s32.totalorder %s14, 1
    %p88 = por %p86, %p87
    %p89 = scmp.ne.s32.totalorder %s80, %s81
    %p90 = scmp.eq.s32.totalorder %s14, 0
    %p91 = por %p89, %p90
    %p92 = scmp.ne.s32.totalorder %s80, %s81
    %p93 = scmp.eq.s32.totalorder %s15, 1
    %p94 = por %p92, %p93
    %p96 = scmp.ne.s32.totalorder %s81, %s95
    %p97 = scmp.eq.s32.totalorder %s15, 0
    %p98 = por %p96, %p97
    %s99 = ssub.s32 %s16, %s28
    %s100 = ssub.s32 %s17, %s24
    %s101 = sor.u32 %s99, %s100
    %p102 = scmp.eq.s32.totalorder %s101, 0
    %s104 = sadd.s32 %s103, 1
    %s105 = scalar_select %p102, %s103, %s104
    %p108 = pneg %p102
    %p109 = scmp.eq.s32.totalorder %s9, 1
    %p110 = por %p108, %p109
    %p111 = scmp.ne.s32.totalorder %s103, %s106
    %p112 = scmp.eq.s32.totalorder %s9, 0
    %p113 = por %p111, %p112
    %p114 = scmp.ne.s32.totalorder %s103, %s106
    %p115 = scmp.eq.s32.totalorder %s14, 1
    %p116 = por %p114, %p115
    %p117 = scmp.ne.s32.totalorder %s106, %s107
    %p118 = scmp.eq.s32.totalorder %s14, 0
    %p119 = por %p117, %p118
    %p120 = scmp.ne.s32.totalorder %s106, %s107
    %p121 = scmp.eq.s32.totalorder %s15, 1
    %p122 = por %p120, %p121
    %p124 = scmp.ne.s32.totalorder %s107, %s123
    %p125 = scmp.eq.s32.totalorder %s15, 0
    %p126 = por %p124, %p125
    %p127 = scmp.le.s32.totalorder 1, %s9
    %p128 = scmp.lt.s32.totalorder %s9, 3
    %p129 = pnand %p127, %p128
    %p130 = pneg %p129
    // Predicated region
    $region9: #{pwconv_cond_forward.5} parent=5 // pred_check
      _
    $region10: #{pwconv_cond_forward.5} parent=5 // pred_check_branch
      %132 = sbr.rel (%p129) target = $region12
    $region11: #{pwconv_cond_forward.5} parent=5 // pred_region
      %s133 = ssub.s32 %s9, 1
      // Predicated region
      $region13: #{pwconv_cond_forward.5} parent=11 // pred_check
        %p134 = pneg %p70
      $region14: #{pwconv_cond_forward.5} parent=11 // pred_check_branch
        %136 = sbr.rel (%p134) target = $region16
      $region15: #{pwconv_cond_forward.5} parent=11 // pred_region
        _
      $region16: #{pwconv_cond_forward.5} parent=11 // pred_fallthru
        _
      // Predicated region
      $region17: #{pwconv_cond_forward.5} parent=11 // pred_check
        %p137 = pneg %p91
      $region18: #{pwconv_cond_forward.5} parent=11 // pred_check_branch
        %139 = sbr.rel (%p137) target = $region20
      $region19: #{pwconv_cond_forward.5} parent=11 // pred_region
        _
      $region20: #{pwconv_cond_forward.5} parent=11 // pred_fallthru
        _
    $region12: #{pwconv_cond_forward.5} parent=5 // pred_fallthru
      _
    %p140 = scmp.lt.s32.totalorder %s9, 2
    // Predicated region
    $region21: #{pwconv_cond_forward.5} parent=5 // pred_check
      %p141 = pneg %p140
    $region22: #{pwconv_cond_forward.5} parent=5 // pred_check_branch
      %143 = sbr.rel (%p141) target = $region24
    $region23: #{pwconv_cond_forward.5} parent=5 // pred_region
      // Predicated region
      $region25: #{pwconv_cond_forward.5} parent=23 // pred_check
        %p144 = pneg %p43
      $region26: #{pwconv_cond_forward.5} parent=23 // pred_check_branch
        %146 = sbr.rel (%p144) target = $region28
      $region27: #{pwconv_cond_forward.5} parent=23 // pred_region
        %p147 = scmp.lt.s32.totalorder %s16, 1
        %s148 = scalar_select %p147, %s16, 1
        %p149 = scmp.lt.s32.totalorder %s17, 0
        %s150 = scalar_select %p149, %s17, 0
        %s151 = smul.addr %s148, 18
        %s152 = sadd.s32 %s150, %s151
        %s153 = smul.addr %s152, 4
        %s154 = scalar_lea.vmem %s0, %s153
      $region28: #{pwconv_cond_forward.5} parent=23 // pred_fallthru
        _
    $region24: #{pwconv_cond_forward.5} parent=5 // pred_fallthru
      _
    %p155 = scmp.le.s32.totalorder 1, %s9
    %p156 = scmp.lt.s32.totalorder %s9, 3
    %p157 = pnand %p155, %p156
    %p158 = pneg %p157
    // Predicated region
    $region29: #{pwconv_cond_forward.5} parent=5 // pred_check
      _
    $region30: #{pwconv_cond_forward.5} parent=5 // pred_check_branch
      %160 = sbr.rel (%p157) target = $region32
    $region31: #{pwconv_cond_forward.5} parent=5 // pred_region
      %s161 = ssub.s32 %s9, 1
      %p162 = scmp.lt.s32.totalorder %s18, 1
      %s163 = scalar_select %p162, %s18, 1
      %p164 = scmp.lt.s32.totalorder %s19, 0
      %s165 = scalar_select %p164, %s19, 0
      %s166 = smul.addr %s163, 18
      %s167 = sadd.s32 %s165, %s166
      %s168 = smul.addr %s167, 4
      %s169 = scalar_lea.vmem %s0, %s168
      %p170 = pneg %p49
      %p171 = pneg %p46
      %p172 = pneg %p70
      %p173 = pneg %p67
      %p174 = pneg %p91
      %p175 = pneg %p88
      %p176 = pneg %p119
      %p177 = pneg %p116
      %p178 = scmp.lt.s32.totalorder %s18, 1
      %s179 = scalar_select %p178, %s18, 1
      %p180 = scmp.lt.s32.totalorder %s19, 0
      %s181 = scalar_select %p180, %s19, 0
      %s182 = smul.addr %s179, 2
      %s183 = sadd.s32 %s181, %s182
      %s184 = smul.addr %s183, 4
      %s185 = scalar_lea.vmem %s3, %s184
      %p186 = scmp.lt.s32.totalorder %s18, 1
      %s187 = scalar_select %p186, %s18, 1
      %p188 = scmp.lt.s32.totalorder %s19, 0
      %s189 = scalar_select %p188, %s19, 0
      %s190 = smul.addr %s187, 18
      %s191 = sadd.s32 %s189, %s190
      %s192 = smul.addr %s191, 4
      %s193 = scalar_lea.vmem %s0, %s192
      %p194 = scmp.lt.s32.totalorder %s18, 1
      %s195 = scalar_select %p194, %s18, 1
      %p196 = scmp.lt.s32.totalorder %s19, 0
      %s197 = scalar_select %p196, %s19, 0
      %s198 = smul.addr %s195, 2
      %s199 = sadd.s32 %s197, %s198
      %s200 = smul.addr %s199, 4
      %s201 = scalar_lea.vmem %s3, %s200
      %v203 = vld [vmem:[%s1] sm:$0xff]
      %v204 = vld [vmem:[%s1 + $0x8] sm:$0xff]
      %v205 = vld [vmem:[%s1 + $0x10] sm:$0xff]
      %v206 = vld [vmem:[%s1 + $0x18] sm:$0xff]
      %v207 = vpack.c.bf16 %v205, %v203
      %v208 = vpack.c.bf16 %v206, %v204
      %v209 = vld [vmem:[%s193] sm:$0xf]
      %v210 = vld [vmem:[%s193 + $0x4] sm:$0xf]
      %v211 = vld [vmem:[%s193 + $0x8] sm:$0xf]
      %v212 = vld [vmem:[%s193 + $0xc] sm:$0xf]
      %v213 = vld [vmem:[%s193 + $0x10] sm:$0xf]
      %v214 = vld [vmem:[%s193 + $0x14] sm:$0xf]
      %v215 = vld [vmem:[%s193 + $0x18] sm:$0xf]
      %v216 = vld [vmem:[%s193 + $0x1c] sm:$0xf]
      %v217 = vld [vmem:[%s193 + $0x20] sm:$0xf]
      %v218 = vld [vmem:[%s193 + $0x24] sm:$0xf]
      %v219 = vld [vmem:[%s193 + $0x28] sm:$0xf]
      %v220 = vld [vmem:[%s193 + $0x2c] sm:$0xf]
      %v221 = vld [vmem:[%s193 + $0x30] sm:$0xf]
      %v222 = vld [vmem:[%s193 + $0x34] sm:$0xf]
      %v223 = vld [vmem:[%s193 + $0x38] sm:$0xf]
      %v224 = vld [vmem:[%s193 + $0x3c] sm:$0xf]
      %v225 = vld [vmem:[%s193 + $0x40] sm:$0xf]
      %v226 = vld [vmem:[%s193 + $0x44] sm:$0xf]
      %v227 = vld [vmem:[%s2] sm:$0xff]
      %v228 = vld [vmem:[%s2 + $0x8] sm:$0xff]
      %230 = vset.pattern.permute.xlu0 0
      %231 = vperm.xlu0 %230, %v227
      %v232 = vpop.permute.xlu0 %231
      %235 = vset.pattern.permute.xlu0 0
      %236 = vperm.xlu0 %235, %v228
      %v237 = vpop.permute.xlu0 %236
      %v257 = vunpack.c.l.b16 %v209
      %v258 = vunpack.c.l.b16 %v210
      %v259 = vunpack.c.l.b16 %v211
      %v260 = vunpack.c.l.b16 %v212
      %v261 = vunpack.c.l.b16 %v213
      %v262 = vunpack.c.l.b16 %v214
      %v263 = vunpack.c.l.b16 %v215
      %v264 = vunpack.c.l.b16 %v216
      %v265 = vunpack.c.l.b16 %v217
      %v266 = vunpack.c.l.b16 %v218
      %v267 = vunpack.c.l.b16 %v219
      %v268 = vunpack.c.l.b16 %v220
      %v269 = vunpack.c.l.b16 %v221
      %v270 = vunpack.c.l.b16 %v222
      %v271 = vunpack.c.l.b16 %v223
      %v272 = vunpack.c.l.b16 %v224
      %v273 = vunpack.c.l.b16 %v225
      %v274 = vunpack.c.l.b16 %v226
      %v275 = vpack.c.b16 %v258, %v257
      %v276 = vpack.c.b16 %v260, %v259
      %v277 = vpack.c.b16 %v262, %v261
      %v278 = vpack.c.b16 %v264, %v263
      %v279 = vpack.c.b16 %v266, %v265
      %v280 = vpack.c.b16 %v268, %v267
      %v281 = vpack.c.b16 %v270, %v269
      %v282 = vpack.c.b16 %v272, %v271
      %v283 = vpack.c.b16 %v274, %v273
      %vm293 = vcmask 130048
      %v295 = vsel %vm293, %v208, 0
      %297 = vmatprep.subr.bf16.mxu0 0
      %298 = vmatpush1.bf16.msra.mxu0 %v275
      %299 = vmatprep.subr.bf16.mxu0 0
      %300 = vmatpush1.bf16.msra.mxu0 %v276
      %301 = vmatprep.subr.bf16.mxu0 0
      %302 = vmatpush1.bf16.msra.mxu0 %v277
      %303 = vmatprep.subr.bf16.mxu0 0
      %304 = vmatpush1.bf16.msra.mxu0 %v278
      %305 = vmatprep.subr.bf16.mxu0 0
      %306 = vmatpush1.bf16.msra.mxu0 %v279
      %307 = vmatprep.subr.bf16.mxu0 0
      %308 = vmatpush1.bf16.msra.mxu0 %v280
      %309 = vmatprep.subr.bf16.mxu0 0
      %310 = vmatpush1.bf16.msra.mxu0 %v281
      %311 = vmatprep.subr.bf16.mxu0 0
      %312 = vmatpush1.bf16.msra.mxu0 %v282
      %313 = vmatprep.subr.bf16.mxu0 0
      %314 = vmatpush1.bf16.msra.mxu0 %v283
      %315 = vmatprep.subr.bf16.mxu0 0
      %316 = vmatpush1.bf16.msra.mxu0 0
      %317 = vmatprep.subr.bf16.mxu0 0
      %318 = vmatpush1.bf16.msra.mxu0 0
      %319 = vmatprep.subr.bf16.mxu0 0
      %320 = vmatpush1.bf16.msra.mxu0 0
      %321 = vmatprep.subr.bf16.mxu0 0
      %322 = vmatpush1.bf16.msra.mxu0 0
      %323 = vmatprep.subr.bf16.mxu0 0
      %324 = vmatpush1.bf16.msra.mxu0 0
      %325 = vmatprep.subr.bf16.mxu0 0
      %326 = vmatpush1.bf16.msra.mxu0 0
      %327 = vmatprep.subr.bf16.mxu0 0
      %328 = vmatpush1.bf16.msra.mxu0 0
      %329 = vmatprep.mubr.bf16.mxu0 %v295
      %330 = vmatmul.mubr.bf16.gmra.mrb[0].mxu0 %v207
      %v331 = vpop.f32.mrb[0].mxu0
      %v332 = vadd.f32 %v232, %v331
      %v333 = vpop.f32.mrb[0].mxu0
      %v334 = vpop.f32.mrb[0].mxu0
      %v335 = vadd.f32 %v237, %v334
      %v336 = vpop.f32.mrb[0].mxu0
      %337 = vdwg.mxu0
      %v338 = vmul.f32 %v332, 0.1
      %v339 = vmul.f32 %v335, 0.1
      %v340 = vmax.f32 %v332, %v338
      %v341 = vmax.f32 %v335, %v339
      %v342 = vpack.c.bf16 %v341, %v340
      %v344 = vunpack.c.l.b16 %v342
      %v345 = vunpack.c.h.b16 %v342
      %v346 = vpack.c.b16 %v344, %v344
      %v347 = vpack.c.b16 %v345, %v345
      %vm350 = vcmask 125952
      %351 = vst.msk [vmem:[%s201] sm:$0xf] %vm350, %v346
      %352 = vst.msk [vmem:[%s201 + $0x4] sm:$0xf] %vm350, %v347
      %p353 = scmp.lt.s32.totalorder %s18, 1
      %s354 = scalar_select %p353, %s18, 1
      %p355 = scmp.lt.s32.totalorder %s19, 0
      %s356 = scalar_select %p355, %s19, 0
      %s357 = smul.addr %s354, 2
      %s358 = sadd.s32 %s356, %s357
      %s359 = smul.addr %s358, 4
      %s360 = scalar_lea.vmem %s3, %s359
      // Predicated region
      $region33: #{pwconv_cond_forward.5} parent=31 // pred_check
        %p361 = pneg %p116
      $region34: #{pwconv_cond_forward.5} parent=31 // pred_check_branch
        %363 = sbr.rel (%p361) target = $region36
      $region35: #{pwconv_cond_forward.5} parent=31 // pred_region
        _
      $region36: #{pwconv_cond_forward.5} parent=31 // pred_fallthru
        _
    $region32: #{pwconv_cond_forward.5} parent=5 // pred_fallthru
      _
    %p364 = scmp.le.s32.totalorder 2, %s9
    // Predicated region
    $region37: #{pwconv_cond_forward.5} parent=5 // pred_check
      %p365 = pneg %p364
    $region38: #{pwconv_cond_forward.5} parent=5 // pred_check_branch
      %367 = sbr.rel (%p365) target = $region40
    $region39: #{pwconv_cond_forward.5} parent=5 // pred_region
      %s368 = ssub.s32 %s9, 2
      // Predicated region
      $region41: #{pwconv_cond_forward.5} parent=39 // pred_check
        %p369 = pneg %p122
      $region42: #{pwconv_cond_forward.5} parent=39 // pred_check_branch
        %371 = sbr.rel (%p369) target = $region44
      $region43: #{pwconv_cond_forward.5} parent=39 // pred_region
        %p372 = scmp.lt.s32.totalorder %s20, 1
        %s373 = scalar_select %p372, %s20, 1
        %p374 = scmp.lt.s32.totalorder %s21, 0
        %s375 = scalar_select %p374, %s21, 0
        %s376 = smul.addr %s373, 2
        %s377 = sadd.s32 %s375, %s376
        %s378 = smul.addr %s377, 4
        %s379 = scalar_lea.vmem %s3, %s378
      $region44: #{pwconv_cond_forward.5} parent=39 // pred_fallthru
        _
    $region40: #{pwconv_cond_forward.5} parent=5 // pred_fallthru
      _
  $region6: #{pwconv_cond_forward.5} parent=0 // loop_footer
    %s13 = sadd.s32 1, %s9
  $region7: #{pwconv_cond_forward.5} parent=0 // loop_footer_branch
    %8 = sbr.rel target = $region3
  $region8: #{pwconv_cond_forward.5} parent=0 // loop_exit
    _

// kernel: pwconv_cond_forward.6
$region0: #{pwconv_cond_forward.6}
  #allocation0 [shape = 'u32[]', space=smem, size = 0x4, offset = 0x4, fixed_abs, tag = 'smem constant byte address 0x4 - core index']
  #allocation1 [shape = 'u32[144,128]{1,0:T(1,128)}', space=vmem, size = 0x12000, scoped, tag = 'internal scratch']
  %s0 = inlined_call_operand.vmem [shape: bf16[2,144,4], index: 0, kind: input, shape index: {}]
  %s1 = inlined_call_operand.vmem [shape: f32[32,144], index: 1, kind: input, shape index: {}]
  %s2 = inlined_call_operand.vmem [shape: f32[32,1], index: 2, kind: input, shape index: {}]
  %s3 = inlined_call_operand.vmem [shape: f32[400,32], index: 3, kind: input, shape index: {}]
  %s4 = inlined_call_operand.vmem [shape: f32[400,1], index: 4, kind: input, shape index: {}]
  %s5 = inlined_call_operand.vmem [shape: f32[2,400,1], index: 5, kind: output, shape index: {}]
  %s6 = sld [smem:[#allocation0]]
  $region53: #{pwconv_cond_forward.6} parent=0
    _
  %s8 = ssub.s32 1, %s6
  %s9 = scalar_select 0, %s8, %s6
  loop: start=0, step=1, limit=4
  $region2: #{pwconv_cond_forward.6} parent=0 // loop_pre_header
    _
  $region3: #{pwconv_cond_forward.6} parent=0 // loop_header
    %s11 = sphi 0, %s15
    %p12 = scmp.ge.s32.totalorder %s11, 4
    %s21 = sphi 0, %s23
    %s24 = sphi 0, %s21
    %s25 = sphi 0, %s24
    %s41 = sphi 0, %s25
    %s45 = sphi 0, %s45
    %s47 = sphi 0, %s45
    %s48 = sphi 0, %s47
    %s62 = sphi 0, %s48
    %s66 = sphi 0, %s66
    %s68 = sphi 0, %s66
    %s69 = sphi 0, %s68
    %s83 = sphi 0, %s69
    %s87 = sphi 0, %s87
    %s89 = sphi 0, %s87
    %s90 = sphi 0, %s89
    %s104 = sphi 0, %s90
    %s108 = sphi 0, %s108
    %s110 = sphi 0, %s108
    %s111 = sphi 0, %s110
    %s125 = sphi 0, %s111
    %s131 = sphi 0, %s133
    %s134 = sphi 0, %s131
    %s135 = sphi 0, %s134
    %s151 = sphi 0, %s135
  $region4: #{pwconv_cond_forward.6} parent=0 // loop_header_branch
    %14 = sbr.rel (%p12) target = $region8
  $region5: #{pwconv_cond_forward.6} parent=0 // loop_body
    %s16 = ssub.s32 %s11, 1
    %s17 = ssub.s32 %s11, 2
    %s18 = sadd.s32 %s11, 1
    %s19 = ssub.s32 %s11, %s18
    %p20 = scmp.eq.s32.totalorder %s19, 0
    %s22 = sadd.s32 %s21, 1
    %s23 = scalar_select %p20, %s21, %s22
    %p26 = pneg %p20
    %p27 = scmp.eq.s32.totalorder %s11, 1
    %p28 = por %p26, %p27
    %p29 = scmp.ne.s32.totalorder %s21, %s24
    %p30 = scmp.eq.s32.totalorder %s11, 0
    %p31 = por %p29, %p30
    %p32 = scmp.ne.s32.totalorder %s21, %s24
    %p33 = scmp.eq.s32.totalorder %s16, 1
    %p34 = por %p32, %p33
    %p35 = scmp.ne.s32.totalorder %s24, %s25
    %p36 = scmp.eq.s32.totalorder %s16, 0
    %p37 = por %p35, %p36
    %p38 = scmp.ne.s32.totalorder %s24, %s25
    %p39 = scmp.eq.s32.totalorder %s17, 1
    %p40 = por %p38, %p39
    %p42 = scmp.ne.s32.totalorder %s25, %s41
    %p43 = scmp.eq.s32.totalorder %s17, 0
    %p44 = por %p42, %p43
    %s46 = sadd.s32 %s45, 1
    %p49 = scmp.eq.s32.totalorder %s11, 1
    %p50 = scmp.ne.s32.totalorder %s45, %s47
    %p51 = scmp.eq.s32.totalorder %s11, 0
    %p52 = por %p50, %p51
    %p53 = scmp.ne.s32.totalorder %s45, %s47
    %p54 = scmp.eq.s32.totalorder %s16, 1
    %p55 = por %p53, %p54
    %p56 = scmp.ne.s32.totalorder %s47, %s48
    %p57 = scmp.eq.s32.totalorder %s16, 0
    %p58 = por %p56, %p57
    %p59 = scmp.ne.s32.totalorder %s47, %s48
    %p60 = scmp.eq.s32.totalorder %s17, 1
    %p61 = por %p59, %p60
    %p63 = scmp.ne.s32.totalorder %s48, %s62
    %p64 = scmp.eq.s32.totalorder %s17, 0
    %p65 = por %p63, %p64
    %s67 = sadd.s32 %s66, 1
    %p70 = scmp.eq.s32.totalorder %s11, 1
    %p71 = scmp.ne.s32.totalorder %s66, %s68
    %p72 = scmp.eq.s32.totalorder %s11, 0
    %p73 = por %p71, %p72
    %p74 = scmp.ne.s32.totalorder %s66, %s68
    %p75 = scmp.eq.s32.totalorder %s16, 1
    %p76 = por %p74, %p75
    %p77 = scmp.ne.s32.totalorder %s68, %s69
    %p78 = scmp.eq.s32.totalorder %s16, 0
    %p79 = por %p77, %p78
    %p80 = scmp.ne.s32.totalorder %s68, %s69
    %p81 = scmp.eq.s32.totalorder %s17, 1
    %p82 = por %p80, %p81
    %p84 = scmp.ne.s32.totalorder %s69, %s83
    %p85 = scmp.eq.s32.totalorder %s17, 0
    %p86 = por %p84, %p85
    %s88 = sadd.s32 %s87, 1
    %p91 = scmp.eq.s32.totalorder %s11, 1
    %p92 = scmp.ne.s32.totalorder %s87, %s89
    %p93 = scmp.eq.s32.totalorder %s11, 0
    %p94 = por %p92, %p93
    %p95 = scmp.ne.s32.totalorder %s87, %s89
    %p96 = scmp.eq.s32.totalorder %s16, 1
    %p97 = por %p95, %p96
    %p98 = scmp.ne.s32.totalorder %s89, %s90
    %p99 = scmp.eq.s32.totalorder %s16, 0
    %p100 = por %p98, %p99
    %p101 = scmp.ne.s32.totalorder %s89, %s90
    %p102 = scmp.eq.s32.totalorder %s17, 1
    %p103 = por %p101, %p102
    %p105 = scmp.ne.s32.totalorder %s90, %s104
    %p106 = scmp.eq.s32.totalorder %s17, 0
    %p107 = por %p105, %p106
    %s109 = sadd.s32 %s108, 1
    %p112 = scmp.eq.s32.totalorder %s11, 1
    %p113 = scmp.ne.s32.totalorder %s108, %s110
    %p114 = scmp.eq.s32.totalorder %s11, 0
    %p115 = por %p113, %p114
    %p116 = scmp.ne.s32.totalorder %s108, %s110
    %p117 = scmp.eq.s32.totalorder %s16, 1
    %p118 = por %p116, %p117
    %p119 = scmp.ne.s32.totalorder %s110, %s111
    %p120 = scmp.eq.s32.totalorder %s16, 0
    %p121 = por %p119, %p120
    %p122 = scmp.ne.s32.totalorder %s110, %s111
    %p123 = scmp.eq.s32.totalorder %s17, 1
    %p124 = por %p122, %p123
    %p126 = scmp.ne.s32.totalorder %s111, %s125
    %p127 = scmp.eq.s32.totalorder %s17, 0
    %p128 = por %p126, %p127
    %s129 = ssub.s32 %s11, %s18
    %p130 = scmp.eq.s32.totalorder %s129, 0
    %s132 = sadd.s32 %s131, 1
    %s133 = scalar_select %p130, %s131, %s132
    %p136 = pneg %p130
    %p137 = scmp.eq.s32.totalorder %s11, 1
    %p138 = por %p136, %p137
    %p139 = scmp.ne.s32.totalorder %s131, %s134
    %p140 = scmp.eq.s32.totalorder %s11, 0
    %p141 = por %p139, %p140
    %p142 = scmp.ne.s32.totalorder %s131, %s134
    %p143 = scmp.eq.s32.totalorder %s16, 1
    %p144 = por %p142, %p143
    %p145 = scmp.ne.s32.totalorder %s134, %s135
    %p146 = scmp.eq.s32.totalorder %s16, 0
    %p147 = por %p145, %p146
    %p148 = scmp.ne.s32.totalorder %s134, %s135
    %p149 = scmp.eq.s32.totalorder %s17, 1
    %p150 = por %p148, %p149
    %p152 = scmp.ne.s32.totalorder %s135, %s151
    %p153 = scmp.eq.s32.totalorder %s17, 0
    %p154 = por %p152, %p153
    %p155 = scmp.le.s32.totalorder 1, %s11
    %p156 = scmp.lt.s32.totalorder %s11, 3
    %p157 = pnand %p155, %p156
    %p158 = pneg %p157
    // Predicated region
    $region9: #{pwconv_cond_forward.6} parent=5 // pred_check
      _
    $region10: #{pwconv_cond_forward.6} parent=5 // pred_check_branch
      %160 = sbr.rel (%p157) target = $region12
    $region11: #{pwconv_cond_forward.6} parent=5 // pred_region
      %s161 = ssub.s32 %s11, 1
      // Predicated region
      $region13: #{pwconv_cond_forward.6} parent=11 // pred_check
        %p162 = pneg %p58
      $region14: #{pwconv_cond_forward.6} parent=11 // pred_check_branch
        %164 = sbr.rel (%p162) target = $region16
      $region15: #{pwconv_cond_forward.6} parent=11 // pred_region
        _
      $region16: #{pwconv_cond_forward.6} parent=11 // pred_fallthru
        _
      // Predicated region
      $region17: #{pwconv_cond_forward.6} parent=11 // pred_check
        %p165 = pneg %p79
      $region18: #{pwconv_cond_forward.6} parent=11 // pred_check_branch
        %167 = sbr.rel (%p165) target = $region20
      $region19: #{pwconv_cond_forward.6} parent=11 // pred_region
        _
      $region20: #{pwconv_cond_forward.6} parent=11 // pred_fallthru
        _
      // Predicated region
      $region21: #{pwconv_cond_forward.6} parent=11 // pred_check
        %p168 = pneg %p100
      $region22: #{pwconv_cond_forward.6} parent=11 // pred_check_branch
        %170 = sbr.rel (%p168) target = $region24
      $region23: #{pwconv_cond_forward.6} parent=11 // pred_region
        _
      $region24: #{pwconv_cond_forward.6} parent=11 // pred_fallthru
        _
      // Predicated region
      $region25: #{pwconv_cond_forward.6} parent=11 // pred_check
        %p171 = pneg %p121
      $region26: #{pwconv_cond_forward.6} parent=11 // pred_check_branch
        %173 = sbr.rel (%p171) target = $region28
      $region27: #{pwconv_cond_forward.6} parent=11 // pred_region
        _
      $region28: #{pwconv_cond_forward.6} parent=11 // pred_fallthru
        _
    $region12: #{pwconv_cond_forward.6} parent=5 // pred_fallthru
      _
    %p174 = scmp.lt.s32.totalorder %s11, 2
    // Predicated region
    $region29: #{pwconv_cond_forward.6} parent=5 // pred_check
      %p175 = pneg %p174
    $region30: #{pwconv_cond_forward.6} parent=5 // pred_check_branch
      %177 = sbr.rel (%p175) target = $region32
    $region31: #{pwconv_cond_forward.6} parent=5 // pred_region
      // Predicated region
      $region33: #{pwconv_cond_forward.6} parent=31 // pred_check
        %p178 = pneg %p31
      $region34: #{pwconv_cond_forward.6} parent=31 // pred_check_branch
        %180 = sbr.rel (%p178) target = $region36
      $region35: #{pwconv_cond_forward.6} parent=31 // pred_region
        %p181 = scmp.lt.s32.totalorder %s11, 1
        %s182 = scalar_select %p181, %s11, 1
        %s183 = smul.addr %s182, 18
        %s184 = smul.addr %s183, 4
        %s185 = scalar_lea.vmem %s0, %s184
      $region36: #{pwconv_cond_forward.6} parent=31 // pred_fallthru
        _
    $region32: #{pwconv_cond_forward.6} parent=5 // pred_fallthru
      _
    %p186 = scmp.le.s32.totalorder 1, %s11
    %p187 = scmp.lt.s32.totalorder %s11, 3
    %p188 = pnand %p186, %p187
    %p189 = pneg %p188
    // Predicated region
    $region37: #{pwconv_cond_forward.6} parent=5 // pred_check
      _
    $region38: #{pwconv_cond_forward.6} parent=5 // pred_check_branch
      %191 = sbr.rel (%p188) target = $region40
    $region39: #{pwconv_cond_forward.6} parent=5 // pred_region
      %s192 = ssub.s32 %s11, 1
      %p193 = scmp.lt.s32.totalorder %s16, 1
      %s194 = scalar_select %p193, %s16, 1
      %s195 = smul.addr %s194, 18
      %s196 = smul.addr %s195, 4
      %s197 = scalar_lea.vmem %s0, %s196
      %p198 = pneg %p37
      %p199 = pneg %p34
      %p200 = pneg %p58
      %p201 = pneg %p55
      %p202 = pneg %p79
      %p203 = pneg %p76
      %p204 = pneg %p100
      %p205 = pneg %p97
      %p206 = pneg %p121
      %p207 = pneg %p118
      %p208 = pneg %p147
      %p209 = pneg %p144
      %p210 = scmp.lt.s32.totalorder %s16, 1
      %s211 = scalar_select %p210, %s16, 1
      %s212 = smul.addr %s211, 50
      %s213 = smul.addr %s212, 8
      %s214 = scalar_lea.vmem %s5, %s213
      %p215 = scmp.lt.s32.totalorder %s16, 1
      %s216 = scalar_select %p215, %s16, 1
      %s217 = smul.addr %s216, 18
      %s218 = smul.addr %s217, 4
      %s219 = scalar_lea.vmem %s0, %s218
      %p220 = scmp.lt.s32.totalorder %s16, 1
      %s221 = scalar_select %p220, %s16, 1
      %s222 = smul.addr %s221, 50
      %s223 = smul.addr %s222, 8
      %s224 = scalar_lea.vmem %s5, %s223
      %v226 = vld [vmem:[%s1] sm:$0xff]
      %v227 = vld [vmem:[%s1 + $0x8] sm:$0xff]
      %v228 = vld [vmem:[%s1 + $0x10] sm:$0xff]
      %v229 = vld [vmem:[%s1 + $0x18] sm:$0xff]
      %v230 = vld [vmem:[%s1 + $0x20] sm:$0xff]
      %v231 = vld [vmem:[%s1 + $0x28] sm:$0xff]
      %v232 = vld [vmem:[%s1 + $0x30] sm:$0xff]
      %v233 = vld [vmem:[%s1 + $0x38] sm:$0xff]
      %v234 = vpack.c.bf16 %v228, %v226
      %v235 = vpack.c.bf16 %v229, %v227
      %v236 = vpack.c.bf16 %v232, %v230
      %v237 = vpack.c.bf16 %v233, %v231
      %v238 = vld [vmem:[%s219] sm:$0xf]
      %v239 = vld [vmem:[%s219 + $0x4] sm:$0xf]
      %v240 = vld [vmem:[%s219 + $0x8] sm:$0xf]
      %v241 = vld [vmem:[%s219 + $0xc] sm:$0xf]
      %v242 = vld [vmem:[%s219 + $0x10] sm:$0xf]
      %v243 = vld [vmem:[%s219 + $0x14] sm:$0xf]
      %v244 = vld [vmem:[%s219 + $0x18] sm:$0xf]
      %v245 = vld [vmem:[%s219 + $0x1c] sm:$0xf]
      %v246 = vld [vmem:[%s219 + $0x20] sm:$0xf]
      %v247 = vld [vmem:[%s219 + $0x24] sm:$0xf]
      %v248 = vld [vmem:[%s219 + $0x28] sm:$0xf]
      %v249 = vld [vmem:[%s219 + $0x2c] sm:$0xf]
      %v250 = vld [vmem:[%s219 + $0x30] sm:$0xf]
      %v251 = vld [vmem:[%s219 + $0x34] sm:$0xf]
      %v252 = vld [vmem:[%s219 + $0x38] sm:$0xf]
      %v253 = vld [vmem:[%s219 + $0x3c] sm:$0xf]
      %v254 = vld [vmem:[%s219 + $0x40] sm:$0xf]
      %v255 = vld [vmem:[%s219 + $0x44] sm:$0xf]
      %v256 = vld [vmem:[%s2] sm:$0xff]
      %v257 = vld [vmem:[%s2 + $0x8] sm:$0xff]
      %v258 = vld [vmem:[%s2 + $0x10] sm:$0xff]
      %v259 = vld [vmem:[%s2 + $0x18] sm:$0xff]
      %261 = vset.pattern.permute.xlu0 0
      %262 = vperm.xlu0 %261, %v256
      %v263 = vpop.permute.xlu0 %262
      %266 = vset.pattern.permute.xlu0 0
      %267 = vperm.xlu0 %266, %v257
      %v268 = vpop.permute.xlu0 %267
      %271 = vset.pattern.permute.xlu0 0
      %272 = vperm.xlu0 %271, %v258
      %v273 = vpop.permute.xlu0 %272
      %276 = vset.pattern.permute.xlu0 0
      %277 = vperm.xlu0 %276, %v259
      %v278 = vpop.permute.xlu0 %277
      %v298 = vunpack.c.l.b16 %v238
      %v299 = vunpack.c.l.b16 %v239
      %v300 = vunpack.c.l.b16 %v240
      %v301 = vunpack.c.l.b16 %v241
      %v302 = vunpack.c.l.b16 %v242
      %v303 = vunpack.c.l.b16 %v243
      %v304 = vunpack.c.l.b16 %v244
      %v305 = vunpack.c.l.b16 %v245
      %v306 = vunpack.c.l.b16 %v246
      %v307 = vunpack.c.l.b16 %v247
      %v308 = vunpack.c.l.b16 %v248
      %v309 = vunpack.c.l.b16 %v249
      %v310 = vunpack.c.l.b16 %v250
      %v311 = vunpack.c.l.b16 %v251
      %v312 = vunpack.c.l.b16 %v252
      %v313 = vunpack.c.l.b16 %v253
      %v314 = vunpack.c.l.b16 %v254
      %v315 = vunpack.c.l.b16 %v255
      %v316 = vpack.c.b16 %v299, %v298
      %v317 = vpack.c.b16 %v301, %v300
      %v318 = vpack.c.b16 %v303, %v302
      %v319 = vpack.c.b16 %v305, %v304
      %v320 = vpack.c.b16 %v307, %v306
      %v321 = vpack.c.b16 %v309, %v308
      %v322 = vpack.c.b16 %v311, %v310
      %v323 = vpack.c.b16 %v313, %v312
      %v324 = vpack.c.b16 %v315, %v314
      %vm334 = vcmask 130048
      %v336 = vsel %vm334, %v235, 0
      %v339 = vsel %vm334, %v237, 0
      %341 = vmatprep.subr.bf16.mxu0 0
      %342 = vmatpush1.bf16.msra.mxu0 %v316
      %343 = vmatprep.subr.bf16.mxu0 0
      %344 = vmatpush1.bf16.msra.mxu0 %v317
      %345 = vmatprep.subr.bf16.mxu0 0
      %346 = vmatpush1.bf16.msra.mxu0 %v318
      %347 = vmatprep.subr.bf16.mxu0 0
      %348 = vmatpush1.bf16.msra.mxu0 %v319
      %349 = vmatprep.subr.bf16.mxu0 0
      %350 = vmatpush1.bf16.msra.mxu0 %v320
      %351 = vmatprep.subr.bf16.mxu0 0
      %352 = vmatpush1.bf16.msra.mxu0 %v321
      %353 = vmatprep.subr.bf16.mxu0 0
      %354 = vmatpush1.bf16.msra.mxu0 %v322
      %355 = vmatprep.subr.bf16.mxu0 0
      %356 = vmatpush1.bf16.msra.mxu0 %v323
      %357 = vmatprep.subr.bf16.mxu0 0
      %358 = vmatpush1.bf16.msra.mxu0 %v324
      %359 = vmatprep.subr.bf16.mxu0 0
      %360 = vmatpush1.bf16.msra.mxu0 0
      %361 = vmatprep.subr.bf16.mxu0 0
      %362 = vmatpush1.bf16.msra.mxu0 0
      %363 = vmatprep.subr.bf16.mxu0 0
      %364 = vmatpush1.bf16.msra.mxu0 0
      %365 = vmatprep.subr.bf16.mxu0 0
      %366 = vmatpush1.bf16.msra.mxu0 0
      %367 = vmatprep.subr.bf16.mxu0 0
      %368 = vmatpush1.bf16.msra.mxu0 0
      %369 = vmatprep.subr.bf16.mxu0 0
      %370 = vmatpush1.bf16.msra.mxu0 0
      %371 = vmatprep.subr.bf16.mxu0 0
      %372 = vmatpush1.bf16.msra.mxu0 0
      %373 = vmatprep.mubr.bf16.mxu0 %v336
      %374 = vmatmul.mubr.bf16.gmra.mrb[0].mxu0 %v234
      %v375 = vpop.f32.mrb[0].mxu0
      %v376 = vadd.f32 %v263, %v375
      %v377 = vpop.f32.mrb[0].mxu0
      %v378 = vpop.f32.mrb[0].mxu0
      %v379 = vadd.f32 %v268, %v378
      %v380 = vpop.f32.mrb[0].mxu0
      %381 = vmatprep.mubr.bf16.mxu0 %v339
      %382 = vmatmul.mubr.bf16.gmra.mrb[0].mxu0 %v236
      %v383 = vpop.f32.mrb[0].mxu0
      %v384 = vadd.f32 %v273, %v383
      %v385 = vpop.f32.mrb[0].mxu0
      %v386 = vpop.f32.mrb[0].mxu0
      %v387 = vadd.f32 %v278, %v386
      %v388 = vpop.f32.mrb[0].mxu0
      %389 = vdwg.mxu0
      %v390 = vmul.f32 %v376, 0.1
      %v391 = vmul.f32 %v379, 0.1
      %v392 = vmul.f32 %v384, 0.1
      %v393 = vmul.f32 %v387, 0.1
      %v394 = vmax.f32 %v376, %v390
      %v395 = vmax.f32 %v379, %v391
      %v396 = vmax.f32 %v384, %v392
      %v397 = vmax.f32 %v387, %v393
      %vm398 = vcmask 31744
      %v399 = vsel %vm398, %v394, 0.0
      %400 = vadd.xlane.f32.xlu0 %v399
      %v401 = vpop.xlane.xlu0 %400
      %v402 = vsel %vm398, %v395, 0.0
      %403 = vadd.xlane.f32.xlu0 %v402
      %v404 = vpop.xlane.xlu0 %403
      %v405 = vsel %vm398, %v396, 0.0
      %406 = vadd.xlane.f32.xlu0 %v405
      %v407 = vpop.xlane.xlu0 %406
      %v408 = vsel %vm398, %v397, 0.0
      %409 = vadd.xlane.f32.xlu0 %v408
      %v410 = vpop.xlane.xlu0 %409
      %v411 = vrcp.pop 4.0
      %v412 = vmul.f32 %v401, %v411
      %v413 = vmul.f32 %v404, %v411
      %v414 = vmul.f32 %v407, %v411
      %v415 = vmul.f32 %v410, %v411
      %v416 = vld [vmem:[%s3] sm:$0xff]
      %v417 = vld [vmem:[%s3 + $0x8] sm:$0xff]
      %v418 = vld [vmem:[%s3 + $0x10] sm:$0xff]
      %v419 = vld [vmem:[%s3 + $0x18] sm:$0xff]
      %v420 = vld [vmem:[%s3 + $0x20] sm:$0xff]
      %v421 = vld [vmem:[%s3 + $0x28] sm:$0xff]
      %v422 = vld [vmem:[%s3 + $0x30] sm:$0xff]
      %v423 = vld [vmem:[%s3 + $0x38] sm:$0xff]
      %v424 = vld [vmem:[%s3 + $0x40] sm:$0xff]
      %v425 = vld [vmem:[%s3 + $0x48] sm:$0xff]
      %v426 = vld [vmem:[%s3 + $0x50] sm:$0xff]
      %v427 = vld [vmem:[%s3 + $0x58] sm:$0xff]
      %v428 = vld [vmem:[%s3 + $0x60] sm:$0xff]
      %v429 = vld [vmem:[%s3 + $0x68] sm:$0xff]
      %v430 = vld [vmem:[%s3 + $0x70] sm:$0xff]
      %v431 = vld [vmem:[%s3 + $0x78] sm:$0xff]
      %v432 = vld [vmem:[%s3 + $0x80] sm:$0xff]
      %v433 = vld [vmem:[%s3 + $0x88] sm:$0xff]
      %v434 = vld [vmem:[%s3 + $0x90] sm:$0xff]
      %v435 = vld [vmem:[%s3 + $0x98] sm:$0xff]
      %v436 = vld [vmem:[%s3 + $0xa0] sm:$0xff]
      %v437 = vld [vmem:[%s3 + $0xa8] sm:$0xff]
      %v438 = vld [vmem:[%s3 + $0xb0] sm:$0xff]
      %v439 = vld [vmem:[%s3 + $0xb8] sm:$0xff]
      %v440 = vld [vmem:[%s3 + $0xc0] sm:$0xff]
      %v441 = vld [vmem:[%s3 + $0xc8] sm:$0xff]
      %v442 = vld [vmem:[%s3 + $0xd0] sm:$0xff]
      %v443 = vld [vmem:[%s3 + $0xd8] sm:$0xff]
      %v444 = vld [vmem:[%s3 + $0xe0] sm:$0xff]
      %v445 = vld [vmem:[%s3 + $0xe8] sm:$0xff]
      %v446 = vld [vmem:[%s3 + $0xf0] sm:$0xff]
      %v447 = vld [vmem:[%s3 + $0xf8] sm:$0xff]
      %v448 = vld [vmem:[%s3 + $0x100] sm:$0xff]
      %v449 = vld [vmem:[%s3 + $0x108] sm:$0xff]
      %v450 = vld [vmem:[%s3 + $0x110] sm:$0xff]
      %v451 = vld [vmem:[%s3 + $0x118] sm:$0xff]
      %v452 = vld [vmem:[%s3 + $0x120] sm:$0xff]
      %v453 = vld [vmem:[%s3 + $0x128] sm:$0xff]
      %v454 = vld [vmem:[%s3 + $0x130] sm:$0xff]
      %v455 = vld [vmem:[%s3 + $0x138] sm:$0xff]
      %v456 = vld [vmem:[%s3 + $0x140] sm:$0xff]
      %v457 = vld [vmem:[%s3 + $0x148] sm:$0xff]
      %v458 = vld [vmem:[%s3 + $0x150] sm:$0xff]
      %v459 = vld [vmem:[%s3 + $0x158] sm:$0xff]
      %v460 = vld [vmem:[%s3 + $0x160] sm:$0xff]
      %v461 = vld [vmem:[%s3 + $0x168] sm:$0xff]
      %v462 = vld [vmem:[%s3 + $0x170] sm:$0xff]
      %v463 = vld [vmem:[%s3 + $0x178] sm:$0xff]
      %v464 = vld [vmem:[%s3 + $0x180] sm:$0xff]
      %v465 = vld [vmem:[%s3 + $0x188] sm:$0xff]
      %v466 = vld [vmem:[%s4] sm:$0xff]
      %v467 = vld [vmem:[%s4 + $0x8] sm:$0xff]
      %v468 = vld [vmem:[%s4 + $0x10] sm:$0xff]
      %v469 = vld [vmem:[%s4 + $0x18] sm:$0xff]
      %v470 = vld [vmem:[%s4 + $0x20] sm:$0xff]
      %v471 = vld [vmem:[%s4 + $0x28] sm:$0xff]
      %v472 = vld [vmem:[%s4 + $0x30] sm:$0xff]
      %v473 = vld [vmem:[%s4 + $0x38] sm:$0xff]
      %v474 = vld [vmem:[%s4 + $0x40] sm:$0xff]
      %v475 = vld [vmem:[%s4 + $0x48] sm:$0xff]
      %v476 = vld [vmem:[%s4 + $0x50] sm:$0xff]
      %v477 = vld [vmem:[%s4 + $0x58] sm:$0xff]
      %v478 = vld [vmem:[%s4 + $0x60] sm:$0xff]
      %v479 = vld [vmem:[%s4 + $0x68] sm:$0xff]
      %v480 = vld [vmem:[%s4 + $0x70] sm:$0xff]
      %v481 = vld [vmem:[%s4 + $0x78] sm:$0xff]
      %v482 = vld [vmem:[%s4 + $0x80] sm:$0xff]
      %v483 = vld [vmem:[%s4 + $0x88] sm:$0xff]
      %v484 = vld [vmem:[%s4 + $0x90] sm:$0xff]
      %v485 = vld [vmem:[%s4 + $0x98] sm:$0xff]
      %v486 = vld [vmem:[%s4 + $0xa0] sm:$0xff]
      %v487 = vld [vmem:[%s4 + $0xa8] sm:$0xff]
      %v488 = vld [vmem:[%s4 + $0xb0] sm:$0xff]
      %v489 = vld [vmem:[%s4 + $0xb8] sm:$0xff]
      %v490 = vld [vmem:[%s4 + $0xc0] sm:$0xff]
      %v491 = vld [vmem:[%s4 + $0xc8] sm:$0xff]
      %v492 = vld [vmem:[%s4 + $0xd0] sm:$0xff]
      %v493 = vld [vmem:[%s4 + $0xd8] sm:$0xff]
      %v494 = vld [vmem:[%s4 + $0xe0] sm:$0xff]
      %v495 = vld [vmem:[%s4 + $0xe8] sm:$0xff]
      %v496 = vld [vmem:[%s4 + $0xf0] sm:$0xff]
      %v497 = vld [vmem:[%s4 + $0xf8] sm:$0xff]
      %v498 = vld [vmem:[%s4 + $0x100] sm:$0xff]
      %v499 = vld [vmem:[%s4 + $0x108] sm:$0xff]
      %v500 = vld [vmem:[%s4 + $0x110] sm:$0xff]
      %v501 = vld [vmem:[%s4 + $0x118] sm:$0xff]
      %v502 = vld [vmem:[%s4 + $0x120] sm:$0xff]
      %v503 = vld [vmem:[%s4 + $0x128] sm:$0xff]
      %v504 = vld [vmem:[%s4 + $0x130] sm:$0xff]
      %v505 = vld [vmem:[%s4 + $0x138] sm:$0xff]
      %v506 = vld [vmem:[%s4 + $0x140] sm:$0xff]
      %v507 = vld [vmem:[%s4 + $0x148] sm:$0xff]
      %v508 = vld [vmem:[%s4 + $0x150] sm:$0xff]
      %v509 = vld [vmem:[%s4 + $0x158] sm:$0xff]
      %v510 = vld [vmem:[%s4 + $0x160] sm:$0xff]
      %v511 = vld [vmem:[%s4 + $0x168] sm:$0xff]
      %v512 = vld [vmem:[%s4 + $0x170] sm:$0xff]
      %v513 = vld [vmem:[%s4 + $0x178] sm:$0xff]
      %v514 = vld [vmem:[%s4 + $0x180] sm:$0xff]
      %v515 = vld [vmem:[%s4 + $0x188] sm:$0xff]
      %vm516 = vcmask 261120
      %v518 = vsel %vm516, %v416, 0
      %v521 = vsel %vm516, %v417, 0
      %v524 = vsel %vm516, %v418, 0
      %v527 = vsel %vm516, %v419, 0
      %v530 = vsel %vm516, %v420, 0
      %v533 = vsel %vm516, %v421, 0
      %v536 = vsel %vm516, %v422, 0
      %v539 = vsel %vm516, %v423, 0
      %v542 = vsel %vm516, %v424, 0
      %v545 = vsel %vm516, %v425, 0
      %v548 = vsel %vm516, %v426, 0
      %v551 = vsel %vm516, %v427, 0
      %v554 = vsel %vm516, %v428, 0
      %v557 = vsel %vm516, %v429, 0
      %v560 = vsel %vm516, %v430, 0
      %v563 = vsel %vm516, %v431, 0
      %v566 = vsel %vm516, %v432, 0
      %v569 = vsel %vm516, %v433, 0
      %v572 = vsel %vm516, %v434, 0
      %v575 = vsel %vm516, %v435, 0
      %v578 = vsel %vm516, %v436, 0
      %v581 = vsel %vm516, %v437, 0
      %v584 = vsel %vm516, %v438, 0
      %v587 = vsel %vm516, %v439, 0
      %v590 = vsel %vm516, %v440, 0
      %v593 = vsel %vm516, %v441, 0
      %v596 = vsel %vm516, %v442, 0
      %v599 = vsel %vm516, %v443, 0
      %v602 = vsel %vm516, %v444, 0
      %v605 = vsel %vm516, %v445, 0
      %v608 = vsel %vm516, %v446, 0
      %v611 = vsel %vm516, %v447, 0
      %v614 = vsel %vm516, %v448, 0
      %v617 = vsel %vm516, %v449, 0
      %v620 = vsel %vm516, %v450, 0
      %v623 = vsel %vm516, %v451, 0
      %v626 = vsel %vm516, %v452, 0
      %v629 = vsel %vm516, %v453, 0
      %v632 = vsel %vm516, %v454, 0
      %v635 = vsel %vm516, %v455, 0
      %v638 = vsel %vm516, %v456, 0
      %v641 = vsel %vm516, %v457, 0
      %v644 = vsel %vm516, %v458, 0
      %v647 = vsel %vm516, %v459, 0
      %v650 = vsel %vm516, %v460, 0
      %v653 = vsel %vm516, %v461, 0
      %v656 = vsel %vm516, %v462, 0
      %v659 = vsel %vm516, %v463, 0
      %v662 = vsel %vm516, %v464, 0
      %v665 = vsel %vm516, %v465, 0
      %667 = vmatprep.subr.mxu0 0.0
      %668 = vmatpush1.msra.mxu0 %v412
      %669 = vmatprep.subr.mxu0 0.0
      %670 = vmatpush1.msra.mxu0 %v413
      %671 = vmatprep.subr.mxu0 0.0
      %672 = vmatpush1.msra.mxu0 %v414
      %673 = vmatprep.subr.mxu0 0.0
      %674 = vmatpush1.msra.mxu0 %v415
      %675 = vmatprep.subr.mxu0 0.0
      %676 = vmatpush1.msra.mxu0 0.0
      %677 = vmatprep.subr.mxu0 0.0
      %678 = vmatpush1.msra.mxu0 0.0
      %679 = vmatprep.subr.mxu0 0.0
      %680 = vmatpush1.msra.mxu0 0.0
      %681 = vmatprep.subr.mxu0 0.0
      %682 = vmatpush1.msra.mxu0 0.0
      %683 = vmatprep.subr.mxu0 0.0
      %684 = vmatpush1.msra.mxu0 0.0
      %685 = vmatprep.subr.mxu0 0.0
      %686 = vmatpush1.msra.mxu0 0.0
      %687 = vmatprep.subr.mxu0 0.0
      %688 = vmatpush1.msra.mxu0 0.0
      %689 = vmatprep.subr.mxu0 0.0
      %690 = vmatpush1.msra.mxu0 0.0
      %691 = vmatprep.subr.mxu0 0.0
      %692 = vmatpush1.msra.mxu0 0.0
      %693 = vmatprep.subr.mxu0 0.0
      %694 = vmatpush1.msra.mxu0 0.0
      %695 = vmatprep.subr.mxu0 0.0
      %696 = vmatpush1.msra.mxu0 0.0
      %697 = vmatprep.subr.mxu0 0.0
      %698 = vmatpush1.msra.mxu0 0.0
      %699 = vmatprep.subr.mxu0 0.0
      %700 = vmatpush1.msra.mxu0 0.0
      %701 = vmatprep.subr.mxu0 0.0
      %702 = vmatpush1.msra.mxu0 0.0
      %703 = vmatprep.subr.mxu0 0.0
      %704 = vmatpush1.msra.mxu0 0.0
      %705 = vmatprep.subr.mxu0 0.0
      %706 = vmatpush1.msra.mxu0 0.0
      %707 = vmatprep.subr.mxu0 0.0
      %708 = vmatpush1.msra.mxu0 0.0
      %709 = vmatprep.subr.mxu0 0.0
      %710 = vmatpush1.msra.mxu0 0.0
      %711 = vmatprep.subr.mxu0 0.0
      %712 = vmatpush1.msra.mxu0 0.0
      %713 = vmatprep.subr.mxu0 0.0
      %714 = vmatpush1.msra.mxu0 0.0
      %715 = vmatprep.subr.mxu0 0.0
      %716 = vmatpush1.msra.mxu0 0.0
      %717 = vmatprep.subr.mxu0 0.0
      %718 = vmatpush1.msra.mxu0 0.0
      %719 = vmatprep.subr.mxu0 0.0
      %720 = vmatpush1.msra.mxu0 0.0
      %721 = vmatprep.subr.mxu0 0.0
      %722 = vmatpush1.msra.mxu0 0.0
      %723 = vmatprep.subr.mxu0 0.0
      %724 = vmatpush1.msra.mxu0 0.0
      %725 = vmatprep.subr.mxu0 0.0
      %726 = vmatpush1.msra.mxu0 0.0
      %727 = vmatprep.subr.mxu0 0.0
      %728 = vmatpush1.msra.mxu0 0.0
      %729 = vmatprep.subr.mxu0 0.0
      %730 = vmatpush1.msra.mxu0 0.0
      %731 = vmatprep.mubr.f32.mxu0 0.0
      %732 = vmatmul.mubr.f32.gmra.mrb[0].mxu0 %v518
      %v733 = vpop.f32.mrb[0].mxu0
      %v734 = vadd.f32 %v466, %v733
      %v735 = vpop.f32.mrb[0].mxu0
      %736 = vmatprep.mubr.f32.mxu0 0.0
      %737 = vmatmul.mubr.f32.gmra.mrb[0].mxu0 %v521
      %v738 = vpop.f32.mrb[0].mxu0
      %v739 = vadd.f32 %v467, %v738
      %v740 = vpop.f32.mrb[0].mxu0
      %741 = vmatprep.mubr.f32.mxu0 0.0
      %742 = vmatmul.mubr.f32.gmra.mrb[0].mxu0 %v524
      %v743 = vpop.f32.mrb[0].mxu0
      %v744 = vadd.f32 %v468, %v743
      %v745 = vpop.f32.mrb[0].mxu0
      %746 = vmatprep.mubr.f32.mxu0 0.0
      %747 = vmatmul.mubr.f32.gmra.mrb[0].mxu0 %v527
      %v748 = vpop.f32.mrb[0].mxu0
      %v749 = vadd.f32 %v469, %v748
      %v750 = vpop.f32.mrb[0].mxu0
      %751 = vmatprep.mubr.f32.mxu0 0.0
      %752 = vmatmul.mubr.f32.gmra.mrb[0].mxu0 %v530
      %v753 = vpop.f32.mrb[0].mxu0
      %v754 = vadd.f32 %v470, %v753
      %v755 = vpop.f32.mrb[0].mxu0
      %756 = vmatprep.mubr.f32.mxu0 0.0
      %757 = vmatmul.mubr.f32.gmra.mrb[0].mxu0 %v533
      %v758 = vpop.f32.mrb[0].mxu0
      %v759 = vadd.f32 %v471, %v758
      %v760 = vpop.f32.mrb[0].mxu0
      %761 = vmatprep.mubr.f32.mxu0 0.0
      %762 = vmatmul.mubr.f32.gmra.mrb[0].mxu0 %v536
      %v763 = vpop.f32.mrb[0].mxu0
      %v764 = vadd.f32 %v472, %v763
      %v765 = vpop.f32.mrb[0].mxu0
      %766 = vmatprep.mubr.f32.mxu0 0.0
      %767 = vmatmul.mubr.f32.gmra.mrb[0].mxu0 %v539
      %v768 = vpop.f32.mrb[0].mxu0
      %v769 = vadd.f32 %v473, %v768
      %v770 = vpop.f32.mrb[0].mxu0
      %771 = vmatprep.mubr.f32.mxu0 0.0
      %772 = vmatmul.mubr.f32.gmra.mrb[0].mxu0 %v542
      %v773 = vpop.f32.mrb[0].mxu0
      %v774 = vadd.f32 %v474, %v773
      %v775 = vpop.f32.mrb[0].mxu0
      %776 = vmatprep.mubr.f32.mxu0 0.0
      %777 = vmatmul.mubr.f32.gmra.mrb[0].mxu0 %v545
      %v778 = vpop.f32.mrb[0].mxu0
      %v779 = vadd.f32 %v475, %v778
      %v780 = vpop.f32.mrb[0].mxu0
      %781 = vmatprep.mubr.f32.mxu0 0.0
      %782 = vmatmul.mubr.f32.gmra.mrb[0].mxu0 %v548
      %v783 = vpop.f32.mrb[0].mxu0
      %v784 = vadd.f32 %v476, %v783
      %v785 = vpop.f32.mrb[0].mxu0
      %786 = vmatprep.mubr.f32.mxu0 0.0
      %787 = vmatmul.mubr.f32.gmra.mrb[0].mxu0 %v551
      %v788 = vpop.f32.mrb[0].mxu0
      %v789 = vadd.f32 %v477, %v788
      %v790 = vpop.f32.mrb[0].mxu0
      %791 = vmatprep.mubr.f32.mxu0 0.0
      %792 = vmatmul.mubr.f32.gmra.mrb[0].mxu0 %v554
      %v793 = vpop.f32.mrb[0].mxu0
      %v794 = vadd.f32 %v478, %v793
      %v795 = vpop.f32.mrb[0].mxu0
      %796 = vmatprep.mubr.f32.mxu0 0.0
      %797 = vmatmul.mubr.f32.gmra.mrb[0].mxu0 %v557
      %v798 = vpop.f32.mrb[0].mxu0
      %v799 = vadd.f32 %v479, %v798
      %v800 = vpop.f32.mrb[0].mxu0
      %801 = vmatprep.mubr.f32.mxu0 0.0
      %802 = vmatmul.mubr.f32.gmra.mrb[0].mxu0 %v560
      %v803 = vpop.f32.mrb[0].mxu0
      %v804 = vadd.f32 %v480, %v803
      %v805 = vpop.f32.mrb[0].mxu0
      %806 = vmatprep.mubr.f32.mxu0 0.0
      %807 = vmatmul.mubr.f32.gmra.mrb[0].mxu0 %v563
      %v808 = vpop.f32.mrb[0].mxu0
      %v809 = vadd.f32 %v481, %v808
      %v810 = vpop.f32.mrb[0].mxu0
      %811 = vmatprep.mubr.f32.mxu0 0.0
      %812 = vmatmul.mubr.f32.gmra.mrb[0].mxu0 %v566
      %v813 = vpop.f32.mrb[0].mxu0
      %v814 = vadd.f32 %v482, %v813
      %v815 = vpop.f32.mrb[0].mxu0
      %816 = vmatprep.mubr.f32.mxu0 0.0
      %817 = vmatmul.mubr.f32.gmra.mrb[0].mxu0 %v569
      %v818 = vpop.f32.mrb[0].mxu0
      %v819 = vadd.f32 %v483, %v818
      %v820 = vpop.f32.mrb[0].mxu0
      %821 = vmatprep.mubr.f32.mxu0 0.0
      %822 = vmatmul.mubr.f32.gmra.mrb[0].mxu0 %v572
      %v823 = vpop.f32.mrb[0].mxu0
      %v824 = vadd.f32 %v484, %v823
      %v825 = vpop.f32.mrb[0].mxu0
      %826 = vmatprep.mubr.f32.mxu0 0.0
      %827 = vmatmul.mubr.f32.gmra.mrb[0].mxu0 %v575
      %v828 = vpop.f32.mrb[0].mxu0
      %v829 = vadd.f32 %v485, %v828
      %v830 = vpop.f32.mrb[0].mxu0
      %831 = vmatprep.mubr.f32.mxu0 0.0
      %832 = vmatmul.mubr.f32.gmra.mrb[0].mxu0 %v578
      %v833 = vpop.f32.mrb[0].mxu0
      %v834 = vadd.f32 %v486, %v833
      %v835 = vpop.f32.mrb[0].mxu0
      %836 = vmatprep.mubr.f32.mxu0 0.0
      %837 = vmatmul.mubr.f32.gmra.mrb[0].mxu0 %v581
      %v838 = vpop.f32.mrb[0].mxu0
      %v839 = vadd.f32 %v487, %v838
      %v840 = vpop.f32.mrb[0].mxu0
      %841 = vmatprep.mubr.f32.mxu0 0.0
      %842 = vmatmul.mubr.f32.gmra.mrb[0].mxu0 %v584
      %v843 = vpop.f32.mrb[0].mxu0
      %v844 = vadd.f32 %v488, %v843
      %v845 = vpop.f32.mrb[0].mxu0
      %846 = vmatprep.mubr.f32.mxu0 0.0
      %847 = vmatmul.mubr.f32.gmra.mrb[0].mxu0 %v587
      %v848 = vpop.f32.mrb[0].mxu0
      %v849 = vadd.f32 %v489, %v848
      %v850 = vpop.f32.mrb[0].mxu0
      %851 = vmatprep.mubr.f32.mxu0 0.0
      %852 = vmatmul.mubr.f32.gmra.mrb[0].mxu0 %v590
      %v853 = vpop.f32.mrb[0].mxu0
      %v854 = vadd.f32 %v490, %v853
      %v855 = vpop.f32.mrb[0].mxu0
      %856 = vmatprep.mubr.f32.mxu0 0.0
      %857 = vmatmul.mubr.f32.gmra.mrb[0].mxu0 %v593
      %v858 = vpop.f32.mrb[0].mxu0
      %v859 = vadd.f32 %v491, %v858
      %v860 = vpop.f32.mrb[0].mxu0
      %861 = vmatprep.mubr.f32.mxu0 0.0
      %862 = vmatmul.mubr.f32.gmra.mrb[0].mxu0 %v596
      %v863 = vpop.f32.mrb[0].mxu0
      %v864 = vadd.f32 %v492, %v863
      %v865 = vpop.f32.mrb[0].mxu0
      %866 = vmatprep.mubr.f32.mxu0 0.0
      %867 = vmatmul.mubr.f32.gmra.mrb[0].mxu0 %v599
      %v868 = vpop.f32.mrb[0].mxu0
      %v869 = vadd.f32 %v493, %v868
      %v870 = vpop.f32.mrb[0].mxu0
      %871 = vmatprep.mubr.f32.mxu0 0.0
      %872 = vmatmul.mubr.f32.gmra.mrb[0].mxu0 %v602
      %v873 = vpop.f32.mrb[0].mxu0
      %v874 = vadd.f32 %v494, %v873
      %v875 = vpop.f32.mrb[0].mxu0
      %876 = vmatprep.mubr.f32.mxu0 0.0
      %877 = vmatmul.mubr.f32.gmra.mrb[0].mxu0 %v605
      %v878 = vpop.f32.mrb[0].mxu0
      %v879 = vadd.f32 %v495, %v878
      %v880 = vpop.f32.mrb[0].mxu0
      %881 = vmatprep.mubr.f32.mxu0 0.0
      %882 = vmatmul.mubr.f32.gmra.mrb[0].mxu0 %v608
      %v883 = vpop.f32.mrb[0].mxu0
      %v884 = vadd.f32 %v496, %v883
      %v885 = vpop.f32.mrb[0].mxu0
      %886 = vmatprep.mubr.f32.mxu0 0.0
      %887 = vmatmul.mubr.f32.gmra.mrb[0].mxu0 %v611
      %v888 = vpop.f32.mrb[0].mxu0
      %v889 = vadd.f32 %v497, %v888
      %v890 = vpop.f32.mrb[0].mxu0
      %891 = vmatprep.mubr.f32.mxu0 0.0
      %892 = vmatmul.mubr.f32.gmra.mrb[0].mxu0 %v614
      %v893 = vpop.f32.mrb[0].mxu0
      %v894 = vadd.f32 %v498, %v893
      %v895 = vpop.f32.mrb[0].mxu0
      %896 = vmatprep.mubr.f32.mxu0 0.0
      %897 = vmatmul.mubr.f32.gmra.mrb[0].mxu0 %v617
      %v898 = vpop.f32.mrb[0].mxu0
      %v899 = vadd.f32 %v499, %v898
      %v900 = vpop.f32.mrb[0].mxu0
      %901 = vmatprep.mubr.f32.mxu0 0.0
      %902 = vmatmul.mubr.f32.gmra.mrb[0].mxu0 %v620
      %v903 = vpop.f32.mrb[0].mxu0
      %v904 = vadd.f32 %v500, %v903
      %v905 = vpop.f32.mrb[0].mxu0
      %906 = vmatprep.mubr.f32.mxu0 0.0
      %907 = vmatmul.mubr.f32.gmra.mrb[0].mxu0 %v623
      %v908 = vpop.f32.mrb[0].mxu0
      %v909 = vadd.f32 %v501, %v908
      %v910 = vpop.f32.mrb[0].mxu0
      %911 = vmatprep.mubr.f32.mxu0 0.0
      %912 = vmatmul.mubr.f32.gmra.mrb[0].mxu0 %v626
      %v913 = vpop.f32.mrb[0].mxu0
      %v914 = vadd.f32 %v502, %v913
      %v915 = vpop.f32.mrb[0].mxu0
      %916 = vmatprep.mubr.f32.mxu0 0.0
      %917 = vmatmul.mubr.f32.gmra.mrb[0].mxu0 %v629
      %v918 = vpop.f32.mrb[0].mxu0
      %v919 = vadd.f32 %v503, %v918
      %v920 = vpop.f32.mrb[0].mxu0
      %921 = vmatprep.mubr.f32.mxu0 0.0
      %922 = vmatmul.mubr.f32.gmra.mrb[0].mxu0 %v632
      %v923 = vpop.f32.mrb[0].mxu0
      %v924 = vadd.f32 %v504, %v923
      %v925 = vpop.f32.mrb[0].mxu0
      %926 = vmatprep.mubr.f32.mxu0 0.0
      %927 = vmatmul.mubr.f32.gmra.mrb[0].mxu0 %v635
      %v928 = vpop.f32.mrb[0].mxu0
      %v929 = vadd.f32 %v505, %v928
      %v930 = vpop.f32.mrb[0].mxu0
      %931 = vmatprep.mubr.f32.mxu0 0.0
      %932 = vmatmul.mubr.f32.gmra.mrb[0].mxu0 %v638
      %v933 = vpop.f32.mrb[0].mxu0
      %v934 = vadd.f32 %v506, %v933
      %v935 = vpop.f32.mrb[0].mxu0
      %936 = vmatprep.mubr.f32.mxu0 0.0
      %937 = vmatmul.mubr.f32.gmra.mrb[0].mxu0 %v641
      %v938 = vpop.f32.mrb[0].mxu0
      %v939 = vadd.f32 %v507, %v938
      %v940 = vpop.f32.mrb[0].mxu0
      %941 = vmatprep.mubr.f32.mxu0 0.0
      %942 = vmatmul.mubr.f32.gmra.mrb[0].mxu0 %v644
      %v943 = vpop.f32.mrb[0].mxu0
      %v944 = vadd.f32 %v508, %v943
      %v945 = vpop.f32.mrb[0].mxu0
      %946 = vmatprep.mubr.f32.mxu0 0.0
      %947 = vmatmul.mubr.f32.gmra.mrb[0].mxu0 %v647
      %v948 = vpop.f32.mrb[0].mxu0
      %v949 = vadd.f32 %v509, %v948
      %v950 = vpop.f32.mrb[0].mxu0
      %951 = vmatprep.mubr.f32.mxu0 0.0
      %952 = vmatmul.mubr.f32.gmra.mrb[0].mxu0 %v650
      %v953 = vpop.f32.mrb[0].mxu0
      %v954 = vadd.f32 %v510, %v953
      %v955 = vpop.f32.mrb[0].mxu0
      %956 = vmatprep.mubr.f32.mxu0 0.0
      %957 = vmatmul.mubr.f32.gmra.mrb[0].mxu0 %v653
      %v958 = vpop.f32.mrb[0].mxu0
      %v959 = vadd.f32 %v511, %v958
      %v960 = vpop.f32.mrb[0].mxu0
      %961 = vmatprep.mubr.f32.mxu0 0.0
      %962 = vmatmul.mubr.f32.gmra.mrb[0].mxu0 %v656
      %v963 = vpop.f32.mrb[0].mxu0
      %v964 = vadd.f32 %v512, %v963
      %v965 = vpop.f32.mrb[0].mxu0
      %966 = vmatprep.mubr.f32.mxu0 0.0
      %967 = vmatmul.mubr.f32.gmra.mrb[0].mxu0 %v659
      %v968 = vpop.f32.mrb[0].mxu0
      %v969 = vadd.f32 %v513, %v968
      %v970 = vpop.f32.mrb[0].mxu0
      %971 = vmatprep.mubr.f32.mxu0 0.0
      %972 = vmatmul.mubr.f32.gmra.mrb[0].mxu0 %v662
      %v973 = vpop.f32.mrb[0].mxu0
      %v974 = vadd.f32 %v514, %v973
      %v975 = vpop.f32.mrb[0].mxu0
      %976 = vmatprep.mubr.f32.mxu0 0.0
      %977 = vmatmul.mubr.f32.gmra.mrb[0].mxu0 %v665
      %v978 = vpop.f32.mrb[0].mxu0
      %v979 = vadd.f32 %v515, %v978
      %v980 = vpop.f32.mrb[0].mxu0
      %981 = vdwg.mxu0
      %vm982 = vcmask 7168
      %983 = vst.msk [vmem:[%s224] sm:$0xff] %vm982, %v734
      %984 = vst.msk [vmem:[%s224 + $0x8] sm:$0xff] %vm982, %v739
      %985 = vst.msk [vmem:[%s224 + $0x10] sm:$0xff] %vm982, %v744
      %986 = vst.msk [vmem:[%s224 + $0x18] sm:$0xff] %vm982, %v749
      %987 = vst.msk [vmem:[%s224 + $0x20] sm:$0xff] %vm982, %v754
      %988 = vst.msk [vmem:[%s224 + $0x28] sm:$0xff] %vm982, %v759
      %989 = vst.msk [vmem:[%s224 + $0x30] sm:$0xff] %vm982, %v764
      %990 = vst.msk [vmem:[%s224 + $0x38] sm:$0xff] %vm982, %v769
      %991 = vst.msk [vmem:[%s224 + $0x40] sm:$0xff] %vm982, %v774
      %992 = vst.msk [vmem:[%s224 + $0x48] sm:$0xff] %vm982, %v779
      %993 = vst.msk [vmem:[%s224 + $0x50] sm:$0xff] %vm982, %v784
      %994 = vst.msk [vmem:[%s224 + $0x58] sm:$0xff] %vm982, %v789
      %995 = vst.msk [vmem:[%s224 + $0x60] sm:$0xff] %vm982, %v794
      %996 = vst.msk [vmem:[%s224 + $0x68] sm:$0xff] %vm982, %v799
      %997 = vst.msk [vmem:[%s224 + $0x70] sm:$0xff] %vm982, %v804
      %998 = vst.msk [vmem:[%s224 + $0x78] sm:$0xff] %vm982, %v809
      %999 = vst.msk [vmem:[%s224 + $0x80] sm:$0xff] %vm982, %v814
      %1000 = vst.msk [vmem:[%s224 + $0x88] sm:$0xff] %vm982, %v819
      %1001 = vst.msk [vmem:[%s224 + $0x90] sm:$0xff] %vm982, %v824
      %1002 = vst.msk [vmem:[%s224 + $0x98] sm:$0xff] %vm982, %v829
      %1003 = vst.msk [vmem:[%s224 + $0xa0] sm:$0xff] %vm982, %v834
      %1004 = vst.msk [vmem:[%s224 + $0xa8] sm:$0xff] %vm982, %v839
      %1005 = vst.msk [vmem:[%s224 + $0xb0] sm:$0xff] %vm982, %v844
      %1006 = vst.msk [vmem:[%s224 + $0xb8] sm:$0xff] %vm982, %v849
      %1007 = vst.msk [vmem:[%s224 + $0xc0] sm:$0xff] %vm982, %v854
      %1008 = vst.msk [vmem:[%s224 + $0xc8] sm:$0xff] %vm982, %v859
      %1009 = vst.msk [vmem:[%s224 + $0xd0] sm:$0xff] %vm982, %v864
      %1010 = vst.msk [vmem:[%s224 + $0xd8] sm:$0xff] %vm982, %v869
      %1011 = vst.msk [vmem:[%s224 + $0xe0] sm:$0xff] %vm982, %v874
      %1012 = vst.msk [vmem:[%s224 + $0xe8] sm:$0xff] %vm982, %v879
      %1013 = vst.msk [vmem:[%s224 + $0xf0] sm:$0xff] %vm982, %v884
      %1014 = vst.msk [vmem:[%s224 + $0xf8] sm:$0xff] %vm982, %v889
      %1015 = vst.msk [vmem:[%s224 + $0x100] sm:$0xff] %vm982, %v894
      %1016 = vst.msk [vmem:[%s224 + $0x108] sm:$0xff] %vm982, %v899
      %1017 = vst.msk [vmem:[%s224 + $0x110] sm:$0xff] %vm982, %v904
      %1018 = vst.msk [vmem:[%s224 + $0x118] sm:$0xff] %vm982, %v909
      %1019 = vst.msk [vmem:[%s224 + $0x120] sm:$0xff] %vm982, %v914
      %1020 = vst.msk [vmem:[%s224 + $0x128] sm:$0xff] %vm982, %v919
      %1021 = vst.msk [vmem:[%s224 + $0x130] sm:$0xff] %vm982, %v924
      %1022 = vst.msk [vmem:[%s224 + $0x138] sm:$0xff] %vm982, %v929
      %1023 = vst.msk [vmem:[%s224 + $0x140] sm:$0xff] %vm982, %v934
      %1024 = vst.msk [vmem:[%s224 + $0x148] sm:$0xff] %vm982, %v939
      %1025 = vst.msk [vmem:[%s224 + $0x150] sm:$0xff] %vm982, %v944
      %1026 = vst.msk [vmem:[%s224 + $0x158] sm:$0xff] %vm982, %v949
      %1027 = vst.msk [vmem:[%s224 + $0x160] sm:$0xff] %vm982, %v954
      %1028 = vst.msk [vmem:[%s224 + $0x168] sm:$0xff] %vm982, %v959
      %1029 = vst.msk [vmem:[%s224 + $0x170] sm:$0xff] %vm982, %v964
      %1030 = vst.msk [vmem:[%s224 + $0x178] sm:$0xff] %vm982, %v969
      %1031 = vst.msk [vmem:[%s224 + $0x180] sm:$0xff] %vm982, %v974
      %1032 = vst.msk [vmem:[%s224 + $0x188] sm:$0xff] %vm982, %v979
      %p1033 = scmp.lt.s32.totalorder %s16, 1
      %s1034 = scalar_select %p1033, %s16, 1
      %s1035 = smul.addr %s1034, 50
      %s1036 = smul.addr %s1035, 8
      %s1037 = scalar_lea.vmem %s5, %s1036
      // Predicated region
      $region41: #{pwconv_cond_forward.6} parent=39 // pred_check
        %p1038 = pneg %p144
      $region42: #{pwconv_cond_forward.6} parent=39 // pred_check_branch
        %1040 = sbr.rel (%p1038) target = $region44
      $region43: #{pwconv_cond_forward.6} parent=39 // pred_region
        _
      $region44: #{pwconv_cond_forward.6} parent=39 // pred_fallthru
        _
    $region40: #{pwconv_cond_forward.6} parent=5 // pred_fallthru
      _
    %p1041 = scmp.le.s32.totalorder 2, %s11
    // Predicated region
    $region45: #{pwconv_cond_forward.6} parent=5 // pred_check
      %p1042 = pneg %p1041
    $region46: #{pwconv_cond_forward.6} parent=5 // pred_check_branch
      %1044 = sbr.rel (%p1042) target = $region48
    $region47: #{pwconv_cond_forward.6} parent=5 // pred_region
      %s1045 = ssub.s32 %s11, 2
      // Predicated region
      $region49: #{pwconv_cond_forward.6} parent=47 // pred_check
        %p1046 = pneg %p150
      $region50: #{pwconv_cond_forward.6} parent=47 // pred_check_branch
        %1048 = sbr.rel (%p1046) target = $region52
      $region51: #{pwconv_cond_forward.6} parent=47 // pred_region
        %p1049 = scmp.lt.s32.totalorder %s17, 1
        %s1050 = scalar_select %p1049, %s17, 1
        %s1051 = smul.addr %s1050, 50
        %s1052 = smul.addr %s1051, 8
        %s1053 = scalar_lea.vmem %s5, %s1052
      $region52: #{pwconv_cond_forward.6} parent=47 // pred_fallthru
        _
    $region48: #{pwconv_cond_forward.6} parent=5 // pred_fallthru
      _
  $region6: #{pwconv_cond_forward.6} parent=0 // loop_footer
    %s15 = sadd.s32 1, %s11
  $region7: #{pwconv_cond_forward.6} parent=0 // loop_footer_branch
    %10 = sbr.rel target = $region3
  $region8: #{pwconv_cond_forward.6} parent=0 // loop_exit
    _

// kernel: pwconv_cond_forward.7
$region0: #{pwconv_cond_forward.7}
  #allocation0 [shape = 'u32[]', space=smem, size = 0x4, offset = 0x4, fixed_abs, tag = 'smem constant byte address 0x4 - core index']
  #allocation1 [shape = 'u32[144,128]{1,0:T(1,128)}', space=vmem, size = 0x12000, scoped, tag = 'internal scratch']
  %s0 = inlined_call_operand.vmem [shape: f32[2,3,256], index: 0, kind: input, shape index: {}]
  %s1 = inlined_call_operand.vmem [shape: f32[5,64,64], index: 1, kind: input, shape index: {}]
  %s2 = inlined_call_operand.vmem [shape: f32[200,1], index: 2, kind: input, shape index: {}]
  %s3 = inlined_call_operand.vmem [shape: f32[2,400,1], index: 3, kind: input, shape index: {}]
  %s4 = inlined_call_operand.vmem [shape: f32[2,3,256], index: 4, kind: output, shape index: {}]
  %s5 = sld [smem:[#allocation0]]
  $region49: #{pwconv_cond_forward.7} parent=0
    _
  %s7 = ssub.s32 1, %s5
  %s8 = scalar_select 0, %s7, %s5
  loop: start=0, step=1, limit=4
  $region2: #{pwconv_cond_forward.7} parent=0 // loop_pre_header
    _
  $region3: #{pwconv_cond_forward.7} parent=0 // loop_header
    %s10 = sphi 0, %s14
    %p11 = scmp.ge.s32.totalorder %s10, 4
    %s17 = sphi 0, %s29
    %s18 = sphi 0, %s25
    %s19 = sphi 0, %s17
    %s20 = sphi 0, %s18
    %s21 = sphi 0, %s19
    %s22 = sphi 0, %s20
    %s34 = sphi 0, %s36
    %s37 = sphi 0, %s34
    %s38 = sphi 0, %s37
    %s54 = sphi 0, %s38
    %s58 = sphi 0, %s58
    %s60 = sphi 0, %s58
    %s61 = sphi 0, %s60
    %s75 = sphi 0, %s61
    %s79 = sphi 0, %s79
    %s81 = sphi 0, %s79
    %s82 = sphi 0, %s81
    %s96 = sphi 0, %s82
    %s102 = sphi 0, %s104
    %s105 = sphi 0, %s102
    %s106 = sphi 0, %s105
    %s122 = sphi 0, %s106
    %s130 = sphi 0, %s132
    %s133 = sphi 0, %s130
    %s134 = sphi 0, %s133
    %s150 = sphi 0, %s134
  $region4: #{pwconv_cond_forward.7} parent=0 // loop_header_branch
    %13 = sbr.rel (%p11) target = $region8
  $region5: #{pwconv_cond_forward.7} parent=0 // loop_body
    %s15 = ssub.s32 %s10, 1
    %s16 = ssub.s32 %s10, 2
    %s23 = sadd.s32 1, %s18
    %p24 = scmp.ge.s32.totalorder %s23, 1
    %s25 = scalar_select %p24, 0, %s23
    %s26 = sadd.s32 1, %s17
    %s27 = scalar_select %p24, %s26, %s17
    %p28 = scmp.ge.s32.totalorder %s27, 2
    %s29 = scalar_select %p28, 0, %s27
    %s30 = ssub.s32 %s17, %s29
    %s31 = ssub.s32 %s18, %s25
    %s32 = sor.u32 %s30, %s31
    %p33 = scmp.eq.s32.totalorder %s32, 0
    %s35 = sadd.s32 %s34, 1
    %s36 = scalar_select %p33, %s34, %s35
    %p39 = pneg %p33
    %p40 = scmp.eq.s32.totalorder %s10, 1
    %p41 = por %p39, %p40
    %p42 = scmp.ne.s32.totalorder %s34, %s37
    %p43 = scmp.eq.s32.totalorder %s10, 0
    %p44 = por %p42, %p43
    %p45 = scmp.ne.s32.totalorder %s34, %s37
    %p46 = scmp.eq.s32.totalorder %s15, 1
    %p47 = por %p45, %p46
    %p48 = scmp.ne.s32.totalorder %s37, %s38
    %p49 = scmp.eq.s32.totalorder %s15, 0
    %p50 = por %p48, %p49
    %p51 = scmp.ne.s32.totalorder %s37, %s38
    %p52 = scmp.eq.s32.totalorder %s16, 1
    %p53 = por %p51, %p52
    %p55 = scmp.ne.s32.totalorder %s38, %s54
    %p56 = scmp.eq.s32.totalorder %s16, 0
    %p57 = por %p55, %p56
    %s59 = sadd.s32 %s58, 1
    %p62 = scmp.eq.s32.totalorder %s10, 1
    %p63 = scmp.ne.s32.totalorder %s58, %s60
    %p64 = scmp.eq.s32.totalorder %s10, 0
    %p65 = por %p63, %p64
    %p66 = scmp.ne.s32.totalorder %s58, %s60
    %p67 = scmp.eq.s32.totalorder %s15, 1
    %p68 = por %p66, %p67
    %p69 = scmp.ne.s32.totalorder %s60, %s61
    %p70 = scmp.eq.s32.totalorder %s15, 0
    %p71 = por %p69, %p70
    %p72 = scmp.ne.s32.totalorder %s60, %s61
    %p73 = scmp.eq.s32.totalorder %s16, 1
    %p74 = por %p72, %p73
    %p76 = scmp.ne.s32.totalorder %s61, %s75
    %p77 = scmp.eq.s32.totalorder %s16, 0
    %p78 = por %p76, %p77
    %s80 = sadd.s32 %s79, 1
    %p83 = scmp.eq.s32.totalorder %s10, 1
    %p84 = scmp.ne.s32.totalorder %s79, %s81
    %p85 = scmp.eq.s32.totalorder %s10, 0
    %p86 = por %p84, %p85
    %p87 = scmp.ne.s32.totalorder %s79, %s81
    %p88 = scmp.eq.s32.totalorder %s15, 1
    %p89 = por %p87, %p88
    %p90 = scmp.ne.s32.totalorder %s81, %s82
    %p91 = scmp.eq.s32.totalorder %s15, 0
    %p92 = por %p90, %p91
    %p93 = scmp.ne.s32.totalorder %s81, %s82
    %p94 = scmp.eq.s32.totalorder %s16, 1
    %p95 = por %p93, %p94
    %p97 = scmp.ne.s32.totalorder %s82, %s96
    %p98 = scmp.eq.s32.totalorder %s16, 0
    %p99 = por %p97, %p98
    %s100 = ssub.s32 %s17, %s29
    %p101 = scmp.eq.s32.totalorder %s100, 0
    %s103 = sadd.s32 %s102, 1
    %s104 = scalar_select %p101, %s102, %s103
    %p107 = pneg %p101
    %p108 = scmp.eq.s32.totalorder %s10, 1
    %p109 = por %p107, %p108
    %p110 = scmp.ne.s32.totalorder %s102, %s105
    %p111 = scmp.eq.s32.totalorder %s10, 0
    %p112 = por %p110, %p111
    %p113 = scmp.ne.s32.totalorder %s102, %s105
    %p114 = scmp.eq.s32.totalorder %s15, 1
    %p115 = por %p113, %p114
    %p116 = scmp.ne.s32.totalorder %s105, %s106
    %p117 = scmp.eq.s32.totalorder %s15, 0
    %p118 = por %p116, %p117
    %p119 = scmp.ne.s32.totalorder %s105, %s106
    %p120 = scmp.eq.s32.totalorder %s16, 1
    %p121 = por %p119, %p120
    %p123 = scmp.ne.s32.totalorder %s106, %s122
    %p124 = scmp.eq.s32.totalorder %s16, 0
    %p125 = por %p123, %p124
    %s126 = ssub.s32 %s17, %s29
    %s127 = ssub.s32 %s18, %s25
    %s128 = sor.u32 %s126, %s127
    %p129 = scmp.eq.s32.totalorder %s128, 0
    %s131 = sadd.s32 %s130, 1
    %s132 = scalar_select %p129, %s130, %s131
    %p135 = pneg %p129
    %p136 = scmp.eq.s32.totalorder %s10, 1
    %p137 = por %p135, %p136
    %p138 = scmp.ne.s32.totalorder %s130, %s133
    %p139 = scmp.eq.s32.totalorder %s10, 0
    %p140 = por %p138, %p139
    %p141 = scmp.ne.s32.totalorder %s130, %s133
    %p142 = scmp.eq.s32.totalorder %s15, 1
    %p143 = por %p141, %p142
    %p144 = scmp.ne.s32.totalorder %s133, %s134
    %p145 = scmp.eq.s32.totalorder %s15, 0
    %p146 = por %p144, %p145
    %p147 = scmp.ne.s32.totalorder %s133, %s134
    %p148 = scmp.eq.s32.totalorder %s16, 1
    %p149 = por %p147, %p148
    %p151 = scmp.ne.s32.totalorder %s134, %s150
    %p152 = scmp.eq.s32.totalorder %s16, 0
    %p153 = por %p151, %p152
    %p154 = scmp.le.s32.totalorder 1, %s10
    %p155 = scmp.lt.s32.totalorder %s10, 3
    %p156 = pnand %p154, %p155
    %p157 = pneg %p156
    // Predicated region
    $region9: #{pwconv_cond_forward.7} parent=5 // pred_check
      _
    $region10: #{pwconv_cond_forward.7} parent=5 // pred_check_branch
      %159 = sbr.rel (%p156) target = $region12
    $region11: #{pwconv_cond_forward.7} parent=5 // pred_region
      %s160 = ssub.s32 %s10, 1
      // Predicated region
      $region13: #{pwconv_cond_forward.7} parent=11 // pred_check
        %p161 = pneg %p71
      $region14: #{pwconv_cond_forward.7} parent=11 // pred_check_branch
        %163 = sbr.rel (%p161) target = $region16
      $region15: #{pwconv_cond_forward.7} parent=11 // pred_region
        _
      $region16: #{pwconv_cond_forward.7} parent=11 // pred_fallthru
        _
      // Predicated region
      $region17: #{pwconv_cond_forward.7} parent=11 // pred_check
        %p164 = pneg %p92
      $region18: #{pwconv_cond_forward.7} parent=11 // pred_check_branch
        %166 = sbr.rel (%p164) target = $region20
      $region19: #{pwconv_cond_forward.7} parent=11 // pred_region
        _
      $region20: #{pwconv_cond_forward.7} parent=11 // pred_fallthru
        _
    $region12: #{pwconv_cond_forward.7} parent=5 // pred_fallthru
      _
    %p167 = scmp.lt.s32.totalorder %s10, 2
    // Predicated region
    $region21: #{pwconv_cond_forward.7} parent=5 // pred_check
      %p168 = pneg %p167
    $region22: #{pwconv_cond_forward.7} parent=5 // pred_check_branch
      %170 = sbr.rel (%p168) target = $region24
    $region23: #{pwconv_cond_forward.7} parent=5 // pred_region
      // Predicated region
      $region25: #{pwconv_cond_forward.7} parent=23 // pred_check
        %p171 = pneg %p44
      $region26: #{pwconv_cond_forward.7} parent=23 // pred_check_branch
        %173 = sbr.rel (%p171) target = $region28
      $region27: #{pwconv_cond_forward.7} parent=23 // pred_region
        %s174 = smul.u32 2, %s18
        %p175 = scmp.lt.s32.totalorder %s17, 1
        %s176 = scalar_select %p175, %s17, 1
        %p177 = scmp.lt.s32.totalorder %s174, 1
        %s178 = scalar_select %p177, %s174, 1
        %s179 = smul.addr %s176, 2
        %s180 = sadd.s32 %s178, %s179
        %s181 = smul.addr %s180, 4
        %s182 = scalar_lea.vmem %s0, %s181
        %s183 = smul.u32 2, %s18
      $region28: #{pwconv_cond_forward.7} parent=23 // pred_fallthru
        _
      // Predicated region
      $region29: #{pwconv_cond_forward.7} parent=23 // pred_check
        %p184 = pneg %p112
      $region30: #{pwconv_cond_forward.7} parent=23 // pred_check_branch
        %186 = sbr.rel (%p184) target = $region32
      $region31: #{pwconv_cond_forward.7} parent=23 // pred_region
        %p187 = scmp.lt.s32.totalorder %s17, 1
        %s188 = scalar_select %p187, %s17, 1
        %s189 = smul.addr %s188, 50
        %s190 = smul.addr %s189, 8
        %s191 = scalar_lea.vmem %s3, %s190
      $region32: #{pwconv_cond_forward.7} parent=23 // pred_fallthru
        _
    $region24: #{pwconv_cond_forward.7} parent=5 // pred_fallthru
      _
    %p192 = scmp.le.s32.totalorder 1, %s10
    %p193 = scmp.lt.s32.totalorder %s10, 3
    %p194 = pnand %p192, %p193
    %p195 = pneg %p194
    // Predicated region
    $region33: #{pwconv_cond_forward.7} parent=5 // pred_check
      _
    $region34: #{pwconv_cond_forward.7} parent=5 // pred_check_branch
      %197 = sbr.rel (%p194) target = $region36
    $region35: #{pwconv_cond_forward.7} parent=5 // pred_region
      %s198 = ssub.s32 %s10, 1
      %s199 = smul.u32 2, %s20
      %p200 = scmp.lt.s32.totalorder %s19, 1
      %s201 = scalar_select %p200, %s19, 1
      %p202 = scmp.lt.s32.totalorder %s199, 1
      %s203 = scalar_select %p202, %s199, 1
      %s204 = smul.addr %s201, 2
      %s205 = sadd.s32 %s203, %s204
      %s206 = smul.addr %s205, 4
      %s207 = scalar_lea.vmem %s0, %s206
      %p208 = pneg %p50
      %p209 = pneg %p47
      %p210 = pneg %p71
      %p211 = pneg %p68
      %p212 = pneg %p92
      %p213 = pneg %p89
      %p214 = scmp.lt.s32.totalorder %s19, 1
      %s215 = scalar_select %p214, %s19, 1
      %s216 = smul.addr %s215, 50
      %s217 = smul.addr %s216, 8
      %s218 = scalar_lea.vmem %s3, %s217
      %p219 = pneg %p118
      %p220 = pneg %p115
      %p221 = pneg %p146
      %p222 = pneg %p143
      %s223 = smul.u32 2, %s20
      %p224 = scmp.lt.s32.totalorder %s19, 1
      %s225 = scalar_select %p224, %s19, 1
      %p226 = scmp.lt.s32.totalorder %s223, 1
      %s227 = scalar_select %p226, %s223, 1
      %s228 = smul.addr %s225, 2
      %s229 = sadd.s32 %s227, %s228
      %s230 = smul.addr %s229, 4
      %s231 = scalar_lea.vmem %s4, %s230
      %s232 = smul.u32 2, %s20
      %p233 = scmp.lt.s32.totalorder %s19, 1
      %s234 = scalar_select %p233, %s19, 1
      %p235 = scmp.lt.s32.totalorder %s232, 1
      %s236 = scalar_select %p235, %s232, 1
      %s237 = smul.addr %s234, 2
      %s238 = sadd.s32 %s236, %s237
      %s239 = smul.addr %s238, 4
      %s240 = scalar_lea.vmem %s0, %s239
      %s241 = smul.u32 2, %s20
      %p242 = scmp.lt.s32.totalorder %s19, 1
      %s243 = scalar_select %p242, %s19, 1
      %s244 = smul.addr %s243, 50
      %s245 = smul.addr %s244, 8
      %s246 = scalar_lea.vmem %s3, %s245
      %s247 = smul.u32 2, %s20
      %p248 = scmp.lt.s32.totalorder %s19, 1
      %s249 = scalar_select %p248, %s19, 1
      %p250 = scmp.lt.s32.totalorder %s247, 1
      %s251 = scalar_select %p250, %s247, 1
      %s252 = smul.addr %s249, 2
      %s253 = sadd.s32 %s251, %s252
      %s254 = smul.addr %s253, 4
      %s255 = scalar_lea.vmem %s4, %s254
      %s256 = smul.u32 2, %s20
      %v258 = vld [vmem:[%s240] sm:$0x77]
      %v259 = vld [vmem:[%s246] sm:$0xff]
      %v260 = vld [vmem:[%s246 + $0x8] sm:$0xff]
      %v261 = vld [vmem:[%s246 + $0x10] sm:$0xff]
      %v262 = vld [vmem:[%s246 + $0x18] sm:$0xff]
      %v263 = vld [vmem:[%s246 + $0x20] sm:$0xff]
      %v264 = vld [vmem:[%s246 + $0x28] sm:$0xff]
      %v265 = vld [vmem:[%s246 + $0x30] sm:$0xff]
      %v266 = vld [vmem:[%s246 + $0x38] sm:$0xff]
      %v267 = vld [vmem:[%s246 + $0x40] sm:$0xff]
      %v268 = vld [vmem:[%s246 + $0x48] sm:$0xff]
      %v269 = vld [vmem:[%s246 + $0x50] sm:$0xff]
      %v270 = vld [vmem:[%s246 + $0x58] sm:$0xff]
      %v271 = vld [vmem:[%s246 + $0x60] sm:$0xff]
      %v272 = vld [vmem:[%s246 + $0x68] sm:$0xff]
      %v273 = vld [vmem:[%s246 + $0x70] sm:$0xff]
      %v274 = vld [vmem:[%s246 + $0x78] sm:$0xff]
      %v275 = vld [vmem:[%s246 + $0x80] sm:$0xff]
      %v276 = vld [vmem:[%s246 + $0x88] sm:$0xff]
      %v277 = vld [vmem:[%s246 + $0x90] sm:$0xff]
      %v278 = vld [vmem:[%s246 + $0x98] sm:$0xff]
      %v279 = vld [vmem:[%s246 + $0xa0] sm:$0xff]
      %v280 = vld [vmem:[%s246 + $0xa8] sm:$0xff]
      %v281 = vld [vmem:[%s246 + $0xb0] sm:$0xff]
      %v282 = vld [vmem:[%s246 + $0xb8] sm:$0xff]
      %v283 = vld [vmem:[%s246 + $0xc0] sm:$0xff]
      %v284 = vld [vmem:[%s246 + $0xc8] sm:$0xff]
      %v285 = vld [vmem:[%s246 + $0xd0] sm:$0xff]
      %v286 = vld [vmem:[%s246 + $0xd8] sm:$0xff]
      %v287 = vld [vmem:[%s246 + $0xe0] sm:$0xff]
      %v288 = vld [vmem:[%s246 + $0xe8] sm:$0xff]
      %v289 = vld [vmem:[%s246 + $0xf0] sm:$0xff]
      %v290 = vld [vmem:[%s246 + $0xf8] sm:$0xff]
      %v291 = vld [vmem:[%s246 + $0x100] sm:$0xff]
      %v292 = vld [vmem:[%s246 + $0x108] sm:$0xff]
      %v293 = vld [vmem:[%s246 + $0x110] sm:$0xff]
      %v294 = vld [vmem:[%s246 + $0x118] sm:$0xff]
      %v295 = vld [vmem:[%s246 + $0x120] sm:$0xff]
      %v296 = vld [vmem:[%s246 + $0x128] sm:$0xff]
      %v297 = vld [vmem:[%s246 + $0x130] sm:$0xff]
      %v298 = vld [vmem:[%s246 + $0x138] sm:$0xff]
      %v299 = vld [vmem:[%s246 + $0x140] sm:$0xff]
      %v300 = vld [vmem:[%s246 + $0x148] sm:$0xff]
      %v301 = vld [vmem:[%s246 + $0x150] sm:$0xff]
      %v302 = vld [vmem:[%s246 + $0x158] sm:$0xff]
      %v303 = vld [vmem:[%s246 + $0x160] sm:$0xff]
      %v304 = vld [vmem:[%s246 + $0x168] sm:$0xff]
      %v305 = vld [vmem:[%s246 + $0x170] sm:$0xff]
      %v306 = vld [vmem:[%s246 + $0x178] sm:$0xff]
      %v307 = vld [vmem:[%s246 + $0x180] sm:$0xff]
      %v308 = vld [vmem:[%s246 + $0x188] sm:$0xff]
      %v309 = vld [vmem:[%s2] sm:$0xff]
      %v310 = vld [vmem:[%s2 + $0x8] sm:$0xff]
      %v311 = vld [vmem:[%s2 + $0x10] sm:$0xff]
      %v312 = vld [vmem:[%s2 + $0x18] sm:$0xff]
      %v313 = vld [vmem:[%s2 + $0x20] sm:$0xff]
      %v314 = vld [vmem:[%s2 + $0x28] sm:$0xff]
      %v315 = vld [vmem:[%s2 + $0x30] sm:$0xff]
      %v316 = vld [vmem:[%s2 + $0x38] sm:$0xff]
      %v317 = vld [vmem:[%s2 + $0x40] sm:$0xff]
      %v318 = vld [vmem:[%s2 + $0x48] sm:$0xff]
      %v319 = vld [vmem:[%s2 + $0x50] sm:$0xff]
      %v320 = vld [vmem:[%s2 + $0x58] sm:$0xff]
      %v321 = vld [vmem:[%s2 + $0x60] sm:$0xff]
      %v322 = vld [vmem:[%s2 + $0x68] sm:$0xff]
      %v323 = vld [vmem:[%s2 + $0x70] sm:$0xff]
      %v324 = vld [vmem:[%s2 + $0x78] sm:$0xff]
      %v325 = vld [vmem:[%s2 + $0x80] sm:$0xff]
      %v326 = vld [vmem:[%s2 + $0x88] sm:$0xff]
      %v327 = vld [vmem:[%s2 + $0x90] sm:$0xff]
      %v328 = vld [vmem:[%s2 + $0x98] sm:$0xff]
      %v329 = vld [vmem:[%s2 + $0xa0] sm:$0xff]
      %v330 = vld [vmem:[%s2 + $0xa8] sm:$0xff]
      %v331 = vld [vmem:[%s2 + $0xb0] sm:$0xff]
      %v332 = vld [vmem:[%s2 + $0xb8] sm:$0xff]
      %v333 = vld [vmem:[%s2 + $0xc0] sm:$0xff]
      %v334 = vld [vmem:[%s1] sm:$0xff]
      %v335 = vld [vmem:[%s1 + $0x8] sm:$0xff]
      %v336 = vld [vmem:[%s1 + $0x10] sm:$0xff]
      %v337 = vld [vmem:[%s1 + $0x18] sm:$0xff]
      %v338 = vadd.f32 %v259, 1.0
      %v339 = vadd.f32 %v260, 1.0
      %v340 = vadd.f32 %v261, 1.0
      %v341 = vadd.f32 %v262, 1.0
      %343 = vset.pattern.permute.xlu0 0
      %344 = vperm.xlu0 %343, %v338
      %v345 = vpop.permute.xlu0 %344
      %348 = vset.pattern.permute.xlu0 0
      %349 = vperm.xlu0 %348, %v339
      %v350 = vpop.permute.xlu0 %349
      %353 = vset.pattern.permute.xlu0 0
      %354 = vperm.xlu0 %353, %v340
      %v355 = vpop.permute.xlu0 %354
      %358 = vset.pattern.permute.xlu0 0
      %359 = vperm.xlu0 %358, %v341
      %v360 = vpop.permute.xlu0 %359
      %v362 = vmul.f32 %v334, %v345
      %v363 = vmul.f32 %v335, %v350
      %v364 = vmul.f32 %v336, %v355
      %v365 = vmul.f32 %v337, %v360
      %v366 = vpack.c.bf16 %v363, %v362
      %v367 = vpack.c.bf16 %v365, %v364
      %v368 = vmul.f32 %v338, %v309
      %v369 = vmul.f32 %v339, %v310
      %v370 = vmul.f32 %v340, %v311
      %v371 = vmul.f32 %v341, %v312
      %v372 = vadd.f32 %v368, %v284
      %v373 = vadd.f32 %v369, %v285
      %v374 = vadd.f32 %v370, %v286
      %v375 = vadd.f32 %v371, %v287
      %v377 = vcombine.high %v258, %v258
      %v379 = vpack.c.bf16 %v258, %v258
      %v380 = vpack.c.bf16 %v377, %v377
      %382 = vset.pattern.permute.xlu0 0
      %383 = vperm.xlu0 %382, %v372
      %v384 = vpop.permute.xlu0 %383
      %387 = vset.pattern.permute.xlu0 0
      %388 = vperm.xlu0 %387, %v373
      %v389 = vpop.permute.xlu0 %388
      %392 = vset.pattern.permute.xlu0 0
      %393 = vperm.xlu0 %392, %v374
      %v394 = vpop.permute.xlu0 %393
      %397 = vset.pattern.permute.xlu0 0
      %398 = vperm.xlu0 %397, %v375
      %v399 = vpop.permute.xlu0 %398
      %vm401 = vcmask 23552
      %v403 = vsel %vm401, %v366, 0
      %v406 = vsel %vm401, %v367, 0
      %vm408 = vcmask 1040384
      %vm409 = vcmask 1041408
      %v410 = vsel %vm408, 4294967295, 65535
      %v411 = vsel %vm409, %v410, 0
      %v413 = vand.u32 %v379, %v411
      %v416 = vand.u32 %v380, %v411
      %418 = vmatprep.subr.bf16.mxu0 %v416
      %419 = vmatpush1.bf16.msra.mxu0 %v413
      %420 = vmatprep.subr.bf16.mxu0 0
      %421 = vmatpush1.bf16.msra.mxu0 0
      %422 = vmatprep.subr.bf16.mxu0 0
      %423 = vmatpush1.bf16.msra.mxu0 0
      %424 = vmatprep.subr.bf16.mxu0 0
      %425 = vmatpush1.bf16.msra.mxu0 0
      %426 = vmatprep.subr.bf16.mxu0 0
      %427 = vmatpush1.bf16.msra.mxu0 0
      %428 = vmatprep.subr.bf16.mxu0 0
      %429 = vmatpush1.bf16.msra.mxu0 0
      %430 = vmatprep.subr.bf16.mxu0 0
      %431 = vmatpush1.bf16.msra.mxu0 0
      %432 = vmatprep.subr.bf16.mxu0 0
      %433 = vmatpush1.bf16.msra.mxu0 0
      %434 = vmatprep.subr.bf16.mxu0 0
      %435 = vmatpush1.bf16.msra.mxu0 0
      %436 = vmatprep.subr.bf16.mxu0 0
      %437 = vmatpush1.bf16.msra.mxu0 0
      %438 = vmatprep.subr.bf16.mxu0 0
      %439 = vmatpush1.bf16.msra.mxu0 0
      %440 = vmatprep.subr.bf16.mxu0 0
      %441 = vmatpush1.bf16.msra.mxu0 0
      %442 = vmatprep.subr.bf16.mxu0 0
      %443 = vmatpush1.bf16.msra.mxu0 0
      %444 = vmatprep.subr.bf16.mxu0 0
      %445 = vmatpush1.bf16.msra.mxu0 0
      %446 = vmatprep.subr.bf16.mxu0 0
      %447 = vmatpush1.bf16.msra.mxu0 0
      %448 = vmatprep.subr.bf16.mxu0 0
      %449 = vmatpush1.bf16.msra.mxu0 0
      %450 = vmatprep.mubr.bf16.mxu0 0
      %451 = vmatmul.mubr.bf16.gmra.mrb[0].mxu0 %v403
      %v452 = vpop.f32.mrb[0].mxu0
      %v453 = vadd.f32 %v384, %v452
      %v454 = vpop.f32.mrb[0].mxu0
      %v455 = vadd.f32 %v384, %v454
      %v456 = vpop.f32.mrb[0].mxu0
      %v457 = vadd.f32 %v389, %v456
      %v458 = vpop.f32.mrb[0].mxu0
      %v459 = vadd.f32 %v389, %v458
      %460 = vmatprep.mubr.bf16.mxu0 0
      %461 = vmatmul.mubr.bf16.gmra.mrb[0].mxu0 %v406
      %v462 = vpop.f32.mrb[0].mxu0
      %v463 = vadd.f32 %v394, %v462
      %v464 = vpop.f32.mrb[0].mxu0
      %v465 = vadd.f32 %v394, %v464
      %v466 = vpop.f32.mrb[0].mxu0
      %v467 = vadd.f32 %v399, %v466
      %v468 = vpop.f32.mrb[0].mxu0
      %v469 = vadd.f32 %v399, %v468
      %470 = vdwg.mxu0
      %v471 = vmul.f32 %v453, 0.1
      %v472 = vmul.f32 %v455, 0.1
      %v473 = vmul.f32 %v457, 0.1
      %v474 = vmul.f32 %v459, 0.1
      %v475 = vmul.f32 %v463, 0.1
      %v476 = vmul.f32 %v465, 0.1
      %v477 = vmul.f32 %v467, 0.1
      %v478 = vmul.f32 %v469, 0.1
      %v479 = vmax.f32 %v453, %v471
      %v480 = vmax.f32 %v455, %v472
      %v481 = vmax.f32 %v457, %v473
      %v482 = vmax.f32 %v459, %v474
      %v483 = vmax.f32 %v463, %v475
      %v484 = vmax.f32 %v465, %v476
      %v485 = vmax.f32 %v467, %v477
      %v486 = vmax.f32 %v469, %v478
      %s487 = scalar_lea.vmem %s1, 64
      %v488 = vld [vmem:[%s487] sm:$0xff]
      %v489 = vld [vmem:[%s487 + $0x8] sm:$0xff]
      %v490 = vld [vmem:[%s487 + $0x10] sm:$0xff]
      %v491 = vld [vmem:[%s487 + $0x18] sm:$0xff]
      %v492 = vld [vmem:[%s487 + $0x20] sm:$0xff]
      %v493 = vld [vmem:[%s487 + $0x28] sm:$0xff]
      %v494 = vld [vmem:[%s487 + $0x30] sm:$0xff]
      %v495 = vld [vmem:[%s487 + $0x38] sm:$0xff]
      %v496 = vadd.f32 %v263, 1.0
      %v497 = vadd.f32 %v264, 1.0
      %v498 = vadd.f32 %v265, 1.0
      %v499 = vadd.f32 %v266, 1.0
      %v500 = vadd.f32 %v267, 1.0
      %v501 = vadd.f32 %v268, 1.0
      %v502 = vadd.f32 %v269, 1.0
      %v503 = vadd.f32 %v270, 1.0
      %505 = vset.pattern.permute.xlu0 0
      %506 = vperm.xlu0 %505, %v496
      %v507 = vpop.permute.xlu0 %506
      %510 = vset.pattern.permute.xlu0 0
      %511 = vperm.xlu0 %510, %v497
      %v512 = vpop.permute.xlu0 %511
      %515 = vset.pattern.permute.xlu0 0
      %516 = vperm.xlu0 %515, %v498
      %v517 = vpop.permute.xlu0 %516
      %520 = vset.pattern.permute.xlu0 0
      %521 = vperm.xlu0 %520, %v499
      %v522 = vpop.permute.xlu0 %521
      %525 = vset.pattern.permute.xlu0 0
      %526 = vperm.xlu0 %525, %v500
      %v527 = vpop.permute.xlu0 %526
      %530 = vset.pattern.permute.xlu0 0
      %531 = vperm.xlu0 %530, %v501
      %v532 = vpop.permute.xlu0 %531
      %535 = vset.pattern.permute.xlu0 0
      %536 = vperm.xlu0 %535, %v502
      %v537 = vpop.permute.xlu0 %536
      %540 = vset.pattern.permute.xlu0 0
      %541 = vperm.xlu0 %540, %v503
      %v542 = vpop.permute.xlu0 %541
      %v544 = vmul.f32 %v488, %v507
      %v545 = vmul.f32 %v489, %v512
      %v546 = vmul.f32 %v490, %v517
      %v547 = vmul.f32 %v491, %v522
      %v548 = vmul.f32 %v492, %v527
      %v549 = vmul.f32 %v493, %v532
      %v550 = vmul.f32 %v494, %v537
      %v551 = vmul.f32 %v495, %v542
      %v552 = vpack.c.bf16 %v545, %v544
      %v553 = vpack.c.bf16 %v547, %v546
      %v554 = vpack.c.bf16 %v549, %v548
      %v555 = vpack.c.bf16 %v551, %v550
      %v556 = vmul.f32 %v496, %v313
      %v557 = vmul.f32 %v497, %v314
      %v558 = vmul.f32 %v498, %v315
      %v559 = vmul.f32 %v499, %v316
      %v560 = vmul.f32 %v500, %v317
      %v561 = vmul.f32 %v501, %v318
      %v562 = vmul.f32 %v502, %v319
      %v563 = vmul.f32 %v503, %v320
      %v564 = vadd.f32 %v556, %v288
      %v565 = vadd.f32 %v557, %v289
      %v566 = vadd.f32 %v558, %v290
      %v567 = vadd.f32 %v559, %v291
      %v568 = vadd.f32 %v560, %v292
      %v569 = vadd.f32 %v561, %v293
      %v570 = vadd.f32 %v562, %v294
      %v571 = vadd.f32 %v563, %v295
      %v572 = vpack.c.bf16 %v481, %v479
      %v573 = vpack.c.bf16 %v482, %v480
      %v574 = vpack.c.bf16 %v485, %v483
      %v575 = vpack.c.bf16 %v486, %v484
      %577 = vset.pattern.permute.xlu0 0
      %578 = vperm.xlu0 %577, %v564
      %v579 = vpop.permute.xlu0 %578
      %582 = vset.pattern.permute.xlu0 0
      %583 = vperm.xlu0 %582, %v565
      %v584 = vpop.permute.xlu0 %583
      %587 = vset.pattern.permute.xlu0 0
      %588 = vperm.xlu0 %587, %v566
      %v589 = vpop.permute.xlu0 %588
      %592 = vset.pattern.permute.xlu0 0
      %593 = vperm.xlu0 %592, %v567
      %v594 = vpop.permute.xlu0 %593
      %597 = vset.pattern.permute.xlu0 0
      %598 = vperm.xlu0 %597, %v568
      %v599 = vpop.permute.xlu0 %598
      %602 = vset.pattern.permute.xlu0 0
      %603 = vperm.xlu0 %602, %v569
      %v604 = vpop.permute.xlu0 %603
      %607 = vset.pattern.permute.xlu0 0
      %608 = vperm.xlu0 %607, %v570
      %v609 = vpop.permute.xlu0 %608
      %612 = vset.pattern.permute.xlu0 0
      %613 = vperm.xlu0 %612, %v571
      %v614 = vpop.permute.xlu0 %613
      %vm616 = vcmask 261120
      %v618 = vsel %vm616, %v552, 0
      %v621 = vsel %vm616, %v553, 0
      %v624 = vsel %vm616, %v554, 0
      %v627 = vsel %vm616, %v555, 0
      %629 = vmatprep.subr.bf16.mxu0 %v573
      %630 = vmatpush1.bf16.msra.mxu0 %v572
      %631 = vmatprep.subr.bf16.mxu0 %v575
      %632 = vmatpush1.bf16.msra.mxu0 %v574
      %633 = vmatprep.subr.bf16.mxu0 0
      %634 = vmatpush1.bf16.msra.mxu0 0
      %635 = vmatprep.subr.bf16.mxu0 0
      %636 = vmatpush1.bf16.msra.mxu0 0
      %637 = vmatprep.subr.bf16.mxu0 0
      %638 = vmatpush1.bf16.msra.mxu0 0
      %639 = vmatprep.subr.bf16.mxu0 0
      %640 = vmatpush1.bf16.msra.mxu0 0
      %641 = vmatprep.subr.bf16.mxu0 0
      %642 = vmatpush1.bf16.msra.mxu0 0
      %643 = vmatprep.subr.bf16.mxu0 0
      %644 = vmatpush1.bf16.msra.mxu0 0
      %645 = vmatprep.subr.bf16.mxu0 0
      %646 = vmatpush1.bf16.msra.mxu0 0
      %647 = vmatprep.subr.bf16.mxu0 0
      %648 = vmatpush1.bf16.msra.mxu0 0
      %649 = vmatprep.subr.bf16.mxu0 0
      %650 = vmatpush1.bf16.msra.mxu0 0
      %651 = vmatprep.subr.bf16.mxu0 0
      %652 = vmatpush1.bf16.msra.mxu0 0
      %653 = vmatprep.subr.bf16.mxu0 0
      %654 = vmatpush1.bf16.msra.mxu0 0
      %655 = vmatprep.subr.bf16.mxu0 0
      %656 = vmatpush1.bf16.msra.mxu0 0
      %657 = vmatprep.subr.bf16.mxu0 0
      %658 = vmatpush1.bf16.msra.mxu0 0
      %659 = vmatprep.subr.bf16.mxu0 0
      %660 = vmatpush1.bf16.msra.mxu0 0
      %661 = vmatprep.mubr.bf16.mxu0 0
      %662 = vmatmul.mubr.bf16.gmra.mrb[0].mxu0 %v618
      %v663 = vpop.f32.mrb[0].mxu0
      %v664 = vadd.f32 %v579, %v663
      %v665 = vpop.f32.mrb[0].mxu0
      %v666 = vadd.f32 %v579, %v665
      %v667 = vpop.f32.mrb[0].mxu0
      %v668 = vadd.f32 %v584, %v667
      %v669 = vpop.f32.mrb[0].mxu0
      %v670 = vadd.f32 %v584, %v669
      %671 = vmatprep.mubr.bf16.mxu0 0
      %672 = vmatmul.mubr.bf16.gmra.mrb[0].mxu0 %v621
      %v673 = vpop.f32.mrb[0].mxu0
      %v674 = vadd.f32 %v589, %v673
      %v675 = vpop.f32.mrb[0].mxu0
      %v676 = vadd.f32 %v589, %v675
      %v677 = vpop.f32.mrb[0].mxu0
      %v678 = vadd.f32 %v594, %v677
      %v679 = vpop.f32.mrb[0].mxu0
      %v680 = vadd.f32 %v594, %v679
      %681 = vmatprep.mubr.bf16.mxu0 0
      %682 = vmatmul.mubr.bf16.gmra.mrb[0].mxu0 %v624
      %v683 = vpop.f32.mrb[0].mxu0
      %v684 = vadd.f32 %v599, %v683
      %v685 = vpop.f32.mrb[0].mxu0
      %v686 = vadd.f32 %v599, %v685
      %v687 = vpop.f32.mrb[0].mxu0
      %v688 = vadd.f32 %v604, %v687
      %v689 = vpop.f32.mrb[0].mxu0
      %v690 = vadd.f32 %v604, %v689
      %691 = vmatprep.mubr.bf16.mxu0 0
      %692 = vmatmul.mubr.bf16.gmra.mrb[0].mxu0 %v627
      %v693 = vpop.f32.mrb[0].mxu0
      %v694 = vadd.f32 %v609, %v693
      %v695 = vpop.f32.mrb[0].mxu0
      %v696 = vadd.f32 %v609, %v695
      %v697 = vpop.f32.mrb[0].mxu0
      %v698 = vadd.f32 %v614, %v697
      %v699 = vpop.f32.mrb[0].mxu0
      %v700 = vadd.f32 %v614, %v699
      %701 = vdwg.mxu0
      %v702 = vmul.f32 %v664, 0.1
      %v703 = vmul.f32 %v666, 0.1
      %v704 = vmul.f32 %v668, 0.1
      %v705 = vmul.f32 %v670, 0.1
      %v706 = vmul.f32 %v674, 0.1
      %v707 = vmul.f32 %v676, 0.1
      %v708 = vmul.f32 %v678, 0.1
      %v709 = vmul.f32 %v680, 0.1
      %v710 = vmul.f32 %v684, 0.1
      %v711 = vmul.f32 %v686, 0.1
      %v712 = vmul.f32 %v688, 0.1
      %v713 = vmul.f32 %v690, 0.1
      %v714 = vmul.f32 %v694, 0.1
      %v715 = vmul.f32 %v696, 0.1
      %v716 = vmul.f32 %v698, 0.1
      %v717 = vmul.f32 %v700, 0.1
      %v718 = vmax.f32 %v664, %v702
      %v719 = vmax.f32 %v666, %v703
      %v720 = vmax.f32 %v668, %v704
      %v721 = vmax.f32 %v670, %v705
      %v722 = vmax.f32 %v674, %v706
      %v723 = vmax.f32 %v676, %v707
      %v724 = vmax.f32 %v678, %v708
      %v725 = vmax.f32 %v680, %v709
      %v726 = vmax.f32 %v684, %v710
      %v727 = vmax.f32 %v686, %v711
      %v728 = vmax.f32 %v688, %v712
      %v729 = vmax.f32 %v690, %v713
      %v730 = vmax.f32 %v694, %v714
      %v731 = vmax.f32 %v696, %v715
      %v732 = vmax.f32 %v698, %v716
      %v733 = vmax.f32 %v700, %v717
      %s734 = scalar_lea.vmem %s1, 128
      %v735 = vld [vmem:[%s734] sm:$0xff]
      %v736 = vld [vmem:[%s734 + $0x8] sm:$0xff]
      %v737 = vld [vmem:[%s734 + $0x10] sm:$0xff]
      %v738 = vld [vmem:[%s734 + $0x18] sm:$0xff]
      %v739 = vld [vmem:[%s734 + $0x20] sm:$0xff]
      %v740 = vld [vmem:[%s734 + $0x28] sm:$0xff]
      %v741 = vld [vmem:[%s734 + $0x30] sm:$0xff]
      %v742 = vld [vmem:[%s734 + $0x38] sm:$0xff]
      %v743 = vadd.f32 %v271, 1.0
      %v744 = vadd.f32 %v272, 1.0
      %v745 = vadd.f32 %v273, 1.0
      %v746 = vadd.f32 %v274, 1.0
      %v747 = vadd.f32 %v275, 1.0
      %v748 = vadd.f32 %v276, 1.0
      %v749 = vadd.f32 %v277, 1.0
      %v750 = vadd.f32 %v278, 1.0
      %752 = vset.pattern.permute.xlu0 0
      %753 = vperm.xlu0 %752, %v743
      %v754 = vpop.permute.xlu0 %753
      %757 = vset.pattern.permute.xlu0 0
      %758 = vperm.xlu0 %757, %v744
      %v759 = vpop.permute.xlu0 %758
      %762 = vset.pattern.permute.xlu0 0
      %763 = vperm.xlu0 %762, %v745
      %v764 = vpop.permute.xlu0 %763
      %767 = vset.pattern.permute.xlu0 0
      %768 = vperm.xlu0 %767, %v746
      %v769 = vpop.permute.xlu0 %768
      %772 = vset.pattern.permute.xlu0 0
      %773 = vperm.xlu0 %772, %v747
      %v774 = vpop.permute.xlu0 %773
      %777 = vset.pattern.permute.xlu0 0
      %778 = vperm.xlu0 %777, %v748
      %v779 = vpop.permute.xlu0 %778
      %782 = vset.pattern.permute.xlu0 0
      %783 = vperm.xlu0 %782, %v749
      %v784 = vpop.permute.xlu0 %783
      %787 = vset.pattern.permute.xlu0 0
      %788 = vperm.xlu0 %787, %v750
      %v789 = vpop.permute.xlu0 %788
      %v791 = vmul.f32 %v735, %v754
      %v792 = vmul.f32 %v736, %v759
      %v793 = vmul.f32 %v737, %v764
      %v794 = vmul.f32 %v738, %v769
      %v795 = vmul.f32 %v739, %v774
      %v796 = vmul.f32 %v740, %v779
      %v797 = vmul.f32 %v741, %v784
      %v798 = vmul.f32 %v742, %v789
      %v799 = vpack.c.bf16 %v792, %v791
      %v800 = vpack.c.bf16 %v794, %v793
      %v801 = vpack.c.bf16 %v796, %v795
      %v802 = vpack.c.bf16 %v798, %v797
      %v803 = vmul.f32 %v743, %v321
      %v804 = vmul.f32 %v744, %v322
      %v805 = vmul.f32 %v745, %v323
      %v806 = vmul.f32 %v746, %v324
      %v807 = vmul.f32 %v747, %v325
      %v808 = vmul.f32 %v748, %v326
      %v809 = vmul.f32 %v749, %v327
      %v810 = vmul.f32 %v750, %v328
      %v811 = vadd.f32 %v803, %v296
      %v812 = vadd.f32 %v804, %v297
      %v813 = vadd.f32 %v805, %v298
      %v814 = vadd.f32 %v806, %v299
      %v815 = vadd.f32 %v807, %v300
      %v816 = vadd.f32 %v808, %v301
      %v817 = vadd.f32 %v809, %v302
      %v818 = vadd.f32 %v810, %v303
      %v819 = vpack.c.bf16 %v720, %v718
      %v820 = vpack.c.bf16 %v721, %v719
      %v821 = vpack.c.bf16 %v724, %v722
      %v822 = vpack.c.bf16 %v725, %v723
      %v823 = vpack.c.bf16 %v728, %v726
      %v824 = vpack.c.bf16 %v729, %v727
      %v825 = vpack.c.bf16 %v732, %v730
      %v826 = vpack.c.bf16 %v733, %v731
      %828 = vset.pattern.permute.xlu0 0
      %829 = vperm.xlu0 %828, %v811
      %v830 = vpop.permute.xlu0 %829
      %833 = vset.pattern.permute.xlu0 0
      %834 = vperm.xlu0 %833, %v812
      %v835 = vpop.permute.xlu0 %834
      %838 = vset.pattern.permute.xlu0 0
      %839 = vperm.xlu0 %838, %v813
      %v840 = vpop.permute.xlu0 %839
      %843 = vset.pattern.permute.xlu0 0
      %844 = vperm.xlu0 %843, %v814
      %v845 = vpop.permute.xlu0 %844
      %848 = vset.pattern.permute.xlu0 0
      %849 = vperm.xlu0 %848, %v815
      %v850 = vpop.permute.xlu0 %849
      %853 = vset.pattern.permute.xlu0 0
      %854 = vperm.xlu0 %853, %v816
      %v855 = vpop.permute.xlu0 %854
      %858 = vset.pattern.permute.xlu0 0
      %859 = vperm.xlu0 %858, %v817
      %v860 = vpop.permute.xlu0 %859
      %863 = vset.pattern.permute.xlu0 0
      %864 = vperm.xlu0 %863, %v818
      %v865 = vpop.permute.xlu0 %864
      %vm867 = vcmask 523264
      %v869 = vsel %vm867, %v799, 0
      %v872 = vsel %vm867, %v800, 0
      %v875 = vsel %vm867, %v801, 0
      %v878 = vsel %vm867, %v802, 0
      %880 = vmatprep.subr.bf16.mxu0 %v820
      %881 = vmatpush1.bf16.msra.mxu0 %v819
      %882 = vmatprep.subr.bf16.mxu0 %v822
      %883 = vmatpush1.bf16.msra.mxu0 %v821
      %884 = vmatprep.subr.bf16.mxu0 %v824
      %885 = vmatpush1.bf16.msra.mxu0 %v823
      %886 = vmatprep.subr.bf16.mxu0 %v826
      %887 = vmatpush1.bf16.msra.mxu0 %v825
      %888 = vmatprep.subr.bf16.mxu0 0
      %889 = vmatpush1.bf16.msra.mxu0 0
      %890 = vmatprep.subr.bf16.mxu0 0
      %891 = vmatpush1.bf16.msra.mxu0 0
      %892 = vmatprep.subr.bf16.mxu0 0
      %893 = vmatpush1.bf16.msra.mxu0 0
      %894 = vmatprep.subr.bf16.mxu0 0
      %895 = vmatpush1.bf16.msra.mxu0 0
      %896 = vmatprep.subr.bf16.mxu0 0
      %897 = vmatpush1.bf16.msra.mxu0 0
      %898 = vmatprep.subr.bf16.mxu0 0
      %899 = vmatpush1.bf16.msra.mxu0 0
      %900 = vmatprep.subr.bf16.mxu0 0
      %901 = vmatpush1.bf16.msra.mxu0 0
      %902 = vmatprep.subr.bf16.mxu0 0
      %903 = vmatpush1.bf16.msra.mxu0 0
      %904 = vmatprep.subr.bf16.mxu0 0
      %905 = vmatpush1.bf16.msra.mxu0 0
      %906 = vmatprep.subr.bf16.mxu0 0
      %907 = vmatpush1.bf16.msra.mxu0 0
      %908 = vmatprep.subr.bf16.mxu0 0
      %909 = vmatpush1.bf16.msra.mxu0 0
      %910 = vmatprep.subr.bf16.mxu0 0
      %911 = vmatpush1.bf16.msra.mxu0 0
      %912 = vmatprep.mubr.bf16.mxu0 0
      %913 = vmatmul.mubr.bf16.gmra.mrb[0].mxu0 %v869
      %v914 = vpop.f32.mrb[0].mxu0
      %v915 = vadd.f32 %v830, %v914
      %v916 = vpop.f32.mrb[0].mxu0
      %v917 = vadd.f32 %v830, %v916
      %v918 = vpop.f32.mrb[0].mxu0
      %v919 = vadd.f32 %v835, %v918
      %v920 = vpop.f32.mrb[0].mxu0
      %v921 = vadd.f32 %v835, %v920
      %922 = vmatprep.mubr.bf16.mxu0 0
      %923 = vmatmul.mubr.bf16.gmra.mrb[0].mxu0 %v872
      %v924 = vpop.f32.mrb[0].mxu0
      %v925 = vadd.f32 %v840, %v924
      %v926 = vpop.f32.mrb[0].mxu0
      %v927 = vadd.f32 %v840, %v926
      %v928 = vpop.f32.mrb[0].mxu0
      %v929 = vadd.f32 %v845, %v928
      %v930 = vpop.f32.mrb[0].mxu0
      %v931 = vadd.f32 %v845, %v930
      %932 = vmatprep.mubr.bf16.mxu0 0
      %933 = vmatmul.mubr.bf16.gmra.mrb[0].mxu0 %v875
      %v934 = vpop.f32.mrb[0].mxu0
      %v935 = vadd.f32 %v850, %v934
      %v936 = vpop.f32.mrb[0].mxu0
      %v937 = vadd.f32 %v850, %v936
      %v938 = vpop.f32.mrb[0].mxu0
      %v939 = vadd.f32 %v855, %v938
      %v940 = vpop.f32.mrb[0].mxu0
      %v941 = vadd.f32 %v855, %v940
      %942 = vmatprep.mubr.bf16.mxu0 0
      %943 = vmatmul.mubr.bf16.gmra.mrb[0].mxu0 %v878
      %v944 = vpop.f32.mrb[0].mxu0
      %v945 = vadd.f32 %v860, %v944
      %v946 = vpop.f32.mrb[0].mxu0
      %v947 = vadd.f32 %v860, %v946
      %v948 = vpop.f32.mrb[0].mxu0
      %v949 = vadd.f32 %v865, %v948
      %v950 = vpop.f32.mrb[0].mxu0
      %v951 = vadd.f32 %v865, %v950
      %952 = vdwg.mxu0
      %v953 = vmul.f32 %v915, 0.1
      %v954 = vmul.f32 %v917, 0.1
      %v955 = vmul.f32 %v919, 0.1
      %v956 = vmul.f32 %v921, 0.1
      %v957 = vmul.f32 %v925, 0.1
      %v958 = vmul.f32 %v927, 0.1
      %v959 = vmul.f32 %v929, 0.1
      %v960 = vmul.f32 %v931, 0.1
      %v961 = vmul.f32 %v935, 0.1
      %v962 = vmul.f32 %v937, 0.1
      %v963 = vmul.f32 %v939, 0.1
      %v964 = vmul.f32 %v941, 0.1
      %v965 = vmul.f32 %v945, 0.1
      %v966 = vmul.f32 %v947, 0.1
      %v967 = vmul.f32 %v949, 0.1
      %v968 = vmul.f32 %v951, 0.1
      %v969 = vmax.f32 %v915, %v953
      %v970 = vmax.f32 %v917, %v954
      %v971 = vmax.f32 %v919, %v955
      %v972 = vmax.f32 %v921, %v956
      %v973 = vmax.f32 %v925, %v957
      %v974 = vmax.f32 %v927, %v958
      %v975 = vmax.f32 %v929, %v959
      %v976 = vmax.f32 %v931, %v960
      %v977 = vmax.f32 %v935, %v961
      %v978 = vmax.f32 %v937, %v962
      %v979 = vmax.f32 %v939, %v963
      %v980 = vmax.f32 %v941, %v964
      %v981 = vmax.f32 %v945, %v965
      %v982 = vmax.f32 %v947, %v966
      %v983 = vmax.f32 %v949, %v967
      %v984 = vmax.f32 %v951, %v968
      %s985 = scalar_lea.vmem %s1, 192
      %v986 = vld [vmem:[%s985] sm:$0xff]
      %v987 = vld [vmem:[%s985 + $0x8] sm:$0xff]
      %v988 = vld [vmem:[%s985 + $0x10] sm:$0xff]
      %v989 = vld [vmem:[%s985 + $0x18] sm:$0xff]
      %v990 = vadd.f32 %v279, 1.0
      %v991 = vadd.f32 %v280, 1.0
      %v992 = vadd.f32 %v281, 1.0
      %v993 = vadd.f32 %v282, 1.0
      %995 = vset.pattern.permute.xlu0 0
      %996 = vperm.xlu0 %995, %v990
      %v997 = vpop.permute.xlu0 %996
      %1000 = vset.pattern.permute.xlu0 0
      %1001 = vperm.xlu0 %1000, %v991
      %v1002 = vpop.permute.xlu0 %1001
      %1005 = vset.pattern.permute.xlu0 0
      %1006 = vperm.xlu0 %1005, %v992
      %v1007 = vpop.permute.xlu0 %1006
      %1010 = vset.pattern.permute.xlu0 0
      %1011 = vperm.xlu0 %1010, %v993
      %v1012 = vpop.permute.xlu0 %1011
      %v1014 = vmul.f32 %v986, %v997
      %v1015 = vmul.f32 %v987, %v1002
      %v1016 = vmul.f32 %v988, %v1007
      %v1017 = vmul.f32 %v989, %v1012
      %v1018 = vpack.c.bf16 %v1015, %v1014
      %v1019 = vpack.c.bf16 %v1017, %v1016
      %v1020 = vmul.f32 %v990, %v329
      %v1021 = vmul.f32 %v991, %v330
      %v1022 = vmul.f32 %v992, %v331
      %v1023 = vmul.f32 %v993, %v332
      %v1024 = vadd.f32 %v1020, %v304
      %v1025 = vadd.f32 %v1021, %v305
      %v1026 = vadd.f32 %v1022, %v306
      %v1027 = vadd.f32 %v1023, %v307
      %v1028 = vpack.c.bf16 %v971, %v969
      %v1029 = vpack.c.bf16 %v972, %v970
      %v1030 = vpack.c.bf16 %v975, %v973
      %v1031 = vpack.c.bf16 %v976, %v974
      %v1032 = vpack.c.bf16 %v979, %v977
      %v1033 = vpack.c.bf16 %v980, %v978
      %v1034 = vpack.c.bf16 %v983, %v981
      %v1035 = vpack.c.bf16 %v984, %v982
      %1037 = vset.pattern.permute.xlu0 0
      %1038 = vperm.xlu0 %1037, %v1024
      %v1039 = vpop.permute.xlu0 %1038
      %1042 = vset.pattern.permute.xlu0 0
      %1043 = vperm.xlu0 %1042, %v1025
      %v1044 = vpop.permute.xlu0 %1043
      %1047 = vset.pattern.permute.xlu0 0
      %1048 = vperm.xlu0 %1047, %v1026
      %v1049 = vpop.permute.xlu0 %1048
      %1052 = vset.pattern.permute.xlu0 0
      %1053 = vperm.xlu0 %1052, %v1027
      %v1054 = vpop.permute.xlu0 %1053
      %v1057 = vsel %vm867, %v1018, 0
      %v1060 = vsel %vm867, %v1019, 0
      %1062 = vmatprep.subr.bf16.mxu0 %v1029
      %1063 = vmatpush1.bf16.msra.mxu0 %v1028
      %1064 = vmatprep.subr.bf16.mxu0 %v1031
      %1065 = vmatpush1.bf16.msra.mxu0 %v1030
      %1066 = vmatprep.subr.bf16.mxu0 %v1033
      %1067 = vmatpush1.bf16.msra.mxu0 %v1032
      %1068 = vmatprep.subr.bf16.mxu0 %v1035
      %1069 = vmatpush1.bf16.msra.mxu0 %v1034
      %1070 = vmatprep.subr.bf16.mxu0 0
      %1071 = vmatpush1.bf16.msra.mxu0 0
      %1072 = vmatprep.subr.bf16.mxu0 0
      %1073 = vmatpush1.bf16.msra.mxu0 0
      %1074 = vmatprep.subr.bf16.mxu0 0
      %1075 = vmatpush1.bf16.msra.mxu0 0
      %1076 = vmatprep.subr.bf16.mxu0 0
      %1077 = vmatpush1.bf16.msra.mxu0 0
      %1078 = vmatprep.subr.bf16.mxu0 0
      %1079 = vmatpush1.bf16.msra.mxu0 0
      %1080 = vmatprep.subr.bf16.mxu0 0
      %1081 = vmatpush1.bf16.msra.mxu0 0
      %1082 = vmatprep.subr.bf16.mxu0 0
      %1083 = vmatpush1.bf16.msra.mxu0 0
      %1084 = vmatprep.subr.bf16.mxu0 0
      %1085 = vmatpush1.bf16.msra.mxu0 0
      %1086 = vmatprep.subr.bf16.mxu0 0
      %1087 = vmatpush1.bf16.msra.mxu0 0
      %1088 = vmatprep.subr.bf16.mxu0 0
      %1089 = vmatpush1.bf16.msra.mxu0 0
      %1090 = vmatprep.subr.bf16.mxu0 0
      %1091 = vmatpush1.bf16.msra.mxu0 0
      %1092 = vmatprep.subr.bf16.mxu0 0
      %1093 = vmatpush1.bf16.msra.mxu0 0
      %1094 = vmatprep.mubr.bf16.mxu0 0
      %1095 = vmatmul.mubr.bf16.gmra.mrb[0].mxu0 %v1057
      %v1096 = vpop.f32.mrb[0].mxu0
      %v1097 = vadd.f32 %v1039, %v1096
      %v1098 = vpop.f32.mrb[0].mxu0
      %v1099 = vadd.f32 %v1039, %v1098
      %v1100 = vpop.f32.mrb[0].mxu0
      %v1101 = vadd.f32 %v1044, %v1100
      %v1102 = vpop.f32.mrb[0].mxu0
      %v1103 = vadd.f32 %v1044, %v1102
      %1104 = vmatprep.mubr.bf16.mxu0 0
      %1105 = vmatmul.mubr.bf16.gmra.mrb[0].mxu0 %v1060
      %v1106 = vpop.f32.mrb[0].mxu0
      %v1107 = vadd.f32 %v1049, %v1106
      %v1108 = vpop.f32.mrb[0].mxu0
      %v1109 = vadd.f32 %v1049, %v1108
      %v1110 = vpop.f32.mrb[0].mxu0
      %v1111 = vadd.f32 %v1054, %v1110
      %v1112 = vpop.f32.mrb[0].mxu0
      %v1113 = vadd.f32 %v1054, %v1112
      %1114 = vdwg.mxu0
      %v1115 = vmul.f32 %v1097, 0.1
      %v1116 = vmul.f32 %v1099, 0.1
      %v1117 = vmul.f32 %v1101, 0.1
      %v1118 = vmul.f32 %v1103, 0.1
      %v1119 = vmul.f32 %v1107, 0.1
      %v1120 = vmul.f32 %v1109, 0.1
      %v1121 = vmul.f32 %v1111, 0.1
      %v1122 = vmul.f32 %v1113, 0.1
      %v1123 = vmax.f32 %v1097, %v1115
      %v1124 = vmax.f32 %v1099, %v1116
      %v1125 = vmax.f32 %v1101, %v1117
      %v1126 = vmax.f32 %v1103, %v1118
      %v1127 = vmax.f32 %v1107, %v1119
      %v1128 = vmax.f32 %v1109, %v1120
      %v1129 = vmax.f32 %v1111, %v1121
      %v1130 = vmax.f32 %v1113, %v1122
      %s1131 = scalar_lea.vmem %s1, 256
      %v1132 = vld [vmem:[%s1131] sm:$0xff]
      %v1133 = vadd.f32 %v283, 1.0
      %1135 = vset.pattern.permute.xlu0 0
      %1136 = vperm.xlu0 %1135, %v1133
      %v1137 = vpop.permute.xlu0 %1136
      %v1139 = vmul.f32 %v1132, %v1137
      %v1140 = vpack.c.bf16 %v1139, %v1139
      %v1141 = vmul.f32 %v1133, %v333
      %v1142 = vadd.f32 %v1141, %v308
      %v1143 = vpack.c.bf16 %v1125, %v1123
      %v1144 = vpack.c.bf16 %v1126, %v1124
      %v1145 = vpack.c.bf16 %v1129, %v1127
      %v1146 = vpack.c.bf16 %v1130, %v1128
      %1148 = vset.pattern.permute.xlu0 0
      %1149 = vperm.xlu0 %1148, %v1142
      %v1150 = vpop.permute.xlu0 %1149
      %v1153 = vsel %vm616, %v1140, 0
      %1155 = vmatprep.subr.bf16.mxu0 %v1144
      %1156 = vmatpush1.bf16.msra.mxu0 %v1143
      %1157 = vmatprep.subr.bf16.mxu0 %v1146
      %1158 = vmatpush1.bf16.msra.mxu0 %v1145
      %1159 = vmatprep.subr.bf16.mxu0 0
      %1160 = vmatpush1.bf16.msra.mxu0 0
      %1161 = vmatprep.subr.bf16.mxu0 0
      %1162 = vmatpush1.bf16.msra.mxu0 0
      %1163 = vmatprep.subr.bf16.mxu0 0
      %1164 = vmatpush1.bf16.msra.mxu0 0
      %1165 = vmatprep.subr.bf16.mxu0 0
      %1166 = vmatpush1.bf16.msra.mxu0 0
      %1167 = vmatprep.subr.bf16.mxu0 0
      %1168 = vmatpush1.bf16.msra.mxu0 0
      %1169 = vmatprep.subr.bf16.mxu0 0
      %1170 = vmatpush1.bf16.msra.mxu0 0
      %1171 = vmatprep.subr.bf16.mxu0 0
      %1172 = vmatpush1.bf16.msra.mxu0 0
      %1173 = vmatprep.subr.bf16.mxu0 0
      %1174 = vmatpush1.bf16.msra.mxu0 0
      %1175 = vmatprep.subr.bf16.mxu0 0
      %1176 = vmatpush1.bf16.msra.mxu0 0
      %1177 = vmatprep.subr.bf16.mxu0 0
      %1178 = vmatpush1.bf16.msra.mxu0 0
      %1179 = vmatprep.subr.bf16.mxu0 0
      %1180 = vmatpush1.bf16.msra.mxu0 0
      %1181 = vmatprep.subr.bf16.mxu0 0
      %1182 = vmatpush1.bf16.msra.mxu0 0
      %1183 = vmatprep.subr.bf16.mxu0 0
      %1184 = vmatpush1.bf16.msra.mxu0 0
      %1185 = vmatprep.subr.bf16.mxu0 0
      %1186 = vmatpush1.bf16.msra.mxu0 0
      %1187 = vmatprep.mubr.bf16.mxu0 0
      %1188 = vmatmul.mubr.bf16.gmra.mrb[0].mxu0 %v1153
      %v1189 = vpop.f32.mrb[0].mxu0
      %v1190 = vadd.f32 %v1150, %v1189
      %v1191 = vpop.f32.mrb[0].mxu0
      %v1192 = vadd.f32 %v1150, %v1191
      %v1193 = vpop.f32.mrb[0].mxu0
      %v1194 = vpop.f32.mrb[0].mxu0
      %1195 = vdwg.mxu0
      %v1196 = vmul.f32 %v1190, 0.1
      %v1197 = vmul.f32 %v1192, 0.1
      %v1198 = vmax.f32 %v1190, %v1196
      %v1199 = vmax.f32 %v1192, %v1197
      %v1202 = vcombine.low %v1198, %v1199
      %1204 = vst [vmem:[%s255] sm:$0x77] %v1202
      %s1205 = smul.u32 2, %s20
      %p1206 = scmp.lt.s32.totalorder %s19, 1
      %s1207 = scalar_select %p1206, %s19, 1
      %p1208 = scmp.lt.s32.totalorder %s1205, 1
      %s1209 = scalar_select %p1208, %s1205, 1
      %s1210 = smul.addr %s1207, 2
      %s1211 = sadd.s32 %s1209, %s1210
      %s1212 = smul.addr %s1211, 4
      %s1213 = scalar_lea.vmem %s4, %s1212
      // Predicated region
      $region37: #{pwconv_cond_forward.7} parent=35 // pred_check
        %p1214 = pneg %p143
      $region38: #{pwconv_cond_forward.7} parent=35 // pred_check_branch
        %1216 = sbr.rel (%p1214) target = $region40
      $region39: #{pwconv_cond_forward.7} parent=35 // pred_region
        %s1217 = smul.u32 2, %s20
      $region40: #{pwconv_cond_forward.7} parent=35 // pred_fallthru
        _
    $region36: #{pwconv_cond_forward.7} parent=5 // pred_fallthru
      _
    %p1218 = scmp.le.s32.totalorder 2, %s10
    // Predicated region
    $region41: #{pwconv_cond_forward.7} parent=5 // pred_check
      %p1219 = pneg %p1218
    $region42: #{pwconv_cond_forward.7} parent=5 // pred_check_branch
      %1221 = sbr.rel (%p1219) target = $region44
    $region43: #{pwconv_cond_forward.7} parent=5 // pred_region
      %s1222 = ssub.s32 %s10, 2
      // Predicated region
      $region45: #{pwconv_cond_forward.7} parent=43 // pred_check
        %p1223 = pneg %p149
      $region46: #{pwconv_cond_forward.7} parent=43 // pred_check_branch
        %1225 = sbr.rel (%p1223) target = $region48
      $region47: #{pwconv_cond_forward.7} parent=43 // pred_region
        %s1226 = smul.u32 2, %s22
        %p1227 = scmp.lt.s32.totalorder %s21, 1
        %s1228 = scalar_select %p1227, %s21, 1
        %p1229 = scmp.lt.s32.totalorder %s1226, 1
        %s1230 = scalar_select %p1229, %s1226, 1
        %s1231 = smul.addr %s1228, 2
        %s1232 = sadd.s32 %s1230, %s1231
        %s1233 = smul.addr %s1232, 4
        %s1234 = scalar_lea.vmem %s4, %s1233
      $region48: #{pwconv_cond_forward.7} parent=43 // pred_fallthru
        _
    $region44: #{pwconv_cond_forward.7} parent=5 // pred_fallthru
      _
  $region6: #{pwconv_cond_forward.7} parent=0 // loop_footer
    %s14 = sadd.s32 1, %s10
  $region7: #{pwconv_cond_forward.7} parent=0 // loop_footer_branch
    %9 = sbr.rel target = $region3
  $region8: #{pwconv_cond_forward.7} parent=0 // loop_exit
    _

</llo_original>
